<compile_context>
chip_gen: v7x
topology: tpu7x:2x2x1
jax: 0.10.0
libtpu: 0.0.40
codegen_flags: <defaults>
</compile_context>

<pallas_src>
import functools

import jax
import jax.numpy as jnp
from jax.experimental import pallas as pl
from jax.experimental.pallas import tpu as pltpu

NEG_SLOPE = 0.01        # torch.nn.LeakyReLU default negative_slope (module default)
BN_EPS = 1e-5           # torch.nn.BatchNorm2d default eps


def _tpu_config():
    """Generation-aware knobs (VMEM request, OC tile, MXU M target, #TCs)."""
    kind = ""
    try:
        kind = jax.devices()[0].device_kind.lower()
    except Exception:
        pass
    is_v7 = ("v7" in kind) or ("tpu7" in kind) or ("7x" in kind)
    is_v5e = ("v5e" in kind) or ("v5 lite" in kind) or ("v5lite" in kind)
    vmem_limit = (48 if is_v7 else 64) * 1024 * 1024   # v7x TC has only 64 MiB physical
    pref_tile = 128 if is_v5e else 256                 # MXU N width: 4x128^2 vs 2x256^2
    m_target = 128 if is_v5e else 256                  # MXU M fill target
    two_cores = is_v7                                  # v7x: 2 TCs / chip
    return vmem_limit, pref_tile, m_target, two_cores


_VMEM_LIMIT, _PREF_TILE, _M_TARGET, _TWO_CORES = _tpu_config()


def _oc_tile(oc):
    # Channels sit on the 128-lane axis.
    if oc % _PREF_TILE == 0:
        tn = _PREF_TILE
    elif oc % 128 == 0:
        tn = 128
    else:
        return oc                       # toy sizes: keep whole
    if _TWO_CORES and (oc // tn) < 2 and tn > 128:
        tn = 128                        # keep >=2 'parallel' OC tiles for both TCs
    return tn


# ----------------------------- Pallas kernels ------------------------------

def _conv_taps(x_ref, w_ref, bt, oh, ow):
    """Sum of 4 unit-shift matmuls == exact 4x4/stride-2/pad-1 conv output.

    x_ref: (bt, OH+1, OW+1, 4C) bf16 parity-s2d input block.
    w_ref: (2, 2, 4C, tn)       bf16 repacked weights.
    Returns f32 (bt*OH*OW, tn).
    """
    k4 = w_ref.shape[2]
    acc = None
    for di in range(2):
        for dj in range(2):
            win = x_ref[:, di:di + oh, dj:dj + ow, :]        # (bt, oh, ow, 4C)
            # TODO(synk): this window reshape is a per-tap VMEM relayout copy;
            # removing it needs either a >2D dot_general (not Mosaic-lowerable)
            # or fusing the s2d repack into the previous layer's epilogue.
            a2d = win.reshape(bt * oh * ow, k4)
            contrib = jnp.dot(a2d, w_ref[di, dj, :, :],
                              preferred_element_type=jnp.float32)
            acc = contrib if acc is None else acc + contrib
    return acc


def _conv_bias_leaky_kernel(x_ref, w_ref, b_ref, o_ref, *, bt, oh, ow, tn):
    # First block: conv + bias + LeakyReLU, lane-dense flat bf16 store.
    acc = _conv_taps(x_ref, w_ref, bt, oh, ow) + b_ref[...]   # (bt*oh*ow, tn) f32
    out = jnp.where(acc >= 0, acc, NEG_SLOPE * acc)
    o_ref[...] = out.reshape(bt, oh * ow, tn).astype(o_ref.dtype)


def _conv_bn_stats_kernel(x_ref, w_ref, o_ref, sum_ref, ssq_ref, *, bt, oh, ow, tn):
    # Mid block pass 1: conv (no bias); per-channel f32 sum / sum-of-squares
    # accumulated across the image-tile axis (grid axis 1, "arbitrary") so the
    # BatchNorm statistics cover the full batch regardless of tiling.
    img = pl.program_id(1)

    @pl.when(img == 0)
    def _():
        sum_ref[...] = jnp.zeros_like(sum_ref)
        ssq_ref[...] = jnp.zeros_like(ssq_ref)

    acc = _conv_taps(x_ref, w_ref, bt, oh, ow)                # (bt*oh*ow, tn) f32
    sum_ref[...] += jnp.sum(acc, axis=0, keepdims=True)
    ssq_ref[...] += jnp.sum(acc * acc, axis=0, keepdims=True)
    o_ref[...] = acc.reshape(bt, oh * ow, tn).astype(o_ref.dtype)


def _bn_leaky_kernel(x_ref, sum_ref, ssq_ref, g_ref, b_ref, o_ref, *, inv_count):
    # Mid block pass 2: BatchNorm (training statistics, biased var) + LeakyReLU.
    mean = sum_ref[...] * inv_count                           # (1, tn) f32
    var = jnp.maximum(ssq_ref[...] * inv_count - mean * mean, 0.0)
    scale = g_ref[...] * jax.lax.rsqrt(var + BN_EPS)
    shift = b_ref[...] - mean * scale
    tn = mean.shape[-1]
    y = (x_ref[...].astype(jnp.float32) * scale.reshape(1, 1, tn)
         + shift.reshape(1, 1, tn))
    o_ref[...] = jnp.where(y >= 0, y, NEG_SLOPE * y).astype(o_ref.dtype)


def _head_kernel(x_ref, w_ref, b_ref, o_ref, *, oc):
    # Last block: 4x4 valid conv on a 4x4 map == flatten + matmul, + bias +
    # sigmoid.  For OC == 1 use the VPU (mul + lane reduce), not a 1-wide MXU.
    x = x_ref[...].astype(jnp.float32)                        # (N, K)
    if oc == 1:
        out = jnp.sum(x * w_ref[...], axis=-1, keepdims=True) + b_ref[...]
    else:
        out = jnp.dot(x, w_ref[...],
                      preferred_element_type=jnp.float32) + b_ref[...]
    o_ref[...] = jax.nn.sigmoid(out)


# ------------------------------- JAX glue ----------------------------------

def _space_to_depth_2x2_pad1(x):
    """NHWC x -> parity-split tensor for a 4x4 / stride-2 / pad-1 conv.

    Returns xs2d of shape (N, OH+1, OW+1, 4*C), channel order (p, q, c) where
    (p, q) are row/col parities of the padded input.  The original conv is an
    exact 2x2 / stride-1 / valid conv on xs2d (1x data repack, done in bf16).
    """
    n, h, w, c = x.shape
    oh, ow = h // 2, w // 2
    xp = jnp.pad(x, ((0, 0), (1, 1), (1, 1), (0, 0)))
    xs = xp.reshape(n, oh + 1, 2, ow + 1, 2, c)               # (n, u, p, v, q, c)
    xs = xs.transpose(0, 1, 3, 2, 4, 5).reshape(n, oh + 1, ow + 1, 4 * c)
    return xs, oh, ow


def _repack_weight_s2d(w):
    """torch (OC, C, 4, 4) -> (2, 2, 4*C, OC) matching the (p, q, c) order."""
    oc, c = w.shape[0], w.shape[1]
    w = w.reshape(oc, c, 2, 2, 2, 2)                          # (oc, c, di, p, dj, q)
    w = w.transpose(2, 4, 3, 5, 1, 0)                         # (di, dj, p, q, c, oc)
    return w.reshape(2, 2, 4 * c, oc)


def _pick_batch_tile(n, ph, pw, oh, ow, k4, tn):
    """Images per block: reach the MXU M target, stay inside the VMEM budget,
    and divide N exactly (so batch statistics are exact)."""
    bt = min(n, max(1, _M_TARGET // (oh * ow)))
    budget = int(_VMEM_LIMIT * 0.6)

    def est(b):
        x = b * ph * pw * k4 * 2                  # bf16 input block
        o = b * oh * ow * tn * 2                  # bf16 output block
        w = 4 * k4 * tn * 2                       # bf16 weight block
        live = b * oh * ow * (tn * 4 + k4 * 2)    # f32 acc + one tap window copy
        return 2 * (x + o + w) + live             # double-buffered pipeline

    while bt > 1 and est(bt) > budget:
        bt -= 1
    while n % bt:
        bt -= 1
    return bt


def _conv4s2_block(x_nhwc, weight, *, bias=None, compute_stats=False):
    """One 4x4 / stride-2 / pad-1 conv layer with fused epilogue, gridded.

    Returns a flat (N, OH*OW, OC) bf16 activation (plus f32 stats for BN)."""
    n = x_nhwc.shape[0]
    oc = weight.shape[0]
    # Cast BEFORE the s2d pad/transpose so the XLA repack moves bf16 bytes.
    xs2d, oh, ow = _space_to_depth_2x2_pad1(x_nhwc.astype(jnp.bfloat16))
    w2 = _repack_weight_s2d(weight).astype(jnp.bfloat16)
    k4 = w2.shape[2]
    ph, pw = oh + 1, ow + 1
    tn = _oc_tile(oc)
    bt = _pick_batch_tile(n, ph, pw, oh, ow, k4, tn)
    grid = (oc // tn, n // bt)                    # (OC tiles, image tiles)

    x_spec = pl.BlockSpec((bt, ph, pw, k4), lambda j, i: (i, 0, 0, 0))
    w_spec = pl.BlockSpec((2, 2, k4, tn), lambda j, i: (0, 0, 0, j))
    o_spec = pl.BlockSpec((bt, oh * ow, tn), lambda j, i: (i, 0, j))
    vec_spec = pl.BlockSpec((1, tn), lambda j, i: (0, j))

    if compute_stats:
        kernel = functools.partial(_conv_bn_stats_kernel, bt=bt, oh=oh, ow=ow, tn=tn)
        out, csum, cssq = pl.pallas_call(
            kernel,
            grid=grid,
            in_specs=[x_spec, w_spec],
            out_specs=(o_spec, vec_spec, vec_spec),
            out_shape=(
                jax.ShapeDtypeStruct((n, oh * ow, oc), jnp.bfloat16),
                jax.ShapeDtypeStruct((1, oc), jnp.float32),
                jax.ShapeDtypeStruct((1, oc), jnp.float32),
            ),
            compiler_params=pltpu.CompilerParams(
                # image axis is the stats-accumulation axis -> "arbitrary";
                # OC tiles shard across TensorCores on v7x.
                dimension_semantics=("parallel", "arbitrary"),
                vmem_limit_bytes=_VMEM_LIMIT),
        )(xs2d, w2)
        return out, csum, cssq, oh, ow

    kernel = functools.partial(_conv_bias_leaky_kernel, bt=bt, oh=oh, ow=ow, tn=tn)
    b2 = bias.reshape(1, oc).astype(jnp.float32)
    out = pl.pallas_call(
        kernel,
        grid=grid,
        in_specs=[x_spec, w_spec, vec_spec],
        out_specs=o_spec,
        out_shape=jax.ShapeDtypeStruct((n, oh * ow, oc), jnp.bfloat16),
        compiler_params=pltpu.CompilerParams(
            dimension_semantics=("parallel", "parallel"),
            vmem_limit_bytes=_VMEM_LIMIT),
    )(xs2d, w2, b2)
    return out, oh, ow


def _bn_leaky(x_flat, csum, cssq, gamma, beta):
    """Gridded BatchNorm(training stats) + LeakyReLU apply pass (flat layout)."""
    n, s, oc = x_flat.shape
    tn = _oc_tile(oc)
    # HBM-bound elementwise pass: target ~512 KiB blocks to amortize the
    # per-grid-step overhead; keep bt | n.
    bt = min(n, max(1, (512 * 1024) // (s * tn * 2)))
    while n % bt:
        bt -= 1
    inv_count = 1.0 / float(n * s)
    kernel = functools.partial(_bn_leaky_kernel, inv_count=inv_count)
    x_spec = pl.BlockSpec((bt, s, tn), lambda i, j: (i, 0, j))
    vec_spec = pl.BlockSpec((1, tn), lambda i, j: (0, j))
    return pl.pallas_call(
        kernel,
        grid=(n // bt, oc // tn),
        in_specs=[x_spec, vec_spec, vec_spec, vec_spec, vec_spec],
        out_specs=x_spec,
        out_shape=jax.ShapeDtypeStruct((n, s, oc), jnp.bfloat16),
        compiler_params=pltpu.CompilerParams(
            dimension_semantics=("parallel", "parallel"),
            vmem_limit_bytes=_VMEM_LIMIT),
    )(x_flat, csum, cssq, gamma.reshape(1, oc).astype(jnp.float32),
      beta.reshape(1, oc).astype(jnp.float32))


def _head(h_flat, weight, bias):
    """Last block: 4x4 / stride-1 / valid conv on a 4x4 map + bias + sigmoid."""
    n, s, c = h_flat.shape
    oc, wc, kh, kw = weight.shape
    assert s == kh * kw and wc == c
    k = s * c
    x_flat = h_flat.reshape(n, k).astype(jnp.bfloat16)        # (kh, kw, c) order
    wf = weight.transpose(2, 3, 1, 0).reshape(k, oc).astype(jnp.float32)
    if oc == 1:
        wf = wf.reshape(1, k)                                 # row vector for VPU path
    b2 = bias.reshape(1, oc).astype(jnp.float32)
    kernel = functools.partial(_head_kernel, oc=oc)
    vmem = pl.BlockSpec(memory_space=pltpu.MemorySpace.VMEM)
    return pl.pallas_call(
        kernel,
        in_specs=[vmem, vmem, vmem],
        out_specs=vmem,
        out_shape=jax.ShapeDtypeStruct((n, oc), jnp.float32),
        compiler_params=pltpu.CompilerParams(vmem_limit_bytes=_VMEM_LIMIT),
    )(x_flat, wf, b2)


# ----------------------- Parameter init & forward ---------------------------

def init_dcgan_discriminator_params(key, in_channels, out_channels=1,
                                    image_size=64, min_hidden_channels=128):
    if not isinstance(image_size, int):
        raise TypeError('image_size must be an int.')
    if image_size <= 4 or image_size & (image_size - 1) != 0:
        raise ValueError('image_size must be a power of 2 greater than 4')
    nblocks = 1
    sz = image_size
    while sz > 4:
        nblocks += 1
        sz //= 2
    assert sz == 4 and nblocks >= 2

    k = key

    def nk():
        nonlocal k
        k, sub = jax.random.split(k)
        return sub

    ic, oc, c = in_channels, out_channels, min_hidden_channels
    blocks = []
    # first: Conv(IC->C, 4, 2, 1, bias=True) + LeakyReLU
    blocks.append(dict(
        type='first',
        w=0.05 * jax.random.normal(nk(), (c, ic, 4, 4), jnp.float32),
        b=0.05 * jax.random.normal(nk(), (c,), jnp.float32)))
    # mid: Conv(C->2C, 4, 2, 1, bias=False) + BatchNorm2d + LeakyReLU
    for _ in range(nblocks - 2):
        blocks.append(dict(
            type='mid',
            w=0.05 * jax.random.normal(nk(), (2 * c, c, 4, 4), jnp.float32),
            gamma=jnp.ones((2 * c,), jnp.float32),
            beta=jnp.zeros((2 * c,), jnp.float32)))
        c *= 2
    # last: Conv(C->OC, 4, 1, 0, bias=True) + Sigmoid
    blocks.append(dict(
        type='last',
        w=0.05 * jax.random.normal(nk(), (oc, c, 4, 4), jnp.float32),
        b=0.05 * jax.random.normal(nk(), (oc,), jnp.float32)))
    return blocks


def dcgan_discriminator_forward(params, x_nchw):
    # Single NCHW -> NHWC conversion; NHWC (bf16) is kept end-to-end.
    h = jnp.transpose(x_nchw, (0, 2, 3, 1))
    for blk in params:
        if blk['type'] == 'first':
            h, oh, ow = _conv4s2_block(h, blk['w'], bias=blk['b'])
            h = h.reshape(h.shape[0], oh, ow, h.shape[-1])
        elif blk['type'] == 'mid':
            # TODO(synk): BatchNorm running_mean/running_var side effects of a
            # training-mode torch module are not tracked (pure forward only).
            conv, csum, cssq, oh, ow = _conv4s2_block(h, blk['w'],
                                                      compute_stats=True)
            h = _bn_leaky(conv, csum, cssq, blk['gamma'], blk['beta'])
            h = h.reshape(h.shape[0], oh, ow, h.shape[-1])
        else:
            n_, hh, ww, cc = h.shape
            h = _head(h.reshape(n_, hh * ww, cc), blk['w'], blk['b'])
    # torch squeezes dims 3 and 2 (always size 1 here) and dim 1 iff OC == 1.
    if h.shape[1] == 1:
        h = jnp.squeeze(h, axis=1)
    return h


# --------------------------------- main -------------------------------------

if __name__ == "__main__":
    # Small shapes consistent with the module: image_size=16 -> 3 blocks;
    # batch=2, in_channels=4, out_channels=1, min_hidden_channels=32.
    key = jax.random.PRNGKey(0)
    x = jax.random.normal(key, (2, 4, 16, 16), dtype=jnp.float32)

    params = init_dcgan_discriminator_params(
        jax.random.PRNGKey(42), in_channels=4, out_channels=1,
        image_size=16, min_hidden_channels=32)

    fwd = jax.jit(functools.partial(dcgan_discriminator_forward, params))
    y = fwd(x)
    jax.block_until_ready(y)

    assert y.shape == (2,), y.shape
    assert bool(jnp.all((y >= 0.0) & (y <= 1.0)))  # sigmoid output
    print("KERNEL_OK")
</pallas_src>

<mosaic_0001>
module attributes {stable_mosaic.version = 11 : i64} {
  func.func @_conv_bias_leaky_kernel(%arg0: i32, %arg1: i32, %arg2: memref<2x9x9x16xbf16, #tpu.memory_space<vmem>>, %arg3: memref<2x2x16x32xbf16, #tpu.memory_space<vmem>>, %arg4: memref<1x32xf32, #tpu.memory_space<vmem>>, %arg5: memref<2x64x32xbf16, #tpu.memory_space<vmem>>) attributes {dimension_semantics = [#tpu.dimension_semantics<parallel>, #tpu.dimension_semantics<parallel>], iteration_bounds = array<i64: 1, 1>, scalar_prefetch = 0 : i64, scratch_operands = 0 : i64, tpu.core_type = #tpu.core_type<tc>, window_params = [{transform_indices = @transform_0, window_bounds = array<i64: 2, 9, 9, 16>}, {transform_indices = @transform_1, window_bounds = array<i64: 2, 2, 16, 32>}, {transform_indices = @transform_2, window_bounds = array<i64: 1, 32>}, {transform_indices = @transform_3, window_bounds = array<i64: 2, 64, 32>}]} {
    %c0 = arith.constant 0 : index
    %c0_0 = arith.constant 0 : index
    %c0_1 = arith.constant 0 : index
    %c0_2 = arith.constant 0 : index
    %0 = vector.load %arg2[%c0, %c0_0, %c0_1, %c0_2] : memref<2x9x9x16xbf16, #tpu.memory_space<vmem>>, vector<2x8x8x16xbf16>
    %1 = vector.shape_cast %0 : vector<2x8x8x16xbf16> to vector<128x16xbf16>
    %c0_3 = arith.constant 0 : index
    %c0_4 = arith.constant 0 : index
    %c0_5 = arith.constant 0 : index
    %c0_6 = arith.constant 0 : index
    %2 = vector.load %arg3[%c0_3, %c0_4, %c0_5, %c0_6] : memref<2x2x16x32xbf16, #tpu.memory_space<vmem>>, vector<1x1x16x32xbf16>
    %3 = vector.shape_cast %2 : vector<1x1x16x32xbf16> to vector<16x32xbf16>
    %cst = arith.constant dense<0.000000e+00> : vector<128x32xf32>
    %4 = tpu.matmul %1, %3, %cst {dimension_numbers = #tpu.dot_dimension_numbers<[1], [0], [0], [1], [0, 0, 1, 1], [], []>} : vector<128x16xbf16>, vector<16x32xbf16>, vector<128x32xf32> -> vector<128x32xf32>
    %c0_7 = arith.constant 0 : index
    %c0_8 = arith.constant 0 : index
    %c1 = arith.constant 1 : index
    %c0_9 = arith.constant 0 : index
    %5 = vector.load %arg2[%c0_7, %c0_8, %c1, %c0_9] : memref<2x9x9x16xbf16, #tpu.memory_space<vmem>>, vector<2x8x8x16xbf16>
    %6 = vector.shape_cast %5 : vector<2x8x8x16xbf16> to vector<128x16xbf16>
    %c0_10 = arith.constant 0 : index
    %c1_11 = arith.constant 1 : index
    %c0_12 = arith.constant 0 : index
    %c0_13 = arith.constant 0 : index
    %7 = vector.load %arg3[%c0_10, %c1_11, %c0_12, %c0_13] : memref<2x2x16x32xbf16, #tpu.memory_space<vmem>>, vector<1x1x16x32xbf16>
    %8 = vector.shape_cast %7 : vector<1x1x16x32xbf16> to vector<16x32xbf16>
    %cst_14 = arith.constant dense<0.000000e+00> : vector<128x32xf32>
    %9 = tpu.matmul %6, %8, %cst_14 {dimension_numbers = #tpu.dot_dimension_numbers<[1], [0], [0], [1], [0, 0, 1, 1], [], []>} : vector<128x16xbf16>, vector<16x32xbf16>, vector<128x32xf32> -> vector<128x32xf32>
    %10 = arith.addf %4, %9 : vector<128x32xf32>
    %c0_15 = arith.constant 0 : index
    %c1_16 = arith.constant 1 : index
    %c0_17 = arith.constant 0 : index
    %c0_18 = arith.constant 0 : index
    %11 = vector.load %arg2[%c0_15, %c1_16, %c0_17, %c0_18] : memref<2x9x9x16xbf16, #tpu.memory_space<vmem>>, vector<2x8x8x16xbf16>
    %12 = vector.shape_cast %11 : vector<2x8x8x16xbf16> to vector<128x16xbf16>
    %c1_19 = arith.constant 1 : index
    %c0_20 = arith.constant 0 : index
    %c0_21 = arith.constant 0 : index
    %c0_22 = arith.constant 0 : index
    %13 = vector.load %arg3[%c1_19, %c0_20, %c0_21, %c0_22] : memref<2x2x16x32xbf16, #tpu.memory_space<vmem>>, vector<1x1x16x32xbf16>
    %14 = vector.shape_cast %13 : vector<1x1x16x32xbf16> to vector<16x32xbf16>
    %cst_23 = arith.constant dense<0.000000e+00> : vector<128x32xf32>
    %15 = tpu.matmul %12, %14, %cst_23 {dimension_numbers = #tpu.dot_dimension_numbers<[1], [0], [0], [1], [0, 0, 1, 1], [], []>} : vector<128x16xbf16>, vector<16x32xbf16>, vector<128x32xf32> -> vector<128x32xf32>
    %16 = arith.addf %10, %15 : vector<128x32xf32>
    %c0_24 = arith.constant 0 : index
    %c1_25 = arith.constant 1 : index
    %c1_26 = arith.constant 1 : index
    %c0_27 = arith.constant 0 : index
    %17 = vector.load %arg2[%c0_24, %c1_25, %c1_26, %c0_27] : memref<2x9x9x16xbf16, #tpu.memory_space<vmem>>, vector<2x8x8x16xbf16>
    %18 = vector.shape_cast %17 : vector<2x8x8x16xbf16> to vector<128x16xbf16>
    %c1_28 = arith.constant 1 : index
    %c1_29 = arith.constant 1 : index
    %c0_30 = arith.constant 0 : index
    %c0_31 = arith.constant 0 : index
    %19 = vector.load %arg3[%c1_28, %c1_29, %c0_30, %c0_31] : memref<2x2x16x32xbf16, #tpu.memory_space<vmem>>, vector<1x1x16x32xbf16>
    %20 = vector.shape_cast %19 : vector<1x1x16x32xbf16> to vector<16x32xbf16>
    %cst_32 = arith.constant dense<0.000000e+00> : vector<128x32xf32>
    %21 = tpu.matmul %18, %20, %cst_32 {dimension_numbers = #tpu.dot_dimension_numbers<[1], [0], [0], [1], [0, 0, 1, 1], [], []>} : vector<128x16xbf16>, vector<16x32xbf16>, vector<128x32xf32> -> vector<128x32xf32>
    %22 = arith.addf %16, %21 : vector<128x32xf32>
    %c0_33 = arith.constant 0 : index
    %c0_34 = arith.constant 0 : index
    %23 = vector.load %arg4[%c0_33, %c0_34] : memref<1x32xf32, #tpu.memory_space<vmem>>, vector<1x32xf32>
    %24 = vector.broadcast %23 : vector<1x32xf32> to vector<128x32xf32>
    %25 = arith.addf %22, %24 : vector<128x32xf32>
    %cst_35 = arith.constant 0.000000e+00 : f32
    %26 = vector.broadcast %cst_35 : f32 to vector<128x32xf32>
    %27 = arith.cmpf oge, %25, %26 : vector<128x32xf32>
    %cst_36 = arith.constant 0.00999999977 : f32
    %28 = vector.broadcast %cst_36 : f32 to vector<128x32xf32>
    %29 = arith.mulf %28, %25 : vector<128x32xf32>
    %30 = arith.select %27, %25, %29 : vector<128x32xi1>, vector<128x32xf32>
    %31 = vector.shape_cast %30 : vector<128x32xf32> to vector<2x64x32xf32>
    %32 = arith.truncf %31 : vector<2x64x32xf32> to vector<2x64x32xbf16>
    %c0_37 = arith.constant 0 : index
    %c0_38 = arith.constant 0 : index
    %c0_39 = arith.constant 0 : index
    %33 = vector.load %arg5[%c0_37, %c0_38, %c0_39] : memref<2x64x32xbf16, #tpu.memory_space<vmem>>, vector<2x64x32xbf16>
    tpu.vector_store %arg5[%c0_37, %c0_38, %c0_39], %32 {strides = array<i32>} : memref<2x64x32xbf16, #tpu.memory_space<vmem>>, vector<2x64x32xbf16>,
    return
  }
  func.func @transform_0(%arg0: i32, %arg1: i32) -> (i32, i32, i32, i32) {
    %c0_i32 = arith.constant 0 : i32
    %c0_i32_0 = arith.constant 0 : i32
    %c0_i32_1 = arith.constant 0 : i32
    %c0_i32_2 = arith.constant 0 : i32
    return %arg1, %c0_i32, %c0_i32_0, %c0_i32_1 : i32, i32, i32, i32
  }
  func.func @transform_1(%arg0: i32, %arg1: i32) -> (i32, i32, i32, i32) {
    %c0_i32 = arith.constant 0 : i32
    %c0_i32_0 = arith.constant 0 : i32
    %c0_i32_1 = arith.constant 0 : i32
    %c0_i32_2 = arith.constant 0 : i32
    return %c0_i32, %c0_i32_0, %c0_i32_1, %arg0 : i32, i32, i32, i32
  }
  func.func @transform_2(%arg0: i32, %arg1: i32) -> (i32, i32) {
    %c0_i32 = arith.constant 0 : i32
    %c0_i32_0 = arith.constant 0 : i32
    return %c0_i32, %arg0 : i32, i32
  }
  func.func @transform_3(%arg0: i32, %arg1: i32) -> (i32, i32, i32) {
    %c0_i32 = arith.constant 0 : i32
    %c0_i32_0 = arith.constant 0 : i32
    return %arg1, %c0_i32, %arg0 : i32, i32, i32
  }
}

module attributes {stable_mosaic.version = 11 : i64} {
  func.func @_bn_leaky_kernel(%arg0: i32, %arg1: i32, %arg2: memref<2x16x64xbf16, #tpu.memory_space<vmem>>, %arg3: memref<1x64xf32, #tpu.memory_space<vmem>>, %arg4: memref<1x64xf32, #tpu.memory_space<vmem>>, %arg5: memref<1x64xf32, #tpu.memory_space<vmem>>, %arg6: memref<1x64xf32, #tpu.memory_space<vmem>>, %arg7: memref<2x16x64xbf16, #tpu.memory_space<vmem>>) attributes {dimension_semantics = [#tpu.dimension_semantics<parallel>, #tpu.dimension_semantics<parallel>], iteration_bounds = array<i64: 1, 1>, scalar_prefetch = 0 : i64, scratch_operands = 0 : i64, tpu.core_type = #tpu.core_type<tc>, window_params = [{transform_indices = @transform_0, window_bounds = array<i64: 2, 16, 64>}, {transform_indices = @transform_1, window_bounds = array<i64: 1, 64>}, {transform_indices = @transform_2, window_bounds = array<i64: 1, 64>}, {transform_indices = @transform_3, window_bounds = array<i64: 1, 64>}, {transform_indices = @transform_4, window_bounds = array<i64: 1, 64>}, {transform_indices = @transform_5, window_bounds = array<i64: 2, 16, 64>}]} {
    %c0 = arith.constant 0 : index
    %c0_0 = arith.constant 0 : index
    %0 = vector.load %arg3[%c0, %c0_0] : memref<1x64xf32, #tpu.memory_space<vmem>>, vector<1x64xf32>
    %cst = arith.constant 3.125000e-02 : f32
    %1 = vector.broadcast %cst : f32 to vector<1x64xf32>
    %2 = arith.mulf %0, %1 : vector<1x64xf32>
    %c0_1 = arith.constant 0 : index
    %c0_2 = arith.constant 0 : index
    %3 = vector.load %arg4[%c0_1, %c0_2] : memref<1x64xf32, #tpu.memory_space<vmem>>, vector<1x64xf32>
    %cst_3 = arith.constant 3.125000e-02 : f32
    %4 = vector.broadcast %cst_3 : f32 to vector<1x64xf32>
    %5 = arith.mulf %3, %4 : vector<1x64xf32>
    %6 = arith.mulf %2, %2 : vector<1x64xf32>
    %7 = arith.subf %5, %6 : vector<1x64xf32>
    %cst_4 = arith.constant 0.000000e+00 : f32
    %8 = vector.broadcast %cst_4 : f32 to vector<1x64xf32>
    %9 = arith.maximumf %7, %8 : vector<1x64xf32>
    %c0_5 = arith.constant 0 : index
    %c0_6 = arith.constant 0 : index
    %10 = vector.load %arg5[%c0_5, %c0_6] : memref<1x64xf32, #tpu.memory_space<vmem>>, vector<1x64xf32>
    %cst_7 = arith.constant 9.99999974E-6 : f32
    %11 = vector.broadcast %cst_7 : f32 to vector<1x64xf32>
    %12 = arith.addf %9, %11 : vector<1x64xf32>
    %13 = math.rsqrt %12 : vector<1x64xf32>
    %14 = arith.mulf %10, %13 : vector<1x64xf32>
    %c0_8 = arith.constant 0 : index
    %c0_9 = arith.constant 0 : index
    %15 = vector.load %arg6[%c0_8, %c0_9] : memref<1x64xf32, #tpu.memory_space<vmem>>, vector<1x64xf32>
    %16 = arith.mulf %2, %14 : vector<1x64xf32>
    %17 = arith.subf %15, %16 : vector<1x64xf32>
    %c0_10 = arith.constant 0 : index
    %c0_11 = arith.constant 0 : index
    %c0_12 = arith.constant 0 : index
    %18 = vector.load %arg2[%c0_10, %c0_11, %c0_12] : memref<2x16x64xbf16, #tpu.memory_space<vmem>>, vector<2x16x64xbf16>
    %19 = arith.extf %18 : vector<2x16x64xbf16> to vector<2x16x64xf32>
    %20 = vector.shape_cast %14 : vector<1x64xf32> to vector<1x1x64xf32>
    %21 = vector.broadcast %20 : vector<1x1x64xf32> to vector<2x16x64xf32>
    %22 = arith.mulf %19, %21 : vector<2x16x64xf32>
    %23 = vector.shape_cast %17 : vector<1x64xf32> to vector<1x1x64xf32>
    %24 = vector.broadcast %23 : vector<1x1x64xf32> to vector<2x16x64xf32>
    %25 = arith.addf %22, %24 : vector<2x16x64xf32>
    %cst_13 = arith.constant 0.000000e+00 : f32
    %26 = vector.broadcast %cst_13 : f32 to vector<2x16x64xf32>
    %27 = arith.cmpf oge, %25, %26 : vector<2x16x64xf32>
    %cst_14 = arith.constant 0.00999999977 : f32
    %28 = vector.broadcast %cst_14 : f32 to vector<2x16x64xf32>
    %29 = arith.mulf %28, %25 : vector<2x16x64xf32>
    %30 = arith.select %27, %25, %29 : vector<2x16x64xi1>, vector<2x16x64xf32>
    %31 = arith.truncf %30 : vector<2x16x64xf32> to vector<2x16x64xbf16>
    %c0_15 = arith.constant 0 : index
    %c0_16 = arith.constant 0 : index
    %c0_17 = arith.constant 0 : index
    %32 = vector.load %arg7[%c0_15, %c0_16, %c0_17] : memref<2x16x64xbf16, #tpu.memory_space<vmem>>, vector<2x16x64xbf16>
    tpu.vector_store %arg7[%c0_15, %c0_16, %c0_17], %31 {strides = array<i32>} : memref<2x16x64xbf16, #tpu.memory_space<vmem>>, vector<2x16x64xbf16>,
    return
  }
  func.func @transform_0(%arg0: i32, %arg1: i32) -> (i32, i32, i32) {
    %c0_i32 = arith.constant 0 : i32
    %c0_i32_0 = arith.constant 0 : i32
    return %arg0, %c0_i32, %arg1 : i32, i32, i32
  }
  func.func @transform_1(%arg0: i32, %arg1: i32) -> (i32, i32) {
    %c0_i32 = arith.constant 0 : i32
    %c0_i32_0 = arith.constant 0 : i32
    return %c0_i32, %arg1 : i32, i32
  }
  func.func @transform_2(%arg0: i32, %arg1: i32) -> (i32, i32) {
    %c0_i32 = arith.constant 0 : i32
    %c0_i32_0 = arith.constant 0 : i32
    return %c0_i32, %arg1 : i32, i32
  }
  func.func @transform_3(%arg0: i32, %arg1: i32) -> (i32, i32) {
    %c0_i32 = arith.constant 0 : i32
    %c0_i32_0 = arith.constant 0 : i32
    return %c0_i32, %arg1 : i32, i32
  }
  func.func @transform_4(%arg0: i32, %arg1: i32) -> (i32, i32) {
    %c0_i32 = arith.constant 0 : i32
    %c0_i32_0 = arith.constant 0 : i32
    return %c0_i32, %arg1 : i32, i32
  }
  func.func @transform_5(%arg0: i32, %arg1: i32) -> (i32, i32, i32) {
    %c0_i32 = arith.constant 0 : i32
    %c0_i32_0 = arith.constant 0 : i32
    return %arg0, %c0_i32, %arg1 : i32, i32, i32
  }
}

module attributes {stable_mosaic.version = 11 : i64} {
  func.func @_conv_bn_stats_kernel(%arg0: i32, %arg1: i32, %arg2: memref<2x5x5x128xbf16, #tpu.memory_space<vmem>>, %arg3: memref<2x2x128x64xbf16, #tpu.memory_space<vmem>>, %arg4: memref<2x16x64xbf16, #tpu.memory_space<vmem>>, %arg5: memref<1x64xf32, #tpu.memory_space<vmem>>, %arg6: memref<1x64xf32, #tpu.memory_space<vmem>>) attributes {dimension_semantics = [#tpu.dimension_semantics<parallel>, #tpu.dimension_semantics<arbitrary>], iteration_bounds = array<i64: 1, 1>, scalar_prefetch = 0 : i64, scratch_operands = 0 : i64, tpu.core_type = #tpu.core_type<tc>, window_params = [{transform_indices = @transform_0, window_bounds = array<i64: 2, 5, 5, 128>}, {transform_indices = @transform_1, window_bounds = array<i64: 2, 2, 128, 64>}, {transform_indices = @transform_2, window_bounds = array<i64: 2, 16, 64>}, {transform_indices = @transform_3, window_bounds = array<i64: 1, 64>}, {transform_indices = @transform_4, window_bounds = array<i64: 1, 64>}]} {
    %c0_i32 = arith.constant 0 : i32
    %0 = arith.cmpi eq, %arg1, %c0_i32 : i32
    %1 = arith.extui %0 : i1 to i32
    %c0_i32_0 = arith.constant 0 : i32
    %2 = arith.cmpi ne, %1, %c0_i32_0 : i32
    scf.if %2 {
      %cst_47 = arith.constant 0.000000e+00 : f32
      %40 = vector.broadcast %cst_47 : f32 to vector<1x64xf32>
      %c0_48 = arith.constant 0 : index
      %c0_49 = arith.constant 0 : index
      %41 = vector.load %arg5[%c0_48, %c0_49] : memref<1x64xf32, #tpu.memory_space<vmem>>, vector<1x64xf32>
      tpu.vector_store %arg5[%c0_48, %c0_49], %40 {strides = array<i32>} : memref<1x64xf32, #tpu.memory_space<vmem>>, vector<1x64xf32>,
      %cst_50 = arith.constant 0.000000e+00 : f32
      %42 = vector.broadcast %cst_50 : f32 to vector<1x64xf32>
      %c0_51 = arith.constant 0 : index
      %c0_52 = arith.constant 0 : index
      %43 = vector.load %arg6[%c0_51, %c0_52] : memref<1x64xf32, #tpu.memory_space<vmem>>, vector<1x64xf32>
      tpu.vector_store %arg6[%c0_51, %c0_52], %42 {strides = array<i32>} : memref<1x64xf32, #tpu.memory_space<vmem>>, vector<1x64xf32>,
    } else {
    }
    %c0 = arith.constant 0 : index
    %c0_1 = arith.constant 0 : index
    %c0_2 = arith.constant 0 : index
    %c0_3 = arith.constant 0 : index
    %3 = vector.load %arg2[%c0, %c0_1, %c0_2, %c0_3] : memref<2x5x5x128xbf16, #tpu.memory_space<vmem>>, vector<2x4x4x128xbf16>
    %4 = vector.shape_cast %3 : vector<2x4x4x128xbf16> to vector<32x128xbf16>
    %c0_4 = arith.constant 0 : index
    %c0_5 = arith.constant 0 : index
    %c0_6 = arith.constant 0 : index
    %c0_7 = arith.constant 0 : index
    %5 = vector.load %arg3[%c0_4, %c0_5, %c0_6, %c0_7] : memref<2x2x128x64xbf16, #tpu.memory_space<vmem>>, vector<1x1x128x64xbf16>
    %6 = vector.shape_cast %5 : vector<1x1x128x64xbf16> to vector<128x64xbf16>
    %cst = arith.constant dense<0.000000e+00> : vector<32x64xf32>
    %7 = tpu.matmul %4, %6, %cst {dimension_numbers = #tpu.dot_dimension_numbers<[1], [0], [0], [1], [0, 0, 1, 1], [], []>} : vector<32x128xbf16>, vector<128x64xbf16>, vector<32x64xf32> -> vector<32x64xf32>
    %c0_8 = arith.constant 0 : index
    %c0_9 = arith.constant 0 : index
    %c1 = arith.constant 1 : index
    %c0_10 = arith.constant 0 : index
    %8 = vector.load %arg2[%c0_8, %c0_9, %c1, %c0_10] : memref<2x5x5x128xbf16, #tpu.memory_space<vmem>>, vector<2x4x4x128xbf16>
    %9 = vector.shape_cast %8 : vector<2x4x4x128xbf16> to vector<32x128xbf16>
    %c0_11 = arith.constant 0 : index
    %c1_12 = arith.constant 1 : index
    %c0_13 = arith.constant 0 : index
    %c0_14 = arith.constant 0 : index
    %10 = vector.load %arg3[%c0_11, %c1_12, %c0_13, %c0_14] : memref<2x2x128x64xbf16, #tpu.memory_space<vmem>>, vector<1x1x128x64xbf16>
    %11 = vector.shape_cast %10 : vector<1x1x128x64xbf16> to vector<128x64xbf16>
    %cst_15 = arith.constant dense<0.000000e+00> : vector<32x64xf32>
    %12 = tpu.matmul %9, %11, %cst_15 {dimension_numbers = #tpu.dot_dimension_numbers<[1], [0], [0], [1], [0, 0, 1, 1], [], []>} : vector<32x128xbf16>, vector<128x64xbf16>, vector<32x64xf32> -> vector<32x64xf32>
    %13 = arith.addf %7, %12 : vector<32x64xf32>
    %c0_16 = arith.constant 0 : index
    %c1_17 = arith.constant 1 : index
    %c0_18 = arith.constant 0 : index
    %c0_19 = arith.constant 0 : index
    %14 = vector.load %arg2[%c0_16, %c1_17, %c0_18, %c0_19] : memref<2x5x5x128xbf16, #tpu.memory_space<vmem>>, vector<2x4x4x128xbf16>
    %15 = vector.shape_cast %14 : vector<2x4x4x128xbf16> to vector<32x128xbf16>
    %c1_20 = arith.constant 1 : index
    %c0_21 = arith.constant 0 : index
    %c0_22 = arith.constant 0 : index
    %c0_23 = arith.constant 0 : index
    %16 = vector.load %arg3[%c1_20, %c0_21, %c0_22, %c0_23] : memref<2x2x128x64xbf16, #tpu.memory_space<vmem>>, vector<1x1x128x64xbf16>
    %17 = vector.shape_cast %16 : vector<1x1x128x64xbf16> to vector<128x64xbf16>
    %cst_24 = arith.constant dense<0.000000e+00> : vector<32x64xf32>
    %18 = tpu.matmul %15, %17, %cst_24 {dimension_numbers = #tpu.dot_dimension_numbers<[1], [0], [0], [1], [0, 0, 1, 1], [], []>} : vector<32x128xbf16>, vector<128x64xbf16>, vector<32x64xf32> -> vector<32x64xf32>
    %19 = arith.addf %13, %18 : vector<32x64xf32>
    %c0_25 = arith.constant 0 : index
    %c1_26 = arith.constant 1 : index
    %c1_27 = arith.constant 1 : index
    %c0_28 = arith.constant 0 : index
    %20 = vector.load %arg2[%c0_25, %c1_26, %c1_27, %c0_28] : memref<2x5x5x128xbf16, #tpu.memory_space<vmem>>, vector<2x4x4x128xbf16>
    %21 = vector.shape_cast %20 : vector<2x4x4x128xbf16> to vector<32x128xbf16>
    %c1_29 = arith.constant 1 : index
    %c1_30 = arith.constant 1 : index
    %c0_31 = arith.constant 0 : index
    %c0_32 = arith.constant 0 : index
    %22 = vector.load %arg3[%c1_29, %c1_30, %c0_31, %c0_32] : memref<2x2x128x64xbf16, #tpu.memory_space<vmem>>, vector<1x1x128x64xbf16>
    %23 = vector.shape_cast %22 : vector<1x1x128x64xbf16> to vector<128x64xbf16>
    %cst_33 = arith.constant dense<0.000000e+00> : vector<32x64xf32>
    %24 = tpu.matmul %21, %23, %cst_33 {dimension_numbers = #tpu.dot_dimension_numbers<[1], [0], [0], [1], [0, 0, 1, 1], [], []>} : vector<32x128xbf16>, vector<128x64xbf16>, vector<32x64xf32> -> vector<32x64xf32>
    %25 = arith.addf %19, %24 : vector<32x64xf32>
    %c0_34 = arith.constant 0 : index
    %c0_35 = arith.constant 0 : index
    %26 = vector.load %arg5[%c0_34, %c0_35] : memref<1x64xf32, #tpu.memory_space<vmem>>, vector<1x64xf32>
    %cst_36 = arith.constant dense<0.000000e+00> : vector<64xf32>
    %27 = vector.multi_reduction <add>, %25, %cst_36 [0] : vector<32x64xf32> to vector<64xf32>
    %28 = vector.shape_cast %27 : vector<64xf32> to vector<1x64xf32>
    %29 = arith.addf %26, %28 : vector<1x64xf32>
    %c0_37 = arith.constant 0 : index
    %c0_38 = arith.constant 0 : index
    %30 = vector.load %arg5[%c0_37, %c0_38] : memref<1x64xf32, #tpu.memory_space<vmem>>, vector<1x64xf32>
    tpu.vector_store %arg5[%c0_37, %c0_38], %29 {strides = array<i32>} : memref<1x64xf32, #tpu.memory_space<vmem>>, vector<1x64xf32>,
    %c0_39 = arith.constant 0 : index
    %c0_40 = arith.constant 0 : index
    %31 = vector.load %arg6[%c0_39, %c0_40] : memref<1x64xf32, #tpu.memory_space<vmem>>, vector<1x64xf32>
    %32 = arith.mulf %25, %25 : vector<32x64xf32>
    %cst_41 = arith.constant dense<0.000000e+00> : vector<64xf32>
    %33 = vector.multi_reduction <add>, %32, %cst_41 [0] : vector<32x64xf32> to vector<64xf32>
    %34 = vector.shape_cast %33 : vector<64xf32> to vector<1x64xf32>
    %35 = arith.addf %31, %34 : vector<1x64xf32>
    %c0_42 = arith.constant 0 : index
    %c0_43 = arith.constant 0 : index
    %36 = vector.load %arg6[%c0_42, %c0_43] : memref<1x64xf32, #tpu.memory_space<vmem>>, vector<1x64xf32>
    tpu.vector_store %arg6[%c0_42, %c0_43], %35 {strides = array<i32>} : memref<1x64xf32, #tpu.memory_space<vmem>>, vector<1x64xf32>,
    %37 = vector.shape_cast %25 : vector<32x64xf32> to vector<2x16x64xf32>
    %38 = arith.truncf %37 : vector<2x16x64xf32> to vector<2x16x64xbf16>
    %c0_44 = arith.constant 0 : index
    %c0_45 = arith.constant 0 : index
    %c0_46 = arith.constant 0 : index
    %39 = vector.load %arg4[%c0_44, %c0_45, %c0_46] : memref<2x16x64xbf16, #tpu.memory_space<vmem>>, vector<2x16x64xbf16>
    tpu.vector_store %arg4[%c0_44, %c0_45, %c0_46], %38 {strides = array<i32>} : memref<2x16x64xbf16, #tpu.memory_space<vmem>>, vector<2x16x64xbf16>,
    return
  }
  func.func @transform_0(%arg0: i32, %arg1: i32) -> (i32, i32, i32, i32) {
    %c0_i32 = arith.constant 0 : i32
    %c0_i32_0 = arith.constant 0 : i32
    %c0_i32_1 = arith.constant 0 : i32
    %c0_i32_2 = arith.constant 0 : i32
    return %arg1, %c0_i32, %c0_i32_0, %c0_i32_1 : i32, i32, i32, i32
  }
  func.func @transform_1(%arg0: i32, %arg1: i32) -> (i32, i32, i32, i32) {
    %c0_i32 = arith.constant 0 : i32
    %c0_i32_0 = arith.constant 0 : i32
    %c0_i32_1 = arith.constant 0 : i32
    %c0_i32_2 = arith.constant 0 : i32
    return %c0_i32, %c0_i32_0, %c0_i32_1, %arg0 : i32, i32, i32, i32
  }
  func.func @transform_2(%arg0: i32, %arg1: i32) -> (i32, i32, i32) {
    %c0_i32 = arith.constant 0 : i32
    %c0_i32_0 = arith.constant 0 : i32
    return %arg1, %c0_i32, %arg0 : i32, i32, i32
  }
  func.func @transform_3(%arg0: i32, %arg1: i32) -> (i32, i32) {
    %c0_i32 = arith.constant 0 : i32
    %c0_i32_0 = arith.constant 0 : i32
    return %c0_i32, %arg0 : i32, i32
  }
  func.func @transform_4(%arg0: i32, %arg1: i32) -> (i32, i32) {
    %c0_i32 = arith.constant 0 : i32
    %c0_i32_0 = arith.constant 0 : i32
    return %c0_i32, %arg0 : i32, i32
  }
}

module attributes {stable_mosaic.version = 11 : i64} {
  func.func @_head_kernel(%arg0: memref<2x1024xbf16, #tpu.memory_space<vmem>>, %arg1: memref<1x1024xf32, #tpu.memory_space<vmem>>, %arg2: memref<1x1xf32, #tpu.memory_space<vmem>>, %arg3: memref<2x1xf32, #tpu.memory_space<vmem>>) attributes {dimension_semantics = [], scalar_prefetch = 0 : i64, scratch_operands = 0 : i64, tpu.core_type = #tpu.core_type<tc>} {
    %c0 = arith.constant 0 : index
    %c0_0 = arith.constant 0 : index
    %0 = vector.load %arg0[%c0, %c0_0] : memref<2x1024xbf16, #tpu.memory_space<vmem>>, vector<2x1024xbf16>
    %1 = arith.extf %0 : vector<2x1024xbf16> to vector<2x1024xf32>
    %c0_1 = arith.constant 0 : index
    %c0_2 = arith.constant 0 : index
    %2 = vector.load %arg1[%c0_1, %c0_2] : memref<1x1024xf32, #tpu.memory_space<vmem>>, vector<1x1024xf32>
    %3 = vector.broadcast %2 : vector<1x1024xf32> to vector<2x1024xf32>
    %4 = arith.mulf %1, %3 : vector<2x1024xf32>
    %cst = arith.constant dense<0.000000e+00> : vector<2xf32>
    %5 = vector.multi_reduction <add>, %4, %cst [1] : vector<2x1024xf32> to vector<2xf32>
    %6 = vector.shape_cast %5 : vector<2xf32> to vector<2x1xf32>
    %c0_3 = arith.constant 0 : index
    %c0_4 = arith.constant 0 : index
    %7 = vector.load %arg2[%c0_3, %c0_4] : memref<1x1xf32, #tpu.memory_space<vmem>>, vector<1x1xf32>
    %8 = vector.broadcast %7 : vector<1x1xf32> to vector<2x1xf32>
    %9 = arith.addf %6, %8 : vector<2x1xf32>
    %10 = arith.negf %9 : vector<2x1xf32>
    %11 = math.exp %10 : vector<2x1xf32>
    %cst_5 = arith.constant 1.000000e+00 : f32
    %12 = vector.broadcast %cst_5 : f32 to vector<2x1xf32>
    %13 = arith.addf %12, %11 : vector<2x1xf32>
    %14 = arith.divf %12, %13 : vector<2x1xf32>
    %c0_6 = arith.constant 0 : index
    %c0_7 = arith.constant 0 : index
    %15 = vector.load %arg3[%c0_6, %c0_7] : memref<2x1xf32, #tpu.memory_space<vmem>>, vector<2x1xf32>
    tpu.vector_store %arg3[%c0_6, %c0_7], %14 {strides = array<i32>} : memref<2x1xf32, #tpu.memory_space<vmem>>, vector<2x1xf32>,
    return
  }
}

</mosaic_0001>

<llo_original>
// kernel: dcgan_discriminator_forward.4
$region0: #{dcgan_discriminator_forward.4}
  #allocation0 [shape = 'u32[]', space=smem, size = 0x4, offset = 0x4, fixed_abs, tag = 'smem constant byte address 0x4 - core index']
  #allocation1 [shape = 'u32[144,128]{1,0:T(1,128)}', space=vmem, size = 0x12000, scoped, tag = 'internal scratch']
  %s0 = inlined_call_operand.hbm [shape: bf16[2,9,9,16], index: 0, kind: input, shape index: {}]
  %s1 = inlined_call_operand.hbm [shape: bf16[2,2,16,32], index: 1, kind: input, shape index: {}]
  %s2 = inlined_call_operand.hbm [shape: f32[1,32], index: 2, kind: input, shape index: {}]
  %s3 = inlined_call_operand.hbm [shape: bf16[2,64,32], index: 3, kind: output, shape index: {}]
  %s4 = sld [smem:[#allocation0]]
  $region34: #{dcgan_discriminator_forward.4} parent=0
    _
  %s6 = ssub.s32 1, %s4
  %s7 = scalar_select 0, %s6, %s4
  $region1: #{dcgan_discriminator_forward.4} parent=0
    #allocation2 [shape = 'u8[73728]{0}', space=vmem, size = 0x12000, scoped, tag = 'input window, operand 0, single buffered']
    #allocation3 [shape = 's32[1]{0}', space=sflag, size = 0x4, scoped, tag = 'scoped memory for dcgan_discriminator_forward.4']
    #allocation4 [shape = 's32[1]{0}', space=sflag, size = 0x4, scoped, tag = 'scoped memory for dcgan_discriminator_forward.4']
    #allocation5 [shape = 'u8[16384]{0}', space=vmem, size = 0x4000, scoped, tag = 'input window, operand 1, single buffered']
    #allocation6 [shape = 's32[1]{0}', space=sflag, size = 0x4, scoped, tag = 'scoped memory for dcgan_discriminator_forward.4']
    #allocation7 [shape = 'u8[512]{0}', space=vmem, size = 0x400, scoped, tag = 'input window, operand 2, single buffered']
    #allocation8 [shape = 'u8[32768]{0}', space=vmem, size = 0x8000, scoped, tag = 'output window, operand 0, single buffered']
    %8 = vsyncpa [#allocation3], 0
    %9 = vsyncpa [#allocation6], 0
    %10 = vsyncpa [#allocation4], 0
    // Predicated region
    $region2: #{dcgan_discriminator_forward.4} parent=1 // pred_check
      _
    $region3: #{dcgan_discriminator_forward.4} parent=1 // pred_check_branch
      %12 = sbr.rel (0) target = $region5
    $region4: #{dcgan_discriminator_forward.4} parent=1 // pred_region
      %s14 = ssub.s32 2304, 2304
      %15 = vsyncadd [#allocation3], %s14
      %s16 = sshll.u32 [#allocation2], 4
      %s17 = int_to_ptr.vmem [resolvable:$true] %s16
      %22 = dma.hbm_to_vmem [thread:$0]  %s0, 2304, %s17, [#allocation3], 64, 64, 4
    $region5: #{dcgan_discriminator_forward.4} parent=1 // pred_fallthru
      _
    // Predicated region
    $region6: #{dcgan_discriminator_forward.4} parent=1 // pred_check
      _
    $region7: #{dcgan_discriminator_forward.4} parent=1 // pred_check_branch
      %24 = sbr.rel (0) target = $region9
    $region8: #{dcgan_discriminator_forward.4} parent=1 // pred_region
      %s26 = ssub.s32 512, 512
      %27 = vsyncadd [#allocation6], %s26
      %s28 = sshll.u32 [#allocation5], 4
      %s29 = int_to_ptr.vmem [resolvable:$true] %s28
      %34 = dma.hbm_to_vmem [thread:$0]  %s1, 512, %s29, [#allocation6], 64, 64, 4
    $region9: #{dcgan_discriminator_forward.4} parent=1 // pred_fallthru
      _
    // Predicated region
    $region10: #{dcgan_discriminator_forward.4} parent=1 // pred_check
      _
    $region11: #{dcgan_discriminator_forward.4} parent=1 // pred_check_branch
      %36 = sbr.rel (0) target = $region13
    $region12: #{dcgan_discriminator_forward.4} parent=1 // pred_region
      %s38 = ssub.s32 16, 16
      %39 = vsyncadd [#allocation6], %s38
      %s41 = sshll.u32 [#allocation7], 4
      %s42 = int_to_ptr.vmem [resolvable:$true] %s41
      %44 = dma.hbm_to_vmem [thread:$0]  %s2, 16, %s42, [#allocation6]
    $region13: #{dcgan_discriminator_forward.4} parent=1 // pred_fallthru
      _
    // Predicated region
    $region14: #{dcgan_discriminator_forward.4} parent=1 // pred_check
      _
    $region15: #{dcgan_discriminator_forward.4} parent=1 // pred_check_branch
      %46 = sbr.rel (0) target = $region17
    $region16: #{dcgan_discriminator_forward.4} parent=1 // pred_region
      %47 = dma.done [#allocation3], 2304
    $region17: #{dcgan_discriminator_forward.4} parent=1 // pred_fallthru
      _
    // Predicated region
    $region18: #{dcgan_discriminator_forward.4} parent=1 // pred_check
      _
    $region19: #{dcgan_discriminator_forward.4} parent=1 // pred_check_branch
      %49 = sbr.rel (0) target = $region21
    $region20: #{dcgan_discriminator_forward.4} parent=1 // pred_region
      %50 = dma.done [#allocation6], 512
    $region21: #{dcgan_discriminator_forward.4} parent=1 // pred_fallthru
      _
    // Predicated region
    $region22: #{dcgan_discriminator_forward.4} parent=1 // pred_check
      _
    $region23: #{dcgan_discriminator_forward.4} parent=1 // pred_check_branch
      %52 = sbr.rel (0) target = $region25
    $region24: #{dcgan_discriminator_forward.4} parent=1 // pred_region
      %53 = dma.done [#allocation6], 16
    $region25: #{dcgan_discriminator_forward.4} parent=1 // pred_fallthru
      _
    %v55 = vld [vmem:[#allocation2] sm:$0xf]
    %v56 = vld [vmem:[#allocation2 + $0x8] sm:$0xf]
    %v57 = vld [vmem:[#allocation2 + $0x10] sm:$0xf]
    %v58 = vld [vmem:[#allocation2 + $0x18] sm:$0xf]
    %v59 = vld [vmem:[#allocation2 + $0x20] sm:$0xf]
    %v60 = vld [vmem:[#allocation2 + $0x28] sm:$0xf]
    %v61 = vld [vmem:[#allocation2 + $0x30] sm:$0xf]
    %v62 = vld [vmem:[#allocation2 + $0x38] sm:$0xf]
    %v63 = vld [vmem:[#allocation2 + $0x48] sm:$0xf]
    %v64 = vld [vmem:[#allocation2 + $0x50] sm:$0xf]
    %v65 = vld [vmem:[#allocation2 + $0x58] sm:$0xf]
    %v66 = vld [vmem:[#allocation2 + $0x60] sm:$0xf]
    %v67 = vld [vmem:[#allocation2 + $0x68] sm:$0xf]
    %v68 = vld [vmem:[#allocation2 + $0x70] sm:$0xf]
    %v69 = vld [vmem:[#allocation2 + $0x78] sm:$0xf]
    %v70 = vld [vmem:[#allocation2 + $0x80] sm:$0xf]
    %v71 = vld [vmem:[#allocation5] sm:$0xf]
    %v72 = vld [vmem:[#allocation5 + $0x4] sm:$0xf]
    %v73 = vld [vmem:[#allocation2 + $0x4] sm:$0x1]
    %v74 = vld [vmem:[#allocation2 + $0xc] sm:$0x1]
    %v75 = vld [vmem:[#allocation2 + $0x14] sm:$0x1]
    %v76 = vld [vmem:[#allocation2 + $0x1c] sm:$0x1]
    %v77 = vld [vmem:[#allocation2 + $0x24] sm:$0x1]
    %v78 = vld [vmem:[#allocation2 + $0x2c] sm:$0x1]
    %v79 = vld [vmem:[#allocation2 + $0x34] sm:$0x1]
    %v80 = vld [vmem:[#allocation2 + $0x3c] sm:$0x1]
    %v81 = vld [vmem:[#allocation2 + $0x4c] sm:$0x1]
    %v82 = vld [vmem:[#allocation2 + $0x54] sm:$0x1]
    %v83 = vld [vmem:[#allocation2 + $0x5c] sm:$0x1]
    %v84 = vld [vmem:[#allocation2 + $0x64] sm:$0x1]
    %v85 = vld [vmem:[#allocation2 + $0x6c] sm:$0x1]
    %v86 = vld [vmem:[#allocation2 + $0x74] sm:$0x1]
    %v87 = vld [vmem:[#allocation2 + $0x7c] sm:$0x1]
    %v88 = vld [vmem:[#allocation2 + $0x84] sm:$0x1]
    %vm89 = vsmask.f32 3328
    %vm90 = vsmask.f32 7440
    %vm91 = vmor %vm89, %vm90
    %v93 = vshrl.u32 %v55, 16
    %v95 = vrot.slane %v93, 4
    %v96 = vshll.u32 %v55, 16
    %v98 = vrot.slane %v96, 5
    %v99 = vor.u32 %v95, %v98
    %v100 = vrot.slane %v99, 4
    %v102 = vshll.u32 %v73, 16
    %v104 = vrot.slane %v102, 5
    %v105 = vsel %vm91, %v100, %v104
    %v107 = vshrl.u32 %v56, 16
    %v109 = vrot.slane %v107, 4
    %v110 = vshll.u32 %v56, 16
    %v112 = vrot.slane %v110, 5
    %v113 = vor.u32 %v109, %v112
    %v114 = vrot.slane %v113, 4
    %v116 = vshll.u32 %v74, 16
    %v118 = vrot.slane %v116, 5
    %v119 = vsel %vm91, %v114, %v118
    %v121 = vshrl.u32 %v57, 16
    %v123 = vrot.slane %v121, 4
    %v124 = vshll.u32 %v57, 16
    %v126 = vrot.slane %v124, 5
    %v127 = vor.u32 %v123, %v126
    %v128 = vrot.slane %v127, 4
    %v130 = vshll.u32 %v75, 16
    %v132 = vrot.slane %v130, 5
    %v133 = vsel %vm91, %v128, %v132
    %v135 = vshrl.u32 %v58, 16
    %v137 = vrot.slane %v135, 4
    %v138 = vshll.u32 %v58, 16
    %v140 = vrot.slane %v138, 5
    %v141 = vor.u32 %v137, %v140
    %v142 = vrot.slane %v141, 4
    %v144 = vshll.u32 %v76, 16
    %v146 = vrot.slane %v144, 5
    %v147 = vsel %vm91, %v142, %v146
    %v149 = vshrl.u32 %v59, 16
    %v151 = vrot.slane %v149, 4
    %v152 = vshll.u32 %v59, 16
    %v154 = vrot.slane %v152, 5
    %v155 = vor.u32 %v151, %v154
    %v156 = vrot.slane %v155, 4
    %v158 = vshll.u32 %v77, 16
    %v160 = vrot.slane %v158, 5
    %v161 = vsel %vm91, %v156, %v160
    %v163 = vshrl.u32 %v60, 16
    %v165 = vrot.slane %v163, 4
    %v166 = vshll.u32 %v60, 16
    %v168 = vrot.slane %v166, 5
    %v169 = vor.u32 %v165, %v168
    %v170 = vrot.slane %v169, 4
    %v172 = vshll.u32 %v78, 16
    %v174 = vrot.slane %v172, 5
    %v175 = vsel %vm91, %v170, %v174
    %v177 = vshrl.u32 %v61, 16
    %v179 = vrot.slane %v177, 4
    %v180 = vshll.u32 %v61, 16
    %v182 = vrot.slane %v180, 5
    %v183 = vor.u32 %v179, %v182
    %v184 = vrot.slane %v183, 4
    %v186 = vshll.u32 %v79, 16
    %v188 = vrot.slane %v186, 5
    %v189 = vsel %vm91, %v184, %v188
    %v191 = vshrl.u32 %v62, 16
    %v193 = vrot.slane %v191, 4
    %v194 = vshll.u32 %v62, 16
    %v196 = vrot.slane %v194, 5
    %v197 = vor.u32 %v193, %v196
    %v198 = vrot.slane %v197, 4
    %v200 = vshll.u32 %v80, 16
    %v202 = vrot.slane %v200, 5
    %v203 = vsel %vm91, %v198, %v202
    %v205 = vshrl.u32 %v63, 16
    %v207 = vrot.slane %v205, 4
    %v208 = vshll.u32 %v63, 16
    %v210 = vrot.slane %v208, 5
    %v211 = vor.u32 %v207, %v210
    %v212 = vrot.slane %v211, 4
    %v214 = vshll.u32 %v81, 16
    %v216 = vrot.slane %v214, 5
    %v217 = vsel %vm91, %v212, %v216
    %v219 = vshrl.u32 %v64, 16
    %v221 = vrot.slane %v219, 4
    %v222 = vshll.u32 %v64, 16
    %v224 = vrot.slane %v222, 5
    %v225 = vor.u32 %v221, %v224
    %v226 = vrot.slane %v225, 4
    %v228 = vshll.u32 %v82, 16
    %v230 = vrot.slane %v228, 5
    %v231 = vsel %vm91, %v226, %v230
    %v233 = vshrl.u32 %v65, 16
    %v235 = vrot.slane %v233, 4
    %v236 = vshll.u32 %v65, 16
    %v238 = vrot.slane %v236, 5
    %v239 = vor.u32 %v235, %v238
    %v240 = vrot.slane %v239, 4
    %v242 = vshll.u32 %v83, 16
    %v244 = vrot.slane %v242, 5
    %v245 = vsel %vm91, %v240, %v244
    %v247 = vshrl.u32 %v66, 16
    %v249 = vrot.slane %v247, 4
    %v250 = vshll.u32 %v66, 16
    %v252 = vrot.slane %v250, 5
    %v253 = vor.u32 %v249, %v252
    %v254 = vrot.slane %v253, 4
    %v256 = vshll.u32 %v84, 16
    %v258 = vrot.slane %v256, 5
    %v259 = vsel %vm91, %v254, %v258
    %v261 = vshrl.u32 %v67, 16
    %v263 = vrot.slane %v261, 4
    %v264 = vshll.u32 %v67, 16
    %v266 = vrot.slane %v264, 5
    %v267 = vor.u32 %v263, %v266
    %v268 = vrot.slane %v267, 4
    %v270 = vshll.u32 %v85, 16
    %v272 = vrot.slane %v270, 5
    %v273 = vsel %vm91, %v268, %v272
    %v275 = vshrl.u32 %v68, 16
    %v277 = vrot.slane %v275, 4
    %v278 = vshll.u32 %v68, 16
    %v280 = vrot.slane %v278, 5
    %v281 = vor.u32 %v277, %v280
    %v282 = vrot.slane %v281, 4
    %v284 = vshll.u32 %v86, 16
    %v286 = vrot.slane %v284, 5
    %v287 = vsel %vm91, %v282, %v286
    %v289 = vshrl.u32 %v69, 16
    %v291 = vrot.slane %v289, 4
    %v292 = vshll.u32 %v69, 16
    %v294 = vrot.slane %v292, 5
    %v295 = vor.u32 %v291, %v294
    %v296 = vrot.slane %v295, 4
    %v298 = vshll.u32 %v87, 16
    %v300 = vrot.slane %v298, 5
    %v301 = vsel %vm91, %v296, %v300
    %v303 = vshrl.u32 %v70, 16
    %v305 = vrot.slane %v303, 4
    %v306 = vshll.u32 %v70, 16
    %v308 = vrot.slane %v306, 5
    %v309 = vor.u32 %v305, %v308
    %v310 = vrot.slane %v309, 4
    %v312 = vshll.u32 %v88, 16
    %v314 = vrot.slane %v312, 5
    %v315 = vsel %vm91, %v310, %v314
    %s316 = scalar_lea.vmem [#allocation5], 8
    %v317 = vld [vmem:[%s316] sm:$0xf]
    %v318 = vld [vmem:[%s316 + $0x4] sm:$0xf]
    %v319 = vunpack.c.l.b16 %v105
    %v320 = vunpack.c.l.b16 %v119
    %v321 = vunpack.c.l.b16 %v133
    %v322 = vunpack.c.l.b16 %v147
    %v323 = vunpack.c.l.b16 %v161
    %v324 = vunpack.c.l.b16 %v175
    %v325 = vunpack.c.l.b16 %v189
    %v326 = vunpack.c.l.b16 %v203
    %v327 = vunpack.c.l.b16 %v217
    %v328 = vunpack.c.l.b16 %v231
    %v329 = vunpack.c.l.b16 %v245
    %v330 = vunpack.c.l.b16 %v259
    %v331 = vunpack.c.l.b16 %v273
    %v332 = vunpack.c.l.b16 %v287
    %v333 = vunpack.c.l.b16 %v301
    %v334 = vunpack.c.l.b16 %v315
    %v335 = vpack.c.b16 %v320, %v319
    %v336 = vpack.c.b16 %v322, %v321
    %v337 = vpack.c.b16 %v324, %v323
    %v338 = vpack.c.b16 %v326, %v325
    %v339 = vpack.c.b16 %v328, %v327
    %v340 = vpack.c.b16 %v330, %v329
    %v341 = vpack.c.b16 %v332, %v331
    %v342 = vpack.c.b16 %v334, %v333
    %v345 = vunpack.c.l.b16 %v317
    %v346 = vunpack.c.l.b16 %v318
    %v347 = vpack.c.b16 %v346, %v345
    %vm349 = vcmask 130048
    %v351 = vsel %vm349, %v335, 0
    %v354 = vsel %vm349, %v336, 0
    %v357 = vsel %vm349, %v337, 0
    %v360 = vsel %vm349, %v338, 0
    %v363 = vsel %vm349, %v339, 0
    %v366 = vsel %vm349, %v340, 0
    %v369 = vsel %vm349, %v341, 0
    %v372 = vsel %vm349, %v342, 0
    %374 = vmatprep.subr.bf16.mxu0 0
    %375 = vmatpush1.bf16.msra.mxu0 %v347
    %376 = vmatprep.subr.bf16.mxu0 0
    %377 = vmatpush1.bf16.msra.mxu0 0
    %378 = vmatprep.subr.bf16.mxu0 0
    %379 = vmatpush1.bf16.msra.mxu0 0
    %380 = vmatprep.subr.bf16.mxu0 0
    %381 = vmatpush1.bf16.msra.mxu0 0
    %382 = vmatprep.subr.bf16.mxu0 0
    %383 = vmatpush1.bf16.msra.mxu0 0
    %384 = vmatprep.subr.bf16.mxu0 0
    %385 = vmatpush1.bf16.msra.mxu0 0
    %386 = vmatprep.subr.bf16.mxu0 0
    %387 = vmatpush1.bf16.msra.mxu0 0
    %388 = vmatprep.subr.bf16.mxu0 0
    %389 = vmatpush1.bf16.msra.mxu0 0
    %390 = vmatprep.subr.bf16.mxu0 0
    %391 = vmatpush1.bf16.msra.mxu0 0
    %392 = vmatprep.subr.bf16.mxu0 0
    %393 = vmatpush1.bf16.msra.mxu0 0
    %394 = vmatprep.subr.bf16.mxu0 0
    %395 = vmatpush1.bf16.msra.mxu0 0
    %396 = vmatprep.subr.bf16.mxu0 0
    %397 = vmatpush1.bf16.msra.mxu0 0
    %398 = vmatprep.subr.bf16.mxu0 0
    %399 = vmatpush1.bf16.msra.mxu0 0
    %400 = vmatprep.subr.bf16.mxu0 0
    %401 = vmatpush1.bf16.msra.mxu0 0
    %402 = vmatprep.subr.bf16.mxu0 0
    %403 = vmatpush1.bf16.msra.mxu0 0
    %404 = vmatprep.subr.bf16.mxu0 0
    %405 = vmatpush1.bf16.msra.mxu0 0
    %406 = vmatprep.mubr.bf16.mxu0 0
    %407 = vmatmul.mubr.bf16.gmra.mrb[0].mxu0 %v351
    %v408 = vpop.f32.mrb[0].mxu0
    %v409 = vadd.f32 0.0, %v408
    %v410 = vpop.f32.mrb[0].mxu0
    %v411 = vpop.f32.mrb[0].mxu0
    %v412 = vadd.f32 0.0, %v411
    %v413 = vpop.f32.mrb[0].mxu0
    %414 = vmatprep.mubr.bf16.mxu0 0
    %415 = vmatmul.mubr.bf16.gmra.mrb[0].mxu0 %v354
    %v416 = vpop.f32.mrb[0].mxu0
    %v417 = vadd.f32 0.0, %v416
    %v418 = vpop.f32.mrb[0].mxu0
    %v419 = vpop.f32.mrb[0].mxu0
    %v420 = vadd.f32 0.0, %v419
    %v421 = vpop.f32.mrb[0].mxu0
    %422 = vmatprep.mubr.bf16.mxu0 0
    %423 = vmatmul.mubr.bf16.gmra.mrb[0].mxu0 %v357
    %v424 = vpop.f32.mrb[0].mxu0
    %v425 = vadd.f32 0.0, %v424
    %v426 = vpop.f32.mrb[0].mxu0
    %v427 = vpop.f32.mrb[0].mxu0
    %v428 = vadd.f32 0.0, %v427
    %v429 = vpop.f32.mrb[0].mxu0
    %430 = vmatprep.mubr.bf16.mxu0 0
    %431 = vmatmul.mubr.bf16.gmra.mrb[0].mxu0 %v360
    %v432 = vpop.f32.mrb[0].mxu0
    %v433 = vadd.f32 0.0, %v432
    %v434 = vpop.f32.mrb[0].mxu0
    %v435 = vpop.f32.mrb[0].mxu0
    %v436 = vadd.f32 0.0, %v435
    %v437 = vpop.f32.mrb[0].mxu0
    %438 = vmatprep.mubr.bf16.mxu0 0
    %439 = vmatmul.mubr.bf16.gmra.mrb[0].mxu0 %v363
    %v440 = vpop.f32.mrb[0].mxu0
    %v441 = vadd.f32 0.0, %v440
    %v442 = vpop.f32.mrb[0].mxu0
    %v443 = vpop.f32.mrb[0].mxu0
    %v444 = vadd.f32 0.0, %v443
    %v445 = vpop.f32.mrb[0].mxu0
    %446 = vmatprep.mubr.bf16.mxu0 0
    %447 = vmatmul.mubr.bf16.gmra.mrb[0].mxu0 %v366
    %v448 = vpop.f32.mrb[0].mxu0
    %v449 = vadd.f32 0.0, %v448
    %v450 = vpop.f32.mrb[0].mxu0
    %v451 = vpop.f32.mrb[0].mxu0
    %v452 = vadd.f32 0.0, %v451
    %v453 = vpop.f32.mrb[0].mxu0
    %454 = vmatprep.mubr.bf16.mxu0 0
    %455 = vmatmul.mubr.bf16.gmra.mrb[0].mxu0 %v369
    %v456 = vpop.f32.mrb[0].mxu0
    %v457 = vadd.f32 0.0, %v456
    %v458 = vpop.f32.mrb[0].mxu0
    %v459 = vpop.f32.mrb[0].mxu0
    %v460 = vadd.f32 0.0, %v459
    %v461 = vpop.f32.mrb[0].mxu0
    %462 = vmatprep.mubr.bf16.mxu0 0
    %463 = vmatmul.mubr.bf16.gmra.mrb[0].mxu0 %v372
    %v464 = vpop.f32.mrb[0].mxu0
    %v465 = vadd.f32 0.0, %v464
    %v466 = vpop.f32.mrb[0].mxu0
    %v467 = vpop.f32.mrb[0].mxu0
    %v468 = vadd.f32 0.0, %v467
    %v469 = vpop.f32.mrb[0].mxu0
    %470 = vdwg.mxu0
    %v487 = vunpack.c.l.b16 %v55
    %v488 = vunpack.c.l.b16 %v56
    %v489 = vunpack.c.l.b16 %v57
    %v490 = vunpack.c.l.b16 %v58
    %v491 = vunpack.c.l.b16 %v59
    %v492 = vunpack.c.l.b16 %v60
    %v493 = vunpack.c.l.b16 %v61
    %v494 = vunpack.c.l.b16 %v62
    %v495 = vunpack.c.l.b16 %v63
    %v496 = vunpack.c.l.b16 %v64
    %v497 = vunpack.c.l.b16 %v65
    %v498 = vunpack.c.l.b16 %v66
    %v499 = vunpack.c.l.b16 %v67
    %v500 = vunpack.c.l.b16 %v68
    %v501 = vunpack.c.l.b16 %v69
    %v502 = vunpack.c.l.b16 %v70
    %v503 = vpack.c.b16 %v488, %v487
    %v504 = vpack.c.b16 %v490, %v489
    %v505 = vpack.c.b16 %v492, %v491
    %v506 = vpack.c.b16 %v494, %v493
    %v507 = vpack.c.b16 %v496, %v495
    %v508 = vpack.c.b16 %v498, %v497
    %v509 = vpack.c.b16 %v500, %v499
    %v510 = vpack.c.b16 %v502, %v501
    %v513 = vunpack.c.l.b16 %v71
    %v514 = vunpack.c.l.b16 %v72
    %v515 = vpack.c.b16 %v514, %v513
    %v518 = vsel %vm349, %v503, 0
    %v521 = vsel %vm349, %v504, 0
    %v524 = vsel %vm349, %v505, 0
    %v527 = vsel %vm349, %v506, 0
    %v530 = vsel %vm349, %v507, 0
    %v533 = vsel %vm349, %v508, 0
    %v536 = vsel %vm349, %v509, 0
    %v539 = vsel %vm349, %v510, 0
    %541 = vmatprep.subr.bf16.mxu0 0
    %542 = vmatpush1.bf16.msra.mxu0 %v515
    %543 = vmatprep.subr.bf16.mxu0 0
    %544 = vmatpush1.bf16.msra.mxu0 0
    %545 = vmatprep.subr.bf16.mxu0 0
    %546 = vmatpush1.bf16.msra.mxu0 0
    %547 = vmatprep.subr.bf16.mxu0 0
    %548 = vmatpush1.bf16.msra.mxu0 0
    %549 = vmatprep.subr.bf16.mxu0 0
    %550 = vmatpush1.bf16.msra.mxu0 0
    %551 = vmatprep.subr.bf16.mxu0 0
    %552 = vmatpush1.bf16.msra.mxu0 0
    %553 = vmatprep.subr.bf16.mxu0 0
    %554 = vmatpush1.bf16.msra.mxu0 0
    %555 = vmatprep.subr.bf16.mxu0 0
    %556 = vmatpush1.bf16.msra.mxu0 0
    %557 = vmatprep.subr.bf16.mxu0 0
    %558 = vmatpush1.bf16.msra.mxu0 0
    %559 = vmatprep.subr.bf16.mxu0 0
    %560 = vmatpush1.bf16.msra.mxu0 0
    %561 = vmatprep.subr.bf16.mxu0 0
    %562 = vmatpush1.bf16.msra.mxu0 0
    %563 = vmatprep.subr.bf16.mxu0 0
    %564 = vmatpush1.bf16.msra.mxu0 0
    %565 = vmatprep.subr.bf16.mxu0 0
    %566 = vmatpush1.bf16.msra.mxu0 0
    %567 = vmatprep.subr.bf16.mxu0 0
    %568 = vmatpush1.bf16.msra.mxu0 0
    %569 = vmatprep.subr.bf16.mxu0 0
    %570 = vmatpush1.bf16.msra.mxu0 0
    %571 = vmatprep.subr.bf16.mxu0 0
    %572 = vmatpush1.bf16.msra.mxu0 0
    %573 = vmatprep.mubr.bf16.mxu0 0
    %574 = vmatmul.mubr.bf16.gmra.mrb[0].mxu0 %v518
    %v575 = vpop.f32.mrb[0].mxu0
    %v576 = vadd.f32 %v409, %v575
    %v577 = vpop.f32.mrb[0].mxu0
    %v578 = vpop.f32.mrb[0].mxu0
    %v579 = vadd.f32 %v412, %v578
    %v580 = vpop.f32.mrb[0].mxu0
    %581 = vmatprep.mubr.bf16.mxu0 0
    %582 = vmatmul.mubr.bf16.gmra.mrb[0].mxu0 %v521
    %v583 = vpop.f32.mrb[0].mxu0
    %v584 = vadd.f32 %v417, %v583
    %v585 = vpop.f32.mrb[0].mxu0
    %v586 = vpop.f32.mrb[0].mxu0
    %v587 = vadd.f32 %v420, %v586
    %v588 = vpop.f32.mrb[0].mxu0
    %589 = vmatprep.mubr.bf16.mxu0 0
    %590 = vmatmul.mubr.bf16.gmra.mrb[0].mxu0 %v524
    %v591 = vpop.f32.mrb[0].mxu0
    %v592 = vadd.f32 %v425, %v591
    %v593 = vpop.f32.mrb[0].mxu0
    %v594 = vpop.f32.mrb[0].mxu0
    %v595 = vadd.f32 %v428, %v594
    %v596 = vpop.f32.mrb[0].mxu0
    %597 = vmatprep.mubr.bf16.mxu0 0
    %598 = vmatmul.mubr.bf16.gmra.mrb[0].mxu0 %v527
    %v599 = vpop.f32.mrb[0].mxu0
    %v600 = vadd.f32 %v433, %v599
    %v601 = vpop.f32.mrb[0].mxu0
    %v602 = vpop.f32.mrb[0].mxu0
    %v603 = vadd.f32 %v436, %v602
    %v604 = vpop.f32.mrb[0].mxu0
    %605 = vmatprep.mubr.bf16.mxu0 0
    %606 = vmatmul.mubr.bf16.gmra.mrb[0].mxu0 %v530
    %v607 = vpop.f32.mrb[0].mxu0
    %v608 = vadd.f32 %v441, %v607
    %v609 = vpop.f32.mrb[0].mxu0
    %v610 = vpop.f32.mrb[0].mxu0
    %v611 = vadd.f32 %v444, %v610
    %v612 = vpop.f32.mrb[0].mxu0
    %613 = vmatprep.mubr.bf16.mxu0 0
    %614 = vmatmul.mubr.bf16.gmra.mrb[0].mxu0 %v533
    %v615 = vpop.f32.mrb[0].mxu0
    %v616 = vadd.f32 %v449, %v615
    %v617 = vpop.f32.mrb[0].mxu0
    %v618 = vpop.f32.mrb[0].mxu0
    %v619 = vadd.f32 %v452, %v618
    %v620 = vpop.f32.mrb[0].mxu0
    %621 = vmatprep.mubr.bf16.mxu0 0
    %622 = vmatmul.mubr.bf16.gmra.mrb[0].mxu0 %v536
    %v623 = vpop.f32.mrb[0].mxu0
    %v624 = vadd.f32 %v457, %v623
    %v625 = vpop.f32.mrb[0].mxu0
    %v626 = vpop.f32.mrb[0].mxu0
    %v627 = vadd.f32 %v460, %v626
    %v628 = vpop.f32.mrb[0].mxu0
    %629 = vmatprep.mubr.bf16.mxu0 0
    %630 = vmatmul.mubr.bf16.gmra.mrb[0].mxu0 %v539
    %v631 = vpop.f32.mrb[0].mxu0
    %v632 = vadd.f32 %v465, %v631
    %v633 = vpop.f32.mrb[0].mxu0
    %v634 = vpop.f32.mrb[0].mxu0
    %v635 = vadd.f32 %v468, %v634
    %v636 = vpop.f32.mrb[0].mxu0
    %637 = vdwg.mxu0
    %s638 = scalar_lea.vmem [#allocation2], 8
    %v639 = vld [vmem:[%s638] sm:$0xf]
    %v640 = vld [vmem:[%s638 + $0x8] sm:$0xf]
    %v641 = vld [vmem:[%s638 + $0x10] sm:$0xf]
    %v642 = vld [vmem:[%s638 + $0x18] sm:$0xf]
    %v643 = vld [vmem:[%s638 + $0x20] sm:$0xf]
    %v644 = vld [vmem:[%s638 + $0x28] sm:$0xf]
    %v645 = vld [vmem:[%s638 + $0x30] sm:$0xf]
    %v646 = vld [vmem:[%s638 + $0x38] sm:$0xf]
    %v647 = vld [vmem:[%s638 + $0x48] sm:$0xf]
    %v648 = vld [vmem:[%s638 + $0x50] sm:$0xf]
    %v649 = vld [vmem:[%s638 + $0x58] sm:$0xf]
    %v650 = vld [vmem:[%s638 + $0x60] sm:$0xf]
    %v651 = vld [vmem:[%s638 + $0x68] sm:$0xf]
    %v652 = vld [vmem:[%s638 + $0x70] sm:$0xf]
    %v653 = vld [vmem:[%s638 + $0x78] sm:$0xf]
    %v654 = vld [vmem:[%s638 + $0x80] sm:$0xf]
    %s655 = scalar_lea.vmem [#allocation5], 16
    %v656 = vld [vmem:[%s655] sm:$0xf]
    %v657 = vld [vmem:[%s655 + $0x4] sm:$0xf]
    %v674 = vunpack.c.l.b16 %v639
    %v675 = vunpack.c.l.b16 %v640
    %v676 = vunpack.c.l.b16 %v641
    %v677 = vunpack.c.l.b16 %v642
    %v678 = vunpack.c.l.b16 %v643
    %v679 = vunpack.c.l.b16 %v644
    %v680 = vunpack.c.l.b16 %v645
    %v681 = vunpack.c.l.b16 %v646
    %v682 = vunpack.c.l.b16 %v647
    %v683 = vunpack.c.l.b16 %v648
    %v684 = vunpack.c.l.b16 %v649
    %v685 = vunpack.c.l.b16 %v650
    %v686 = vunpack.c.l.b16 %v651
    %v687 = vunpack.c.l.b16 %v652
    %v688 = vunpack.c.l.b16 %v653
    %v689 = vunpack.c.l.b16 %v654
    %v690 = vpack.c.b16 %v675, %v674
    %v691 = vpack.c.b16 %v677, %v676
    %v692 = vpack.c.b16 %v679, %v678
    %v693 = vpack.c.b16 %v681, %v680
    %v694 = vpack.c.b16 %v683, %v682
    %v695 = vpack.c.b16 %v685, %v684
    %v696 = vpack.c.b16 %v687, %v686
    %v697 = vpack.c.b16 %v689, %v688
    %v700 = vunpack.c.l.b16 %v656
    %v701 = vunpack.c.l.b16 %v657
    %v702 = vpack.c.b16 %v701, %v700
    %v705 = vsel %vm349, %v690, 0
    %v708 = vsel %vm349, %v691, 0
    %v711 = vsel %vm349, %v692, 0
    %v714 = vsel %vm349, %v693, 0
    %v717 = vsel %vm349, %v694, 0
    %v720 = vsel %vm349, %v695, 0
    %v723 = vsel %vm349, %v696, 0
    %v726 = vsel %vm349, %v697, 0
    %728 = vmatprep.subr.bf16.mxu0 0
    %729 = vmatpush1.bf16.msra.mxu0 %v702
    %730 = vmatprep.subr.bf16.mxu0 0
    %731 = vmatpush1.bf16.msra.mxu0 0
    %732 = vmatprep.subr.bf16.mxu0 0
    %733 = vmatpush1.bf16.msra.mxu0 0
    %734 = vmatprep.subr.bf16.mxu0 0
    %735 = vmatpush1.bf16.msra.mxu0 0
    %736 = vmatprep.subr.bf16.mxu0 0
    %737 = vmatpush1.bf16.msra.mxu0 0
    %738 = vmatprep.subr.bf16.mxu0 0
    %739 = vmatpush1.bf16.msra.mxu0 0
    %740 = vmatprep.subr.bf16.mxu0 0
    %741 = vmatpush1.bf16.msra.mxu0 0
    %742 = vmatprep.subr.bf16.mxu0 0
    %743 = vmatpush1.bf16.msra.mxu0 0
    %744 = vmatprep.subr.bf16.mxu0 0
    %745 = vmatpush1.bf16.msra.mxu0 0
    %746 = vmatprep.subr.bf16.mxu0 0
    %747 = vmatpush1.bf16.msra.mxu0 0
    %748 = vmatprep.subr.bf16.mxu0 0
    %749 = vmatpush1.bf16.msra.mxu0 0
    %750 = vmatprep.subr.bf16.mxu0 0
    %751 = vmatpush1.bf16.msra.mxu0 0
    %752 = vmatprep.subr.bf16.mxu0 0
    %753 = vmatpush1.bf16.msra.mxu0 0
    %754 = vmatprep.subr.bf16.mxu0 0
    %755 = vmatpush1.bf16.msra.mxu0 0
    %756 = vmatprep.subr.bf16.mxu0 0
    %757 = vmatpush1.bf16.msra.mxu0 0
    %758 = vmatprep.subr.bf16.mxu0 0
    %759 = vmatpush1.bf16.msra.mxu0 0
    %760 = vmatprep.mubr.bf16.mxu0 0
    %761 = vmatmul.mubr.bf16.gmra.mrb[0].mxu0 %v705
    %v762 = vpop.f32.mrb[0].mxu0
    %v763 = vadd.f32 0.0, %v762
    %v764 = vpop.f32.mrb[0].mxu0
    %v765 = vpop.f32.mrb[0].mxu0
    %v766 = vadd.f32 0.0, %v765
    %v767 = vpop.f32.mrb[0].mxu0
    %768 = vmatprep.mubr.bf16.mxu0 0
    %769 = vmatmul.mubr.bf16.gmra.mrb[0].mxu0 %v708
    %v770 = vpop.f32.mrb[0].mxu0
    %v771 = vadd.f32 0.0, %v770
    %v772 = vpop.f32.mrb[0].mxu0
    %v773 = vpop.f32.mrb[0].mxu0
    %v774 = vadd.f32 0.0, %v773
    %v775 = vpop.f32.mrb[0].mxu0
    %776 = vmatprep.mubr.bf16.mxu0 0
    %777 = vmatmul.mubr.bf16.gmra.mrb[0].mxu0 %v711
    %v778 = vpop.f32.mrb[0].mxu0
    %v779 = vadd.f32 0.0, %v778
    %v780 = vpop.f32.mrb[0].mxu0
    %v781 = vpop.f32.mrb[0].mxu0
    %v782 = vadd.f32 0.0, %v781
    %v783 = vpop.f32.mrb[0].mxu0
    %784 = vmatprep.mubr.bf16.mxu0 0
    %785 = vmatmul.mubr.bf16.gmra.mrb[0].mxu0 %v714
    %v786 = vpop.f32.mrb[0].mxu0
    %v787 = vadd.f32 0.0, %v786
    %v788 = vpop.f32.mrb[0].mxu0
    %v789 = vpop.f32.mrb[0].mxu0
    %v790 = vadd.f32 0.0, %v789
    %v791 = vpop.f32.mrb[0].mxu0
    %792 = vmatprep.mubr.bf16.mxu0 0
    %793 = vmatmul.mubr.bf16.gmra.mrb[0].mxu0 %v717
    %v794 = vpop.f32.mrb[0].mxu0
    %v795 = vadd.f32 0.0, %v794
    %v796 = vpop.f32.mrb[0].mxu0
    %v797 = vpop.f32.mrb[0].mxu0
    %v798 = vadd.f32 0.0, %v797
    %v799 = vpop.f32.mrb[0].mxu0
    %800 = vmatprep.mubr.bf16.mxu0 0
    %801 = vmatmul.mubr.bf16.gmra.mrb[0].mxu0 %v720
    %v802 = vpop.f32.mrb[0].mxu0
    %v803 = vadd.f32 0.0, %v802
    %v804 = vpop.f32.mrb[0].mxu0
    %v805 = vpop.f32.mrb[0].mxu0
    %v806 = vadd.f32 0.0, %v805
    %v807 = vpop.f32.mrb[0].mxu0
    %808 = vmatprep.mubr.bf16.mxu0 0
    %809 = vmatmul.mubr.bf16.gmra.mrb[0].mxu0 %v723
    %v810 = vpop.f32.mrb[0].mxu0
    %v811 = vadd.f32 0.0, %v810
    %v812 = vpop.f32.mrb[0].mxu0
    %v813 = vpop.f32.mrb[0].mxu0
    %v814 = vadd.f32 0.0, %v813
    %v815 = vpop.f32.mrb[0].mxu0
    %816 = vmatprep.mubr.bf16.mxu0 0
    %817 = vmatmul.mubr.bf16.gmra.mrb[0].mxu0 %v726
    %v818 = vpop.f32.mrb[0].mxu0
    %v819 = vadd.f32 0.0, %v818
    %v820 = vpop.f32.mrb[0].mxu0
    %v821 = vpop.f32.mrb[0].mxu0
    %v822 = vadd.f32 0.0, %v821
    %v823 = vpop.f32.mrb[0].mxu0
    %824 = vdwg.mxu0
    %v825 = vadd.f32 %v576, %v763
    %v826 = vadd.f32 %v579, %v766
    %v827 = vadd.f32 %v584, %v771
    %v828 = vadd.f32 %v587, %v774
    %v829 = vadd.f32 %v592, %v779
    %v830 = vadd.f32 %v595, %v782
    %v831 = vadd.f32 %v600, %v787
    %v832 = vadd.f32 %v603, %v790
    %v833 = vadd.f32 %v608, %v795
    %v834 = vadd.f32 %v611, %v798
    %v835 = vadd.f32 %v616, %v803
    %v836 = vadd.f32 %v619, %v806
    %v837 = vadd.f32 %v624, %v811
    %v838 = vadd.f32 %v627, %v814
    %v839 = vadd.f32 %v632, %v819
    %v840 = vadd.f32 %v635, %v822
    %v841 = vld [vmem:[%s638] sm:$0xf]
    %v842 = vld [vmem:[%s638 + $0x4] sm:$0x1]
    %v843 = vld [vmem:[%s638 + $0x8] sm:$0xf]
    %v844 = vld [vmem:[%s638 + $0xc] sm:$0x1]
    %v845 = vld [vmem:[%s638 + $0x10] sm:$0xf]
    %v846 = vld [vmem:[%s638 + $0x14] sm:$0x1]
    %v847 = vld [vmem:[%s638 + $0x18] sm:$0xf]
    %v848 = vld [vmem:[%s638 + $0x1c] sm:$0x1]
    %v849 = vld [vmem:[%s638 + $0x20] sm:$0xf]
    %v850 = vld [vmem:[%s638 + $0x24] sm:$0x1]
    %v851 = vld [vmem:[%s638 + $0x28] sm:$0xf]
    %v852 = vld [vmem:[%s638 + $0x2c] sm:$0x1]
    %v853 = vld [vmem:[%s638 + $0x30] sm:$0xf]
    %v854 = vld [vmem:[%s638 + $0x34] sm:$0x1]
    %v855 = vld [vmem:[%s638 + $0x38] sm:$0xf]
    %v856 = vld [vmem:[%s638 + $0x3c] sm:$0x1]
    %v857 = vld [vmem:[%s638 + $0x48] sm:$0xf]
    %v858 = vld [vmem:[%s638 + $0x4c] sm:$0x1]
    %v859 = vld [vmem:[%s638 + $0x50] sm:$0xf]
    %v860 = vld [vmem:[%s638 + $0x54] sm:$0x1]
    %v861 = vld [vmem:[%s638 + $0x58] sm:$0xf]
    %v862 = vld [vmem:[%s638 + $0x5c] sm:$0x1]
    %v863 = vld [vmem:[%s638 + $0x60] sm:$0xf]
    %v864 = vld [vmem:[%s638 + $0x64] sm:$0x1]
    %v865 = vld [vmem:[%s638 + $0x68] sm:$0xf]
    %v866 = vld [vmem:[%s638 + $0x6c] sm:$0x1]
    %v867 = vld [vmem:[%s638 + $0x70] sm:$0xf]
    %v868 = vld [vmem:[%s638 + $0x74] sm:$0x1]
    %v869 = vld [vmem:[%s638 + $0x78] sm:$0xf]
    %v870 = vld [vmem:[%s638 + $0x7c] sm:$0x1]
    %v871 = vld [vmem:[%s638 + $0x80] sm:$0xf]
    %v872 = vld [vmem:[%s638 + $0x84] sm:$0x1]
    %v874 = vshrl.u32 %v841, 16
    %v876 = vrot.slane %v874, 4
    %v877 = vshll.u32 %v841, 16
    %v879 = vrot.slane %v877, 5
    %v880 = vor.u32 %v876, %v879
    %v881 = vrot.slane %v880, 4
    %v883 = vshll.u32 %v842, 16
    %v885 = vrot.slane %v883, 5
    %v886 = vsel %vm91, %v881, %v885
    %v888 = vshrl.u32 %v843, 16
    %v890 = vrot.slane %v888, 4
    %v891 = vshll.u32 %v843, 16
    %v893 = vrot.slane %v891, 5
    %v894 = vor.u32 %v890, %v893
    %v895 = vrot.slane %v894, 4
    %v897 = vshll.u32 %v844, 16
    %v899 = vrot.slane %v897, 5
    %v900 = vsel %vm91, %v895, %v899
    %v902 = vshrl.u32 %v845, 16
    %v904 = vrot.slane %v902, 4
    %v905 = vshll.u32 %v845, 16
    %v907 = vrot.slane %v905, 5
    %v908 = vor.u32 %v904, %v907
    %v909 = vrot.slane %v908, 4
    %v911 = vshll.u32 %v846, 16
    %v913 = vrot.slane %v911, 5
    %v914 = vsel %vm91, %v909, %v913
    %v916 = vshrl.u32 %v847, 16
    %v918 = vrot.slane %v916, 4
    %v919 = vshll.u32 %v847, 16
    %v921 = vrot.slane %v919, 5
    %v922 = vor.u32 %v918, %v921
    %v923 = vrot.slane %v922, 4
    %v925 = vshll.u32 %v848, 16
    %v927 = vrot.slane %v925, 5
    %v928 = vsel %vm91, %v923, %v927
    %v930 = vshrl.u32 %v849, 16
    %v932 = vrot.slane %v930, 4
    %v933 = vshll.u32 %v849, 16
    %v935 = vrot.slane %v933, 5
    %v936 = vor.u32 %v932, %v935
    %v937 = vrot.slane %v936, 4
    %v939 = vshll.u32 %v850, 16
    %v941 = vrot.slane %v939, 5
    %v942 = vsel %vm91, %v937, %v941
    %v944 = vshrl.u32 %v851, 16
    %v946 = vrot.slane %v944, 4
    %v947 = vshll.u32 %v851, 16
    %v949 = vrot.slane %v947, 5
    %v950 = vor.u32 %v946, %v949
    %v951 = vrot.slane %v950, 4
    %v953 = vshll.u32 %v852, 16
    %v955 = vrot.slane %v953, 5
    %v956 = vsel %vm91, %v951, %v955
    %v958 = vshrl.u32 %v853, 16
    %v960 = vrot.slane %v958, 4
    %v961 = vshll.u32 %v853, 16
    %v963 = vrot.slane %v961, 5
    %v964 = vor.u32 %v960, %v963
    %v965 = vrot.slane %v964, 4
    %v967 = vshll.u32 %v854, 16
    %v969 = vrot.slane %v967, 5
    %v970 = vsel %vm91, %v965, %v969
    %v972 = vshrl.u32 %v855, 16
    %v974 = vrot.slane %v972, 4
    %v975 = vshll.u32 %v855, 16
    %v977 = vrot.slane %v975, 5
    %v978 = vor.u32 %v974, %v977
    %v979 = vrot.slane %v978, 4
    %v981 = vshll.u32 %v856, 16
    %v983 = vrot.slane %v981, 5
    %v984 = vsel %vm91, %v979, %v983
    %v986 = vshrl.u32 %v857, 16
    %v988 = vrot.slane %v986, 4
    %v989 = vshll.u32 %v857, 16
    %v991 = vrot.slane %v989, 5
    %v992 = vor.u32 %v988, %v991
    %v993 = vrot.slane %v992, 4
    %v995 = vshll.u32 %v858, 16
    %v997 = vrot.slane %v995, 5
    %v998 = vsel %vm91, %v993, %v997
    %v1000 = vshrl.u32 %v859, 16
    %v1002 = vrot.slane %v1000, 4
    %v1003 = vshll.u32 %v859, 16
    %v1005 = vrot.slane %v1003, 5
    %v1006 = vor.u32 %v1002, %v1005
    %v1007 = vrot.slane %v1006, 4
    %v1009 = vshll.u32 %v860, 16
    %v1011 = vrot.slane %v1009, 5
    %v1012 = vsel %vm91, %v1007, %v1011
    %v1014 = vshrl.u32 %v861, 16
    %v1016 = vrot.slane %v1014, 4
    %v1017 = vshll.u32 %v861, 16
    %v1019 = vrot.slane %v1017, 5
    %v1020 = vor.u32 %v1016, %v1019
    %v1021 = vrot.slane %v1020, 4
    %v1023 = vshll.u32 %v862, 16
    %v1025 = vrot.slane %v1023, 5
    %v1026 = vsel %vm91, %v1021, %v1025
    %v1028 = vshrl.u32 %v863, 16
    %v1030 = vrot.slane %v1028, 4
    %v1031 = vshll.u32 %v863, 16
    %v1033 = vrot.slane %v1031, 5
    %v1034 = vor.u32 %v1030, %v1033
    %v1035 = vrot.slane %v1034, 4
    %v1037 = vshll.u32 %v864, 16
    %v1039 = vrot.slane %v1037, 5
    %v1040 = vsel %vm91, %v1035, %v1039
    %v1042 = vshrl.u32 %v865, 16
    %v1044 = vrot.slane %v1042, 4
    %v1045 = vshll.u32 %v865, 16
    %v1047 = vrot.slane %v1045, 5
    %v1048 = vor.u32 %v1044, %v1047
    %v1049 = vrot.slane %v1048, 4
    %v1051 = vshll.u32 %v866, 16
    %v1053 = vrot.slane %v1051, 5
    %v1054 = vsel %vm91, %v1049, %v1053
    %v1056 = vshrl.u32 %v867, 16
    %v1058 = vrot.slane %v1056, 4
    %v1059 = vshll.u32 %v867, 16
    %v1061 = vrot.slane %v1059, 5
    %v1062 = vor.u32 %v1058, %v1061
    %v1063 = vrot.slane %v1062, 4
    %v1065 = vshll.u32 %v868, 16
    %v1067 = vrot.slane %v1065, 5
    %v1068 = vsel %vm91, %v1063, %v1067
    %v1070 = vshrl.u32 %v869, 16
    %v1072 = vrot.slane %v1070, 4
    %v1073 = vshll.u32 %v869, 16
    %v1075 = vrot.slane %v1073, 5
    %v1076 = vor.u32 %v1072, %v1075
    %v1077 = vrot.slane %v1076, 4
    %v1079 = vshll.u32 %v870, 16
    %v1081 = vrot.slane %v1079, 5
    %v1082 = vsel %vm91, %v1077, %v1081
    %v1084 = vshrl.u32 %v871, 16
    %v1086 = vrot.slane %v1084, 4
    %v1087 = vshll.u32 %v871, 16
    %v1089 = vrot.slane %v1087, 5
    %v1090 = vor.u32 %v1086, %v1089
    %v1091 = vrot.slane %v1090, 4
    %v1093 = vshll.u32 %v872, 16
    %v1095 = vrot.slane %v1093, 5
    %v1096 = vsel %vm91, %v1091, %v1095
    %s1097 = scalar_lea.vmem [#allocation5], 24
    %v1098 = vld [vmem:[%s1097] sm:$0xf]
    %v1099 = vld [vmem:[%s1097 + $0x4] sm:$0xf]
    %v1100 = vunpack.c.l.b16 %v886
    %v1101 = vunpack.c.l.b16 %v900
    %v1102 = vunpack.c.l.b16 %v914
    %v1103 = vunpack.c.l.b16 %v928
    %v1104 = vunpack.c.l.b16 %v942
    %v1105 = vunpack.c.l.b16 %v956
    %v1106 = vunpack.c.l.b16 %v970
    %v1107 = vunpack.c.l.b16 %v984
    %v1108 = vunpack.c.l.b16 %v998
    %v1109 = vunpack.c.l.b16 %v1012
    %v1110 = vunpack.c.l.b16 %v1026
    %v1111 = vunpack.c.l.b16 %v1040
    %v1112 = vunpack.c.l.b16 %v1054
    %v1113 = vunpack.c.l.b16 %v1068
    %v1114 = vunpack.c.l.b16 %v1082
    %v1115 = vunpack.c.l.b16 %v1096
    %v1116 = vpack.c.b16 %v1101, %v1100
    %v1117 = vpack.c.b16 %v1103, %v1102
    %v1118 = vpack.c.b16 %v1105, %v1104
    %v1119 = vpack.c.b16 %v1107, %v1106
    %v1120 = vpack.c.b16 %v1109, %v1108
    %v1121 = vpack.c.b16 %v1111, %v1110
    %v1122 = vpack.c.b16 %v1113, %v1112
    %v1123 = vpack.c.b16 %v1115, %v1114
    %v1126 = vunpack.c.l.b16 %v1098
    %v1127 = vunpack.c.l.b16 %v1099
    %v1128 = vpack.c.b16 %v1127, %v1126
    %v1131 = vsel %vm349, %v1116, 0
    %v1134 = vsel %vm349, %v1117, 0
    %v1137 = vsel %vm349, %v1118, 0
    %v1140 = vsel %vm349, %v1119, 0
    %v1143 = vsel %vm349, %v1120, 0
    %v1146 = vsel %vm349, %v1121, 0
    %v1149 = vsel %vm349, %v1122, 0
    %v1152 = vsel %vm349, %v1123, 0
    %1154 = vmatprep.subr.bf16.mxu0 0
    %1155 = vmatpush1.bf16.msra.mxu0 %v1128
    %1156 = vmatprep.subr.bf16.mxu0 0
    %1157 = vmatpush1.bf16.msra.mxu0 0
    %1158 = vmatprep.subr.bf16.mxu0 0
    %1159 = vmatpush1.bf16.msra.mxu0 0
    %1160 = vmatprep.subr.bf16.mxu0 0
    %1161 = vmatpush1.bf16.msra.mxu0 0
    %1162 = vmatprep.subr.bf16.mxu0 0
    %1163 = vmatpush1.bf16.msra.mxu0 0
    %1164 = vmatprep.subr.bf16.mxu0 0
    %1165 = vmatpush1.bf16.msra.mxu0 0
    %1166 = vmatprep.subr.bf16.mxu0 0
    %1167 = vmatpush1.bf16.msra.mxu0 0
    %1168 = vmatprep.subr.bf16.mxu0 0
    %1169 = vmatpush1.bf16.msra.mxu0 0
    %1170 = vmatprep.subr.bf16.mxu0 0
    %1171 = vmatpush1.bf16.msra.mxu0 0
    %1172 = vmatprep.subr.bf16.mxu0 0
    %1173 = vmatpush1.bf16.msra.mxu0 0
    %1174 = vmatprep.subr.bf16.mxu0 0
    %1175 = vmatpush1.bf16.msra.mxu0 0
    %1176 = vmatprep.subr.bf16.mxu0 0
    %1177 = vmatpush1.bf16.msra.mxu0 0
    %1178 = vmatprep.subr.bf16.mxu0 0
    %1179 = vmatpush1.bf16.msra.mxu0 0
    %1180 = vmatprep.subr.bf16.mxu0 0
    %1181 = vmatpush1.bf16.msra.mxu0 0
    %1182 = vmatprep.subr.bf16.mxu0 0
    %1183 = vmatpush1.bf16.msra.mxu0 0
    %1184 = vmatprep.subr.bf16.mxu0 0
    %1185 = vmatpush1.bf16.msra.mxu0 0
    %1186 = vmatprep.mubr.bf16.mxu0 0
    %1187 = vmatmul.mubr.bf16.gmra.mrb[0].mxu0 %v1131
    %v1188 = vpop.f32.mrb[0].mxu0
    %v1189 = vadd.f32 0.0, %v1188
    %v1190 = vpop.f32.mrb[0].mxu0
    %v1191 = vpop.f32.mrb[0].mxu0
    %v1192 = vadd.f32 0.0, %v1191
    %v1193 = vpop.f32.mrb[0].mxu0
    %1194 = vmatprep.mubr.bf16.mxu0 0
    %1195 = vmatmul.mubr.bf16.gmra.mrb[0].mxu0 %v1134
    %v1196 = vpop.f32.mrb[0].mxu0
    %v1197 = vadd.f32 0.0, %v1196
    %v1198 = vpop.f32.mrb[0].mxu0
    %v1199 = vpop.f32.mrb[0].mxu0
    %v1200 = vadd.f32 0.0, %v1199
    %v1201 = vpop.f32.mrb[0].mxu0
    %1202 = vmatprep.mubr.bf16.mxu0 0
    %1203 = vmatmul.mubr.bf16.gmra.mrb[0].mxu0 %v1137
    %v1204 = vpop.f32.mrb[0].mxu0
    %v1205 = vadd.f32 0.0, %v1204
    %v1206 = vpop.f32.mrb[0].mxu0
    %v1207 = vpop.f32.mrb[0].mxu0
    %v1208 = vadd.f32 0.0, %v1207
    %v1209 = vpop.f32.mrb[0].mxu0
    %1210 = vmatprep.mubr.bf16.mxu0 0
    %1211 = vmatmul.mubr.bf16.gmra.mrb[0].mxu0 %v1140
    %v1212 = vpop.f32.mrb[0].mxu0
    %v1213 = vadd.f32 0.0, %v1212
    %v1214 = vpop.f32.mrb[0].mxu0
    %v1215 = vpop.f32.mrb[0].mxu0
    %v1216 = vadd.f32 0.0, %v1215
    %v1217 = vpop.f32.mrb[0].mxu0
    %1218 = vmatprep.mubr.bf16.mxu0 0
    %1219 = vmatmul.mubr.bf16.gmra.mrb[0].mxu0 %v1143
    %v1220 = vpop.f32.mrb[0].mxu0
    %v1221 = vadd.f32 0.0, %v1220
    %v1222 = vpop.f32.mrb[0].mxu0
    %v1223 = vpop.f32.mrb[0].mxu0
    %v1224 = vadd.f32 0.0, %v1223
    %v1225 = vpop.f32.mrb[0].mxu0
    %1226 = vmatprep.mubr.bf16.mxu0 0
    %1227 = vmatmul.mubr.bf16.gmra.mrb[0].mxu0 %v1146
    %v1228 = vpop.f32.mrb[0].mxu0
    %v1229 = vadd.f32 0.0, %v1228
    %v1230 = vpop.f32.mrb[0].mxu0
    %v1231 = vpop.f32.mrb[0].mxu0
    %v1232 = vadd.f32 0.0, %v1231
    %v1233 = vpop.f32.mrb[0].mxu0
    %1234 = vmatprep.mubr.bf16.mxu0 0
    %1235 = vmatmul.mubr.bf16.gmra.mrb[0].mxu0 %v1149
    %v1236 = vpop.f32.mrb[0].mxu0
    %v1237 = vadd.f32 0.0, %v1236
    %v1238 = vpop.f32.mrb[0].mxu0
    %v1239 = vpop.f32.mrb[0].mxu0
    %v1240 = vadd.f32 0.0, %v1239
    %v1241 = vpop.f32.mrb[0].mxu0
    %1242 = vmatprep.mubr.bf16.mxu0 0
    %1243 = vmatmul.mubr.bf16.gmra.mrb[0].mxu0 %v1152
    %v1244 = vpop.f32.mrb[0].mxu0
    %v1245 = vadd.f32 0.0, %v1244
    %v1246 = vpop.f32.mrb[0].mxu0
    %v1247 = vpop.f32.mrb[0].mxu0
    %v1248 = vadd.f32 0.0, %v1247
    %v1249 = vpop.f32.mrb[0].mxu0
    %1250 = vdwg.mxu0
    %v1251 = vadd.f32 %v825, %v1189
    %v1252 = vadd.f32 %v826, %v1192
    %v1253 = vadd.f32 %v827, %v1197
    %v1254 = vadd.f32 %v828, %v1200
    %v1255 = vadd.f32 %v829, %v1205
    %v1256 = vadd.f32 %v830, %v1208
    %v1257 = vadd.f32 %v831, %v1213
    %v1258 = vadd.f32 %v832, %v1216
    %v1259 = vadd.f32 %v833, %v1221
    %v1260 = vadd.f32 %v834, %v1224
    %v1261 = vadd.f32 %v835, %v1229
    %v1262 = vadd.f32 %v836, %v1232
    %v1263 = vadd.f32 %v837, %v1237
    %v1264 = vadd.f32 %v838, %v1240
    %v1265 = vadd.f32 %v839, %v1245
    %v1266 = vadd.f32 %v840, %v1248
    %v1267 = vld [vmem:[#allocation7] sm:$0x1]
    %v1269 = vlaneseq
    %v1270 = vshrl.u32 %v1269, 7
    %v1271 = vsub.s32 0, %v1270
    %v1272 = vrot.slane %v1267, %v1271
    %v1274 = vadd.f32 %v1251, %v1272
    %v1275 = vadd.f32 %v1252, %v1272
    %v1276 = vadd.f32 %v1253, %v1272
    %v1277 = vadd.f32 %v1254, %v1272
    %v1278 = vadd.f32 %v1255, %v1272
    %v1279 = vadd.f32 %v1256, %v1272
    %v1280 = vadd.f32 %v1257, %v1272
    %v1281 = vadd.f32 %v1258, %v1272
    %v1282 = vadd.f32 %v1259, %v1272
    %v1283 = vadd.f32 %v1260, %v1272
    %v1284 = vadd.f32 %v1261, %v1272
    %v1285 = vadd.f32 %v1262, %v1272
    %v1286 = vadd.f32 %v1263, %v1272
    %v1287 = vadd.f32 %v1264, %v1272
    %v1288 = vadd.f32 %v1265, %v1272
    %v1289 = vadd.f32 %v1266, %v1272
    %vm1290 = vcmp.ge.f32.partialorder %v1274, 0.0
    %vm1291 = vcmp.ge.f32.partialorder %v1275, 0.0
    %vm1292 = vcmp.ge.f32.partialorder %v1276, 0.0
    %vm1293 = vcmp.ge.f32.partialorder %v1277, 0.0
    %vm1294 = vcmp.ge.f32.partialorder %v1278, 0.0
    %vm1295 = vcmp.ge.f32.partialorder %v1279, 0.0
    %vm1296 = vcmp.ge.f32.partialorder %v1280, 0.0
    %vm1297 = vcmp.ge.f32.partialorder %v1281, 0.0
    %vm1298 = vcmp.ge.f32.partialorder %v1282, 0.0
    %vm1299 = vcmp.ge.f32.partialorder %v1283, 0.0
    %vm1300 = vcmp.ge.f32.partialorder %v1284, 0.0
    %vm1301 = vcmp.ge.f32.partialorder %v1285, 0.0
    %vm1302 = vcmp.ge.f32.partialorder %v1286, 0.0
    %vm1303 = vcmp.ge.f32.partialorder %v1287, 0.0
    %vm1304 = vcmp.ge.f32.partialorder %v1288, 0.0
    %vm1305 = vcmp.ge.f32.partialorder %v1289, 0.0
    %v1306 = vmul.f32 %v1274, 0.01
    %v1307 = vmul.f32 %v1275, 0.01
    %v1308 = vmul.f32 %v1276, 0.01
    %v1309 = vmul.f32 %v1277, 0.01
    %v1310 = vmul.f32 %v1278, 0.01
    %v1311 = vmul.f32 %v1279, 0.01
    %v1312 = vmul.f32 %v1280, 0.01
    %v1313 = vmul.f32 %v1281, 0.01
    %v1314 = vmul.f32 %v1282, 0.01
    %v1315 = vmul.f32 %v1283, 0.01
    %v1316 = vmul.f32 %v1284, 0.01
    %v1317 = vmul.f32 %v1285, 0.01
    %v1318 = vmul.f32 %v1286, 0.01
    %v1319 = vmul.f32 %v1287, 0.01
    %v1320 = vmul.f32 %v1288, 0.01
    %v1321 = vmul.f32 %v1289, 0.01
    %v1322 = vsel %vm1290, %v1274, %v1306
    %v1323 = vsel %vm1291, %v1275, %v1307
    %v1324 = vsel %vm1292, %v1276, %v1308
    %v1325 = vsel %vm1293, %v1277, %v1309
    %v1326 = vsel %vm1294, %v1278, %v1310
    %v1327 = vsel %vm1295, %v1279, %v1311
    %v1328 = vsel %vm1296, %v1280, %v1312
    %v1329 = vsel %vm1297, %v1281, %v1313
    %v1330 = vsel %vm1298, %v1282, %v1314
    %v1331 = vsel %vm1299, %v1283, %v1315
    %v1332 = vsel %vm1300, %v1284, %v1316
    %v1333 = vsel %vm1301, %v1285, %v1317
    %v1334 = vsel %vm1302, %v1286, %v1318
    %v1335 = vsel %vm1303, %v1287, %v1319
    %v1336 = vsel %vm1304, %v1288, %v1320
    %v1337 = vsel %vm1305, %v1289, %v1321
    %v1338 = vpack.c.bf16 %v1323, %v1322
    %v1339 = vpack.c.bf16 %v1325, %v1324
    %v1340 = vpack.c.bf16 %v1327, %v1326
    %v1341 = vpack.c.bf16 %v1329, %v1328
    %v1342 = vpack.c.bf16 %v1331, %v1330
    %v1343 = vpack.c.bf16 %v1333, %v1332
    %v1344 = vpack.c.bf16 %v1335, %v1334
    %v1345 = vpack.c.bf16 %v1337, %v1336
    %v1354 = vunpack.c.l.b16 %v1338
    %v1355 = vunpack.c.h.b16 %v1338
    %v1356 = vunpack.c.l.b16 %v1339
    %v1357 = vunpack.c.h.b16 %v1339
    %v1358 = vunpack.c.l.b16 %v1340
    %v1359 = vunpack.c.h.b16 %v1340
    %v1360 = vunpack.c.l.b16 %v1341
    %v1361 = vunpack.c.h.b16 %v1341
    %v1362 = vunpack.c.l.b16 %v1342
    %v1363 = vunpack.c.h.b16 %v1342
    %v1364 = vunpack.c.l.b16 %v1343
    %v1365 = vunpack.c.h.b16 %v1343
    %v1366 = vunpack.c.l.b16 %v1344
    %v1367 = vunpack.c.h.b16 %v1344
    %v1368 = vunpack.c.l.b16 %v1345
    %v1369 = vunpack.c.h.b16 %v1345
    %v1370 = vpack.c.b16 %v1354, %v1354
    %v1371 = vpack.c.b16 %v1355, %v1355
    %v1372 = vpack.c.b16 %v1356, %v1356
    %v1373 = vpack.c.b16 %v1357, %v1357
    %v1374 = vpack.c.b16 %v1358, %v1358
    %v1375 = vpack.c.b16 %v1359, %v1359
    %v1376 = vpack.c.b16 %v1360, %v1360
    %v1377 = vpack.c.b16 %v1361, %v1361
    %v1378 = vpack.c.b16 %v1362, %v1362
    %v1379 = vpack.c.b16 %v1363, %v1363
    %v1380 = vpack.c.b16 %v1364, %v1364
    %v1381 = vpack.c.b16 %v1365, %v1365
    %v1382 = vpack.c.b16 %v1366, %v1366
    %v1383 = vpack.c.b16 %v1367, %v1367
    %v1384 = vpack.c.b16 %v1368, %v1368
    %v1385 = vpack.c.b16 %v1369, %v1369
    %vm1402 = vcmask 257024
    %1403 = vst.msk [vmem:[#allocation8] sm:$0xf] %vm1402, %v1370
    %1404 = vst.msk [vmem:[#allocation8 + $0x4] sm:$0xf] %vm1402, %v1371
    %1405 = vst.msk [vmem:[#allocation8 + $0x8] sm:$0xf] %vm1402, %v1372
    %1406 = vst.msk [vmem:[#allocation8 + $0xc] sm:$0xf] %vm1402, %v1373
    %1407 = vst.msk [vmem:[#allocation8 + $0x10] sm:$0xf] %vm1402, %v1374
    %1408 = vst.msk [vmem:[#allocation8 + $0x14] sm:$0xf] %vm1402, %v1375
    %1409 = vst.msk [vmem:[#allocation8 + $0x18] sm:$0xf] %vm1402, %v1376
    %1410 = vst.msk [vmem:[#allocation8 + $0x1c] sm:$0xf] %vm1402, %v1377
    %1411 = vst.msk [vmem:[#allocation8 + $0x20] sm:$0xf] %vm1402, %v1378
    %1412 = vst.msk [vmem:[#allocation8 + $0x24] sm:$0xf] %vm1402, %v1379
    %1413 = vst.msk [vmem:[#allocation8 + $0x28] sm:$0xf] %vm1402, %v1380
    %1414 = vst.msk [vmem:[#allocation8 + $0x2c] sm:$0xf] %vm1402, %v1381
    %1415 = vst.msk [vmem:[#allocation8 + $0x30] sm:$0xf] %vm1402, %v1382
    %1416 = vst.msk [vmem:[#allocation8 + $0x34] sm:$0xf] %vm1402, %v1383
    %1417 = vst.msk [vmem:[#allocation8 + $0x38] sm:$0xf] %vm1402, %v1384
    %1418 = vst.msk [vmem:[#allocation8 + $0x3c] sm:$0xf] %vm1402, %v1385
    // Predicated region
    $region26: #{dcgan_discriminator_forward.4} parent=1 // pred_check
      _
    $region27: #{dcgan_discriminator_forward.4} parent=1 // pred_check_branch
      %1420 = sbr.rel (0) target = $region29
    $region28: #{dcgan_discriminator_forward.4} parent=1 // pred_region
      %s1422 = ssub.s32 1024, 1024
      %1423 = vsyncadd [#allocation4], %s1422
      %s1424 = sshll.u32 [#allocation8], 4
      %s1425 = int_to_ptr.vmem [resolvable:$true] %s1424
      %1430 = dma.vmem_to_hbm [thread:$0]  %s1425, 1024, %s3, [#allocation4], 64, 64, 4
    $region29: #{dcgan_discriminator_forward.4} parent=1 // pred_fallthru
      _
    // Predicated region
    $region30: #{dcgan_discriminator_forward.4} parent=1 // pred_check
      _
    $region31: #{dcgan_discriminator_forward.4} parent=1 // pred_check_branch
      %1432 = sbr.rel (0) target = $region33
    $region32: #{dcgan_discriminator_forward.4} parent=1 // pred_region
      %1433 = dma.done [#allocation4], 1024
    $region33: #{dcgan_discriminator_forward.4} parent=1 // pred_fallthru
      _
    %1434 = vsyncpa [#allocation3], 1
    %1435 = vsyncpa [#allocation6], 1
    %1436 = vsyncpa [#allocation4], 1

// kernel: dcgan_discriminator_forward.6
$region0: #{dcgan_discriminator_forward.6}
  #allocation0 [shape = 'u32[]', space=smem, size = 0x4, offset = 0x4, fixed_abs, tag = 'smem constant byte address 0x4 - core index']
  #allocation1 [shape = 'u32[144,128]{1,0:T(1,128)}', space=vmem, size = 0x12000, scoped, tag = 'internal scratch']
  %s0 = inlined_call_operand.hbm [shape: bf16[2,16,64], index: 0, kind: input, shape index: {}]
  %s1 = inlined_call_operand.hbm [shape: f32[1,64], index: 1, kind: input, shape index: {}]
  %s2 = inlined_call_operand.hbm [shape: f32[1,64], index: 2, kind: input, shape index: {}]
  %s3 = inlined_call_operand.hbm [shape: f32[1,64], index: 3, kind: input, shape index: {}]
  %s4 = inlined_call_operand.hbm [shape: f32[1,64], index: 4, kind: input, shape index: {}]
  %s5 = inlined_call_operand.hbm [shape: bf16[2,16,64], index: 5, kind: output, shape index: {}]
  %s6 = sld [smem:[#allocation0]]
  $region50: #{dcgan_discriminator_forward.6} parent=0
    _
  %s8 = ssub.s32 1, %s6
  %s9 = scalar_select 0, %s8, %s6
  $region1: #{dcgan_discriminator_forward.6} parent=0
    #allocation2 [shape = 'u8[8192]{0}', space=vmem, size = 0x2000, scoped, tag = 'input window, operand 0, single buffered']
    #allocation3 [shape = 's32[1]{0}', space=sflag, size = 0x4, scoped, tag = 'scoped memory for dcgan_discriminator_forward.6']
    #allocation4 [shape = 's32[1]{0}', space=sflag, size = 0x4, scoped, tag = 'scoped memory for dcgan_discriminator_forward.6']
    #allocation5 [shape = 'u8[512]{0}', space=vmem, size = 0x400, scoped, tag = 'input window, operand 1, single buffered']
    #allocation6 [shape = 's32[1]{0}', space=sflag, size = 0x4, scoped, tag = 'scoped memory for dcgan_discriminator_forward.6']
    #allocation7 [shape = 'u8[512]{0}', space=vmem, size = 0x400, scoped, tag = 'input window, operand 2, single buffered']
    #allocation8 [shape = 'u8[512]{0}', space=vmem, size = 0x400, scoped, tag = 'input window, operand 3, single buffered']
    #allocation9 [shape = 's32[1]{0}', space=sflag, size = 0x4, scoped, tag = 'scoped memory for dcgan_discriminator_forward.6']
    #allocation10 [shape = 'u8[512]{0}', space=vmem, size = 0x400, scoped, tag = 'input window, operand 4, single buffered']
    #allocation11 [shape = 'u8[8192]{0}', space=vmem, size = 0x2000, scoped, tag = 'output window, operand 0, single buffered']
    %10 = vsyncpa [#allocation3], 0
    %11 = vsyncpa [#allocation6], 0
    %12 = vsyncpa [#allocation9], 0
    %13 = vsyncpa [#allocation4], 0
    // Predicated region
    $region2: #{dcgan_discriminator_forward.6} parent=1 // pred_check
      _
    $region3: #{dcgan_discriminator_forward.6} parent=1 // pred_check_branch
      %15 = sbr.rel (0) target = $region5
    $region4: #{dcgan_discriminator_forward.6} parent=1 // pred_region
      %s17 = ssub.s32 256, 256
      %18 = vsyncadd [#allocation3], %s17
      %s19 = sshll.u32 [#allocation2], 4
      %s20 = int_to_ptr.vmem [resolvable:$true] %s19
      %25 = dma.hbm_to_vmem [thread:$0]  %s0, 256, %s20, [#allocation3], 64, 64, 4
    $region5: #{dcgan_discriminator_forward.6} parent=1 // pred_fallthru
      _
    // Predicated region
    $region6: #{dcgan_discriminator_forward.6} parent=1 // pred_check
      _
    $region7: #{dcgan_discriminator_forward.6} parent=1 // pred_check_branch
      %27 = sbr.rel (0) target = $region9
    $region8: #{dcgan_discriminator_forward.6} parent=1 // pred_region
      %s29 = ssub.s32 16, 16
      %30 = vsyncadd [#allocation6], %s29
      %s32 = sshll.u32 [#allocation5], 4
      %s33 = int_to_ptr.vmem [resolvable:$true] %s32
      %35 = dma.hbm_to_vmem [thread:$0]  %s1, 16, %s33, [#allocation6]
    $region9: #{dcgan_discriminator_forward.6} parent=1 // pred_fallthru
      _
    // Predicated region
    $region10: #{dcgan_discriminator_forward.6} parent=1 // pred_check
      _
    $region11: #{dcgan_discriminator_forward.6} parent=1 // pred_check_branch
      %37 = sbr.rel (0) target = $region13
    $region12: #{dcgan_discriminator_forward.6} parent=1 // pred_region
      %s39 = ssub.s32 16, 16
      %40 = vsyncadd [#allocation6], %s39
      %s42 = sshll.u32 [#allocation7], 4
      %s43 = int_to_ptr.vmem [resolvable:$true] %s42
      %45 = dma.hbm_to_vmem [thread:$0]  %s2, 16, %s43, [#allocation6]
    $region13: #{dcgan_discriminator_forward.6} parent=1 // pred_fallthru
      _
    // Predicated region
    $region14: #{dcgan_discriminator_forward.6} parent=1 // pred_check
      _
    $region15: #{dcgan_discriminator_forward.6} parent=1 // pred_check_branch
      %47 = sbr.rel (0) target = $region17
    $region16: #{dcgan_discriminator_forward.6} parent=1 // pred_region
      %s49 = ssub.s32 16, 16
      %50 = vsyncadd [#allocation9], %s49
      %s52 = sshll.u32 [#allocation8], 4
      %s53 = int_to_ptr.vmem [resolvable:$true] %s52
      %55 = dma.hbm_to_vmem [thread:$0]  %s3, 16, %s53, [#allocation9]
    $region17: #{dcgan_discriminator_forward.6} parent=1 // pred_fallthru
      _
    // Predicated region
    $region18: #{dcgan_discriminator_forward.6} parent=1 // pred_check
      _
    $region19: #{dcgan_discriminator_forward.6} parent=1 // pred_check_branch
      %57 = sbr.rel (0) target = $region21
    $region20: #{dcgan_discriminator_forward.6} parent=1 // pred_region
      %s59 = ssub.s32 16, 16
      %60 = vsyncadd [#allocation9], %s59
      %s62 = sshll.u32 [#allocation10], 4
      %s63 = int_to_ptr.vmem [resolvable:$true] %s62
      %65 = dma.hbm_to_vmem [thread:$0]  %s4, 16, %s63, [#allocation9]
    $region21: #{dcgan_discriminator_forward.6} parent=1 // pred_fallthru
      _
    // Predicated region
    $region22: #{dcgan_discriminator_forward.6} parent=1 // pred_check
      _
    $region23: #{dcgan_discriminator_forward.6} parent=1 // pred_check_branch
      %67 = sbr.rel (0) target = $region25
    $region24: #{dcgan_discriminator_forward.6} parent=1 // pred_region
      %68 = dma.done [#allocation3], 256
    $region25: #{dcgan_discriminator_forward.6} parent=1 // pred_fallthru
      _
    // Predicated region
    $region26: #{dcgan_discriminator_forward.6} parent=1 // pred_check
      _
    $region27: #{dcgan_discriminator_forward.6} parent=1 // pred_check_branch
      %70 = sbr.rel (0) target = $region29
    $region28: #{dcgan_discriminator_forward.6} parent=1 // pred_region
      %71 = dma.done [#allocation6], 16
    $region29: #{dcgan_discriminator_forward.6} parent=1 // pred_fallthru
      _
    // Predicated region
    $region30: #{dcgan_discriminator_forward.6} parent=1 // pred_check
      _
    $region31: #{dcgan_discriminator_forward.6} parent=1 // pred_check_branch
      %73 = sbr.rel (0) target = $region33
    $region32: #{dcgan_discriminator_forward.6} parent=1 // pred_region
      %74 = dma.done [#allocation6], 16
    $region33: #{dcgan_discriminator_forward.6} parent=1 // pred_fallthru
      _
    // Predicated region
    $region34: #{dcgan_discriminator_forward.6} parent=1 // pred_check
      _
    $region35: #{dcgan_discriminator_forward.6} parent=1 // pred_check_branch
      %76 = sbr.rel (0) target = $region37
    $region36: #{dcgan_discriminator_forward.6} parent=1 // pred_region
      %77 = dma.done [#allocation9], 16
    $region37: #{dcgan_discriminator_forward.6} parent=1 // pred_fallthru
      _
    // Predicated region
    $region38: #{dcgan_discriminator_forward.6} parent=1 // pred_check
      _
    $region39: #{dcgan_discriminator_forward.6} parent=1 // pred_check_branch
      %79 = sbr.rel (0) target = $region41
    $region40: #{dcgan_discriminator_forward.6} parent=1 // pred_region
      %80 = dma.done [#allocation9], 16
    $region41: #{dcgan_discriminator_forward.6} parent=1 // pred_fallthru
      _
    %v81 = vld [vmem:[#allocation5] sm:$0x1]
    %v82 = vmul.f32 %v81, 0.03125
    %v83 = vld [vmem:[#allocation7] sm:$0x1]
    %v84 = vmul.f32 %v83, 0.03125
    %v85 = vmul.f32 %v82, %v82
    %v86 = vsub.f32 %v84, %v85
    %v87 = vmax.f32 %v86, 0.0
    %v88 = vld [vmem:[#allocation8] sm:$0x1]
    %v89 = vadd.f32 %v87, 1e-05
    %v90 = vrsqrt.pop %v89
    %v91 = vmul.f32 %v88, %v90
    %v92 = vld [vmem:[#allocation10] sm:$0x1]
    %v93 = vmul.f32 %v82, %v91
    %v94 = vsub.f32 %v92, %v93
    %v95 = vld [vmem:[#allocation2] sm:$0xf]
    %v96 = vld [vmem:[#allocation2 + $0x4] sm:$0xf]
    %v97 = vld [vmem:[#allocation2 + $0x8] sm:$0xf]
    %v98 = vld [vmem:[#allocation2 + $0xc] sm:$0xf]
    %v99 = vunpack.c.l.bf16 %v95
    %v100 = vunpack.c.l.bf16 %v96
    %v101 = vunpack.c.l.bf16 %v97
    %v102 = vunpack.c.l.bf16 %v98
    %v104 = vlaneseq
    %v105 = vshrl.u32 %v104, 7
    %v106 = vsub.s32 0, %v105
    %v107 = vrot.slane %v91, %v106
    %v109 = vmul.f32 %v99, %v107
    %v110 = vmul.f32 %v100, %v107
    %v111 = vmul.f32 %v101, %v107
    %v112 = vmul.f32 %v102, %v107
    %v114 = vlaneseq
    %v115 = vshrl.u32 %v114, 7
    %v116 = vsub.s32 0, %v115
    %v117 = vrot.slane %v94, %v116
    %v119 = vadd.f32 %v109, %v117
    %v120 = vadd.f32 %v110, %v117
    %v121 = vadd.f32 %v111, %v117
    %v122 = vadd.f32 %v112, %v117
    %vm123 = vcmp.ge.f32.partialorder %v119, 0.0
    %vm124 = vcmp.ge.f32.partialorder %v120, 0.0
    %vm125 = vcmp.ge.f32.partialorder %v121, 0.0
    %vm126 = vcmp.ge.f32.partialorder %v122, 0.0
    %v127 = vmul.f32 %v119, 0.01
    %v128 = vmul.f32 %v120, 0.01
    %v129 = vmul.f32 %v121, 0.01
    %v130 = vmul.f32 %v122, 0.01
    %v131 = vsel %vm123, %v119, %v127
    %v132 = vsel %vm124, %v120, %v128
    %v133 = vsel %vm125, %v121, %v129
    %v134 = vsel %vm126, %v122, %v130
    %v135 = vpack.c.bf16 %v132, %v131
    %v136 = vpack.c.bf16 %v134, %v133
    %v139 = vunpack.c.l.b16 %v135
    %v140 = vunpack.c.h.b16 %v135
    %v141 = vunpack.c.l.b16 %v136
    %v142 = vunpack.c.h.b16 %v136
    %v143 = vpack.c.b16 %v139, %v139
    %v144 = vpack.c.b16 %v140, %v140
    %v145 = vpack.c.b16 %v141, %v141
    %v146 = vpack.c.b16 %v142, %v142
    %vm151 = vcmask 519168
    %152 = vst.msk [vmem:[#allocation11] sm:$0xf] %vm151, %v143
    %153 = vst.msk [vmem:[#allocation11 + $0x4] sm:$0xf] %vm151, %v144
    %154 = vst.msk [vmem:[#allocation11 + $0x8] sm:$0xf] %vm151, %v145
    %155 = vst.msk [vmem:[#allocation11 + $0xc] sm:$0xf] %vm151, %v146
    // Predicated region
    $region42: #{dcgan_discriminator_forward.6} parent=1 // pred_check
      _
    $region43: #{dcgan_discriminator_forward.6} parent=1 // pred_check_branch
      %157 = sbr.rel (0) target = $region45
    $region44: #{dcgan_discriminator_forward.6} parent=1 // pred_region
      %s159 = ssub.s32 256, 256
      %160 = vsyncadd [#allocation4], %s159
      %s161 = sshll.u32 [#allocation11], 4
      %s162 = int_to_ptr.vmem [resolvable:$true] %s161
      %167 = dma.vmem_to_hbm [thread:$0]  %s162, 256, %s5, [#allocation4], 64, 64, 4
    $region45: #{dcgan_discriminator_forward.6} parent=1 // pred_fallthru
      _
    // Predicated region
    $region46: #{dcgan_discriminator_forward.6} parent=1 // pred_check
      _
    $region47: #{dcgan_discriminator_forward.6} parent=1 // pred_check_branch
      %169 = sbr.rel (0) target = $region49
    $region48: #{dcgan_discriminator_forward.6} parent=1 // pred_region
      %170 = dma.done [#allocation4], 256
    $region49: #{dcgan_discriminator_forward.6} parent=1 // pred_fallthru
      _
    %171 = vsyncpa [#allocation3], 1
    %172 = vsyncpa [#allocation6], 1
    %173 = vsyncpa [#allocation9], 1
    %174 = vsyncpa [#allocation4], 1

// kernel: dcgan_discriminator_forward.7
$region0: #{dcgan_discriminator_forward.7}
  #allocation0 [shape = 'u32[]', space=smem, size = 0x4, offset = 0x4, fixed_abs, tag = 'smem constant byte address 0x4 - core index']
  #allocation1 [shape = 'u32[144,128]{1,0:T(1,128)}', space=vmem, size = 0x12000, scoped, tag = 'internal scratch']
  #allocation2 [shape = 'f32[1,1]{1,0:T(1,128)S(1)}', space=vmem, size = 0x200, scoped, tag = 'scoped memory for dcgan_discriminator_forward.7']
  %s0 = inlined_call_operand.hbm [shape: bf16[2,1024], index: 0, kind: input, shape index: {}]
  %s1 = inlined_call_operand.hbm [shape: f32[1,1024], index: 1, kind: input, shape index: {}]
  %s2 = inlined_call_operand.<no memory space> [shape: f32[1,1], index: 2, kind: input, shape index: {}]
  %s3 = inlined_call_operand.hbm [shape: f32[2,1], index: 3, kind: output, shape index: {}]
  %s4 = sld [smem:[#allocation0]]
  $region30: #{dcgan_discriminator_forward.7} parent=0
    _
  %s6 = ssub.s32 1, %s4
  %s7 = scalar_select 0, %s6, %s4
  %v8 = vstv %s2
  %9 = vst [vmem:[#allocation2] sm:$0x1] %v8
  $region1: #{dcgan_discriminator_forward.7} parent=0
    #allocation3 [shape = 'u8[4096]{0}', space=vmem, size = 0x1000, scoped, tag = 'input window, operand 0, single buffered']
    #allocation4 [shape = 's32[1]{0}', space=sflag, size = 0x4, scoped, tag = 'scoped memory for dcgan_discriminator_forward.7']
    #allocation5 [shape = 's32[1]{0}', space=sflag, size = 0x4, scoped, tag = 'scoped memory for dcgan_discriminator_forward.7']
    #allocation6 [shape = 'u8[4096]{0}', space=vmem, size = 0x1000, scoped, tag = 'input window, operand 1, single buffered']
    #allocation7 [shape = 's32[1]{0}', space=sflag, size = 0x4, scoped, tag = 'scoped memory for dcgan_discriminator_forward.7']
    #allocation8 [shape = 'u8[1024]{0}', space=vmem, size = 0x400, scoped, tag = 'output window, operand 0, single buffered']
    %10 = vsyncpa [#allocation4], 0
    %11 = vsyncpa [#allocation7], 0
    %12 = vsyncpa [#allocation5], 0
    // Predicated region
    $region2: #{dcgan_discriminator_forward.7} parent=1 // pred_check
      _
    $region3: #{dcgan_discriminator_forward.7} parent=1 // pred_check_branch
      %14 = sbr.rel (0) target = $region5
    $region4: #{dcgan_discriminator_forward.7} parent=1 // pred_region
      %s16 = ssub.s32 128, 128
      %17 = vsyncadd [#allocation4], %s16
      %s19 = sshll.u32 [#allocation3], 4
      %s20 = int_to_ptr.vmem [resolvable:$true] %s19
      %22 = dma.hbm_to_vmem [thread:$0]  %s0, 128, %s20, [#allocation4]
    $region5: #{dcgan_discriminator_forward.7} parent=1 // pred_fallthru
      _
    // Predicated region
    $region6: #{dcgan_discriminator_forward.7} parent=1 // pred_check
      _
    $region7: #{dcgan_discriminator_forward.7} parent=1 // pred_check_branch
      %24 = sbr.rel (0) target = $region9
    $region8: #{dcgan_discriminator_forward.7} parent=1 // pred_region
      %s26 = ssub.s32 128, 128
      %27 = vsyncadd [#allocation7], %s26
      %s29 = sshll.u32 [#allocation6], 4
      %s30 = int_to_ptr.vmem [resolvable:$true] %s29
      %32 = dma.hbm_to_vmem [thread:$0]  %s1, 128, %s30, [#allocation7]
    $region9: #{dcgan_discriminator_forward.7} parent=1 // pred_fallthru
      _
    // Predicated region
    $region10: #{dcgan_discriminator_forward.7} parent=1 // pred_check
      _
    $region11: #{dcgan_discriminator_forward.7} parent=1 // pred_check_branch
      %34 = sbr.rel (0) target = $region13
    $region12: #{dcgan_discriminator_forward.7} parent=1 // pred_region
      _
    $region13: #{dcgan_discriminator_forward.7} parent=1 // pred_fallthru
      _
    // Predicated region
    $region14: #{dcgan_discriminator_forward.7} parent=1 // pred_check
      _
    $region15: #{dcgan_discriminator_forward.7} parent=1 // pred_check_branch
      %36 = sbr.rel (0) target = $region17
    $region16: #{dcgan_discriminator_forward.7} parent=1 // pred_region
      %37 = dma.done [#allocation4], 128
    $region17: #{dcgan_discriminator_forward.7} parent=1 // pred_fallthru
      _
    // Predicated region
    $region18: #{dcgan_discriminator_forward.7} parent=1 // pred_check
      _
    $region19: #{dcgan_discriminator_forward.7} parent=1 // pred_check_branch
      %39 = sbr.rel (0) target = $region21
    $region20: #{dcgan_discriminator_forward.7} parent=1 // pred_region
      %40 = dma.done [#allocation7], 128
    $region21: #{dcgan_discriminator_forward.7} parent=1 // pred_fallthru
      _
    %v41 = vld [vmem:[#allocation3] sm:$0xff]
    %v42 = vunpack.c.l.bf16 %v41
    %v43 = vunpack.c.h.bf16 %v41
    %v44 = vld [vmem:[#allocation6] sm:$0xff]
    %v46 = vlaneseq
    %v47 = vshrl.u32 %v46, 7
    %v48 = vsub.s32 0, %v47
    %v49 = vrot.slane %v44, %v48
    %v50 = vlaneseq
    %v51 = vshrl.u32 %v50, 7
    %v52 = vsub.s32 1, %v51
    %v53 = vrot.slane %v44, %v52
    %v54 = vlaneseq
    %v55 = vshrl.u32 %v54, 7
    %v56 = vsub.s32 2, %v55
    %v57 = vrot.slane %v44, %v56
    %v58 = vlaneseq
    %v59 = vshrl.u32 %v58, 7
    %v60 = vsub.s32 3, %v59
    %v61 = vrot.slane %v44, %v60
    %v62 = vlaneseq
    %v63 = vshrl.u32 %v62, 7
    %v64 = vsub.s32 4, %v63
    %v65 = vrot.slane %v44, %v64
    %v66 = vlaneseq
    %v67 = vshrl.u32 %v66, 7
    %v68 = vsub.s32 5, %v67
    %v69 = vrot.slane %v44, %v68
    %v70 = vlaneseq
    %v71 = vshrl.u32 %v70, 7
    %v72 = vsub.s32 6, %v71
    %v73 = vrot.slane %v44, %v72
    %v74 = vlaneseq
    %v75 = vshrl.u32 %v74, 7
    %v76 = vsub.s32 7, %v75
    %v77 = vrot.slane %v44, %v76
    %v78 = vcombine.low %v49, %v53
    %v79 = vcombine.low %v57, %v61
    %v81 = vunpack.c.l.s4 1983009808
    %v82 = vunpack.c.0.s8 %v81
    %v83 = vlaneseq
    %v84 = vshrl.u32 %v83, 7
    %v85 = vsub.s32 %v82, %v84
    %v86 = vrot.slane %v78, %v85
    %v88 = vunpack.c.l.s4 1983009808
    %v89 = vunpack.c.0.s8 %v88
    %v90 = vlaneseq
    %v91 = vshrl.u32 %v90, 7
    %v92 = vsub.s32 %v89, %v91
    %v93 = vrot.slane %v79, %v92
    %v94 = vcombine.low %v86, %v93
    %v95 = vcombine.low %v65, %v69
    %v96 = vcombine.low %v73, %v77
    %v98 = vunpack.c.l.s4 1983009808
    %v99 = vunpack.c.0.s8 %v98
    %v100 = vlaneseq
    %v101 = vshrl.u32 %v100, 7
    %v102 = vsub.s32 %v99, %v101
    %v103 = vrot.slane %v95, %v102
    %v105 = vunpack.c.l.s4 1983009808
    %v106 = vunpack.c.0.s8 %v105
    %v107 = vlaneseq
    %v108 = vshrl.u32 %v107, 7
    %v109 = vsub.s32 %v106, %v108
    %v110 = vrot.slane %v96, %v109
    %v111 = vcombine.low %v103, %v110
    %v114 = vmul.f32 %v42, %v94
    %v115 = vmul.f32 %v43, %v111
    %v118 = vcombine.high %v114, %v114
    %v120 = vunpack.c.l.s4 1983009808
    %v121 = vunpack.c.0.s8 %v120
    %v122 = vlaneseq
    %v123 = vshrl.u32 %v122, 7
    %v124 = vsub.s32 %v121, %v123
    %v125 = vrot.slane %v114, %v124
    %v127 = vunpack.c.l.s4 1983009808
    %v128 = vunpack.c.0.s8 %v127
    %v129 = vlaneseq
    %v130 = vshrl.u32 %v129, 7
    %v131 = vsub.s32 %v128, %v130
    %v132 = vrot.slane %v118, %v131
    %v133 = vcombine.high %v125, %v125
    %v134 = vcombine.high %v132, %v132
    %v135 = vcombine.high %v115, %v115
    %v137 = vunpack.c.l.s4 1983009808
    %v138 = vunpack.c.0.s8 %v137
    %v139 = vlaneseq
    %v140 = vshrl.u32 %v139, 7
    %v141 = vsub.s32 %v138, %v140
    %v142 = vrot.slane %v115, %v141
    %v144 = vunpack.c.l.s4 1983009808
    %v145 = vunpack.c.0.s8 %v144
    %v146 = vlaneseq
    %v147 = vshrl.u32 %v146, 7
    %v148 = vsub.s32 %v145, %v147
    %v149 = vrot.slane %v135, %v148
    %v150 = vcombine.high %v142, %v142
    %v151 = vcombine.high %v149, %v149
    %vm160 = vcmask 1041408
    %v161 = vsel %vm160, %v125, 0.0
    %v162 = vsel %vm160, %v133, 0.0
    %v163 = vadd.f32 %v161, %v162
    %v164 = vsel %vm160, %v132, 0.0
    %v165 = vadd.f32 %v163, %v164
    %v166 = vsel %vm160, %v134, 0.0
    %v167 = vadd.f32 %v165, %v166
    %v168 = vsel %vm160, %v142, 0.0
    %v169 = vadd.f32 %v167, %v168
    %v170 = vsel %vm160, %v150, 0.0
    %v171 = vadd.f32 %v169, %v170
    %v172 = vsel %vm160, %v149, 0.0
    %v173 = vadd.f32 %v171, %v172
    %v174 = vsel %vm160, %v151, 0.0
    %v175 = vadd.f32 %v173, %v174
    %176 = vadd.xlane.f32.xlu0 %v175
    %v177 = vpop.xlane.xlu0 %176
    %v178 = vld [vmem:[#allocation2] sm:$0x1]
    %v180 = vlaneseq
    %v181 = vshrl.u32 %v180, 7
    %v182 = vsub.s32 0, %v181
    %v183 = vrot.slane %v178, %v182
    %v185 = vadd.f32 %v177, %v183
    %v186 = vxor.u32 %v185, 2147483648
    %v187 = vmul.f32 %v186, 1.442695
    %v188 = vpow.pop %v187
    %v189 = vadd.f32 %v188, 1.0
    %v190 = vrcp.pop %v189
    %v191 = vmul.f32 1.0, %v190
    %vm192 = vcmask 1024
    %193 = vst.msk [vmem:[#allocation8] sm:$0x3] %vm192, %v191
    // Predicated region
    $region22: #{dcgan_discriminator_forward.7} parent=1 // pred_check
      _
    $region23: #{dcgan_discriminator_forward.7} parent=1 // pred_check_branch
      %195 = sbr.rel (0) target = $region25
    $region24: #{dcgan_discriminator_forward.7} parent=1 // pred_region
      %s197 = ssub.s32 32, 32
      %198 = vsyncadd [#allocation5], %s197
      %s200 = sshll.u32 [#allocation8], 4
      %s201 = int_to_ptr.vmem [resolvable:$true] %s200
      %203 = dma.vmem_to_hbm [thread:$0]  %s201, 32, %s3, [#allocation5]
    $region25: #{dcgan_discriminator_forward.7} parent=1 // pred_fallthru
      _
    // Predicated region
    $region26: #{dcgan_discriminator_forward.7} parent=1 // pred_check
      _
    $region27: #{dcgan_discriminator_forward.7} parent=1 // pred_check_branch
      %205 = sbr.rel (0) target = $region29
    $region28: #{dcgan_discriminator_forward.7} parent=1 // pred_region
      %206 = dma.done [#allocation5], 32
    $region29: #{dcgan_discriminator_forward.7} parent=1 // pred_fallthru
      _
    %207 = vsyncpa [#allocation4], 1
    %208 = vsyncpa [#allocation7], 1
    %209 = vsyncpa [#allocation5], 1

// kernel: dcgan_discriminator_forward.5
$region0: #{dcgan_discriminator_forward.5}
  #allocation0 [shape = 'u32[]', space=smem, size = 0x4, offset = 0x4, fixed_abs, tag = 'smem constant byte address 0x4 - core index']
  #allocation1 [shape = 'u32[144,128]{1,0:T(1,128)}', space=vmem, size = 0x12000, scoped, tag = 'internal scratch']
  %s0 = inlined_call_operand.hbm [shape: bf16[2,5,5,128], index: 0, kind: input, shape index: {}]
  %s1 = inlined_call_operand.hbm [shape: bf16[2,2,128,64], index: 1, kind: input, shape index: {}]
  %s2 = inlined_call_operand.hbm [shape: bf16[2,16,64], index: 2, kind: output, shape index: {0}]
  %s3 = inlined_call_operand.hbm [shape: f32[1,64], index: 3, kind: output, shape index: {1}]
  %s4 = inlined_call_operand.hbm [shape: f32[1,64], index: 4, kind: output, shape index: {2}]
  %5 = xla_tuple %s2, %s3, %s4
  %s6 = sld [smem:[#allocation0]]
  $region46: #{dcgan_discriminator_forward.5} parent=0
    _
  %s8 = ssub.s32 1, %s6
  %s9 = scalar_select 0, %s8, %s6
  $region1: #{dcgan_discriminator_forward.5} parent=0
    #allocation2 [shape = 'u8[20480]{0}', space=vmem, size = 0x5000, scoped, tag = 'input window, operand 0, single buffered']
    #allocation3 [shape = 's32[1]{0}', space=sflag, size = 0x4, scoped, tag = 'scoped memory for dcgan_discriminator_forward.5']
    #allocation4 [shape = 's32[1]{0}', space=sflag, size = 0x4, scoped, tag = 'scoped memory for dcgan_discriminator_forward.5']
    #allocation5 [shape = 'u8[131072]{0}', space=vmem, size = 0x20000, scoped, tag = 'input window, operand 1, single buffered']
    #allocation6 [shape = 's32[1]{0}', space=sflag, size = 0x4, scoped, tag = 'scoped memory for dcgan_discriminator_forward.5']
    #allocation7 [shape = 'u8[8192]{0}', space=vmem, size = 0x2000, scoped, tag = 'output window, operand 0, single buffered']
    #allocation8 [shape = 'u8[512]{0}', space=vmem, size = 0x400, scoped, tag = 'output window, operand 1, single buffered']
    #allocation9 [shape = 's32[1]{0}', space=sflag, size = 0x4, scoped, tag = 'scoped memory for dcgan_discriminator_forward.5']
    #allocation10 [shape = 'u8[512]{0}', space=vmem, size = 0x400, scoped, tag = 'output window, operand 2, single buffered']
    %10 = vsyncpa [#allocation3], 0
    %11 = vsyncpa [#allocation6], 0
    %12 = vsyncpa [#allocation4], 0
    %13 = vsyncpa [#allocation9], 0
    // Predicated region
    $region2: #{dcgan_discriminator_forward.5} parent=1 // pred_check
      _
    $region3: #{dcgan_discriminator_forward.5} parent=1 // pred_check_branch
      %15 = sbr.rel (0) target = $region5
    $region4: #{dcgan_discriminator_forward.5} parent=1 // pred_region
      %s17 = ssub.s32 640, 640
      %18 = vsyncadd [#allocation3], %s17
      %s19 = sshll.u32 [#allocation2], 4
      %s20 = int_to_ptr.vmem [resolvable:$true] %s19
      %25 = dma.hbm_to_vmem [thread:$0]  %s0, 640, %s20, [#allocation3], 64, 64, 4
    $region5: #{dcgan_discriminator_forward.5} parent=1 // pred_fallthru
      _
    // Predicated region
    $region6: #{dcgan_discriminator_forward.5} parent=1 // pred_check
      _
    $region7: #{dcgan_discriminator_forward.5} parent=1 // pred_check_branch
      %27 = sbr.rel (0) target = $region9
    $region8: #{dcgan_discriminator_forward.5} parent=1 // pred_region
      %s29 = ssub.s32 4096, 4096
      %30 = vsyncadd [#allocation6], %s29
      %s31 = sshll.u32 [#allocation5], 4
      %s32 = int_to_ptr.vmem [resolvable:$true] %s31
      %37 = dma.hbm_to_vmem [thread:$0]  %s1, 4096, %s32, [#allocation6], 64, 64, 4
    $region9: #{dcgan_discriminator_forward.5} parent=1 // pred_fallthru
      _
    // Predicated region
    $region10: #{dcgan_discriminator_forward.5} parent=1 // pred_check
      _
    $region11: #{dcgan_discriminator_forward.5} parent=1 // pred_check_branch
      %39 = sbr.rel (0) target = $region13
    $region12: #{dcgan_discriminator_forward.5} parent=1 // pred_region
      %40 = dma.done [#allocation3], 640
    $region13: #{dcgan_discriminator_forward.5} parent=1 // pred_fallthru
      _
    // Predicated region
    $region14: #{dcgan_discriminator_forward.5} parent=1 // pred_check
      _
    $region15: #{dcgan_discriminator_forward.5} parent=1 // pred_check_branch
      %42 = sbr.rel (0) target = $region17
    $region16: #{dcgan_discriminator_forward.5} parent=1 // pred_region
      %43 = dma.done [#allocation6], 4096
    $region17: #{dcgan_discriminator_forward.5} parent=1 // pred_fallthru
      _
    %p45 = scmp.eq.s32.totalorder 0, 0
    // Predicated region
    $region18: #{dcgan_discriminator_forward.5} parent=1 // pred_check
      %p46 = pneg %p45
    $region19: #{dcgan_discriminator_forward.5} parent=1 // pred_check_branch
      %48 = sbr.rel (%p46) target = $region21
    $region20: #{dcgan_discriminator_forward.5} parent=1 // pred_region
      %vm49 = vcmask 516096
      %50 = vst.msk [vmem:[#allocation8] sm:$0x1] %vm49, 0.0
      %51 = vst.msk [vmem:[#allocation10] sm:$0x1] %vm49, 0.0
    $region21: #{dcgan_discriminator_forward.5} parent=1 // pred_fallthru
      _
    %v52 = vld [vmem:[#allocation2] sm:$0x3]
    %v53 = vld [vmem:[#allocation2 + $0x4] sm:$0x3]
    %v54 = vld [vmem:[#allocation2 + $0x8] sm:$0x3]
    %v55 = vld [vmem:[#allocation2 + $0xc] sm:$0x3]
    %v56 = vld [vmem:[#allocation2 + $0x14] sm:$0x3]
    %v57 = vld [vmem:[#allocation2 + $0x18] sm:$0x3]
    %v58 = vld [vmem:[#allocation2 + $0x1c] sm:$0x3]
    %v59 = vld [vmem:[#allocation2 + $0x20] sm:$0x3]
    %v60 = vld [vmem:[#allocation5] sm:$0xf]
    %v61 = vld [vmem:[#allocation5 + $0x4] sm:$0xf]
    %v62 = vld [vmem:[#allocation5 + $0x8] sm:$0xf]
    %v63 = vld [vmem:[#allocation5 + $0xc] sm:$0xf]
    %v64 = vld [vmem:[#allocation5 + $0x10] sm:$0xf]
    %v65 = vld [vmem:[#allocation5 + $0x14] sm:$0xf]
    %v66 = vld [vmem:[#allocation5 + $0x18] sm:$0xf]
    %v67 = vld [vmem:[#allocation5 + $0x1c] sm:$0xf]
    %v68 = vld [vmem:[#allocation5 + $0x20] sm:$0xf]
    %v69 = vld [vmem:[#allocation5 + $0x24] sm:$0xf]
    %v70 = vld [vmem:[#allocation5 + $0x28] sm:$0xf]
    %v71 = vld [vmem:[#allocation5 + $0x2c] sm:$0xf]
    %v72 = vld [vmem:[#allocation5 + $0x30] sm:$0xf]
    %v73 = vld [vmem:[#allocation5 + $0x34] sm:$0xf]
    %v74 = vld [vmem:[#allocation5 + $0x38] sm:$0xf]
    %v75 = vld [vmem:[#allocation5 + $0x3c] sm:$0xf]
    %v76 = vld [vmem:[#allocation2] sm:$0x7]
    %v77 = vld [vmem:[#allocation2 + $0x4] sm:$0x7]
    %v78 = vld [vmem:[#allocation2 + $0x8] sm:$0x7]
    %v79 = vld [vmem:[#allocation2 + $0xc] sm:$0x7]
    %v80 = vld [vmem:[#allocation2 + $0x14] sm:$0x7]
    %v81 = vld [vmem:[#allocation2 + $0x18] sm:$0x7]
    %v82 = vld [vmem:[#allocation2 + $0x1c] sm:$0x7]
    %v83 = vld [vmem:[#allocation2 + $0x20] sm:$0x7]
    %v93 = vunpack.c.l.s4 1983009808
    %v94 = vunpack.c.0.s8 %v93
    %v95 = vlaneseq
    %v96 = vshrl.u32 %v95, 7
    %v97 = vsub.s32 %v94, %v96
    %v98 = vrot.slane %v76, %v97
    %v99 = vcombine.high %v98, %v98
    %v101 = vunpack.c.l.s4 1983009808
    %v102 = vunpack.c.0.s8 %v101
    %v103 = vlaneseq
    %v104 = vshrl.u32 %v103, 7
    %v105 = vsub.s32 %v102, %v104
    %v106 = vrot.slane %v77, %v105
    %v107 = vcombine.high %v106, %v106
    %v109 = vunpack.c.l.s4 1983009808
    %v110 = vunpack.c.0.s8 %v109
    %v111 = vlaneseq
    %v112 = vshrl.u32 %v111, 7
    %v113 = vsub.s32 %v110, %v112
    %v114 = vrot.slane %v78, %v113
    %v115 = vcombine.high %v114, %v114
    %v117 = vunpack.c.l.s4 1983009808
    %v118 = vunpack.c.0.s8 %v117
    %v119 = vlaneseq
    %v120 = vshrl.u32 %v119, 7
    %v121 = vsub.s32 %v118, %v120
    %v122 = vrot.slane %v79, %v121
    %v123 = vcombine.high %v122, %v122
    %v125 = vunpack.c.l.s4 1983009808
    %v126 = vunpack.c.0.s8 %v125
    %v127 = vlaneseq
    %v128 = vshrl.u32 %v127, 7
    %v129 = vsub.s32 %v126, %v128
    %v130 = vrot.slane %v80, %v129
    %v131 = vcombine.high %v130, %v130
    %v133 = vunpack.c.l.s4 1983009808
    %v134 = vunpack.c.0.s8 %v133
    %v135 = vlaneseq
    %v136 = vshrl.u32 %v135, 7
    %v137 = vsub.s32 %v134, %v136
    %v138 = vrot.slane %v81, %v137
    %v139 = vcombine.high %v138, %v138
    %v141 = vunpack.c.l.s4 1983009808
    %v142 = vunpack.c.0.s8 %v141
    %v143 = vlaneseq
    %v144 = vshrl.u32 %v143, 7
    %v145 = vsub.s32 %v142, %v144
    %v146 = vrot.slane %v82, %v145
    %v147 = vcombine.high %v146, %v146
    %v149 = vunpack.c.l.s4 1983009808
    %v150 = vunpack.c.0.s8 %v149
    %v151 = vlaneseq
    %v152 = vshrl.u32 %v151, 7
    %v153 = vsub.s32 %v150, %v152
    %v154 = vrot.slane %v83, %v153
    %v155 = vcombine.high %v154, %v154
    %vm156 = vsmask.f32 1280
    %vm157 = vsmask.f32 3336
    %vm158 = vmor %vm156, %vm157
    %vm159 = vsmask.f32 5392
    %vm160 = vmor %vm158, %vm159
    %vm161 = vsmask.f32 7448
    %vm162 = vmor %vm160, %vm161
    %v164 = vshrl.u32 %v98, 16
    %v166 = vrot.slane %v164, 6
    %v167 = vshll.u32 %v98, 16
    %v169 = vrot.slane %v167, 7
    %v170 = vor.u32 %v166, %v169
    %v171 = vrot.slane %v170, 2
    %v173 = vshll.u32 %v99, 16
    %v175 = vrot.slane %v173, 7
    %v176 = vsel %vm162, %v171, %v175
    %v178 = vshrl.u32 %v106, 16
    %v180 = vrot.slane %v178, 6
    %v181 = vshll.u32 %v106, 16
    %v183 = vrot.slane %v181, 7
    %v184 = vor.u32 %v180, %v183
    %v185 = vrot.slane %v184, 2
    %v187 = vshll.u32 %v107, 16
    %v189 = vrot.slane %v187, 7
    %v190 = vsel %vm162, %v185, %v189
    %v192 = vshrl.u32 %v114, 16
    %v194 = vrot.slane %v192, 6
    %v195 = vshll.u32 %v114, 16
    %v197 = vrot.slane %v195, 7
    %v198 = vor.u32 %v194, %v197
    %v199 = vrot.slane %v198, 2
    %v201 = vshll.u32 %v115, 16
    %v203 = vrot.slane %v201, 7
    %v204 = vsel %vm162, %v199, %v203
    %v206 = vshrl.u32 %v122, 16
    %v208 = vrot.slane %v206, 6
    %v209 = vshll.u32 %v122, 16
    %v211 = vrot.slane %v209, 7
    %v212 = vor.u32 %v208, %v211
    %v213 = vrot.slane %v212, 2
    %v215 = vshll.u32 %v123, 16
    %v217 = vrot.slane %v215, 7
    %v218 = vsel %vm162, %v213, %v217
    %v220 = vshrl.u32 %v130, 16
    %v222 = vrot.slane %v220, 6
    %v223 = vshll.u32 %v130, 16
    %v225 = vrot.slane %v223, 7
    %v226 = vor.u32 %v222, %v225
    %v227 = vrot.slane %v226, 2
    %v229 = vshll.u32 %v131, 16
    %v231 = vrot.slane %v229, 7
    %v232 = vsel %vm162, %v227, %v231
    %v234 = vshrl.u32 %v138, 16
    %v236 = vrot.slane %v234, 6
    %v237 = vshll.u32 %v138, 16
    %v239 = vrot.slane %v237, 7
    %v240 = vor.u32 %v236, %v239
    %v241 = vrot.slane %v240, 2
    %v243 = vshll.u32 %v139, 16
    %v245 = vrot.slane %v243, 7
    %v246 = vsel %vm162, %v241, %v245
    %v248 = vshrl.u32 %v146, 16
    %v250 = vrot.slane %v248, 6
    %v251 = vshll.u32 %v146, 16
    %v253 = vrot.slane %v251, 7
    %v254 = vor.u32 %v250, %v253
    %v255 = vrot.slane %v254, 2
    %v257 = vshll.u32 %v147, 16
    %v259 = vrot.slane %v257, 7
    %v260 = vsel %vm162, %v255, %v259
    %v262 = vshrl.u32 %v154, 16
    %v264 = vrot.slane %v262, 6
    %v265 = vshll.u32 %v154, 16
    %v267 = vrot.slane %v265, 7
    %v268 = vor.u32 %v264, %v267
    %v269 = vrot.slane %v268, 2
    %v271 = vshll.u32 %v155, 16
    %v273 = vrot.slane %v271, 7
    %v274 = vsel %vm162, %v269, %v273
    %s275 = scalar_lea.vmem [#allocation5], 64
    %v276 = vld [vmem:[%s275] sm:$0xf]
    %v277 = vld [vmem:[%s275 + $0x4] sm:$0xf]
    %v278 = vld [vmem:[%s275 + $0x8] sm:$0xf]
    %v279 = vld [vmem:[%s275 + $0xc] sm:$0xf]
    %v280 = vld [vmem:[%s275 + $0x10] sm:$0xf]
    %v281 = vld [vmem:[%s275 + $0x14] sm:$0xf]
    %v282 = vld [vmem:[%s275 + $0x18] sm:$0xf]
    %v283 = vld [vmem:[%s275 + $0x1c] sm:$0xf]
    %v284 = vld [vmem:[%s275 + $0x20] sm:$0xf]
    %v285 = vld [vmem:[%s275 + $0x24] sm:$0xf]
    %v286 = vld [vmem:[%s275 + $0x28] sm:$0xf]
    %v287 = vld [vmem:[%s275 + $0x2c] sm:$0xf]
    %v288 = vld [vmem:[%s275 + $0x30] sm:$0xf]
    %v289 = vld [vmem:[%s275 + $0x34] sm:$0xf]
    %v290 = vld [vmem:[%s275 + $0x38] sm:$0xf]
    %v291 = vld [vmem:[%s275 + $0x3c] sm:$0xf]
    %v292 = vcombine.low %v176, %v190
    %v293 = vcombine.low %v204, %v218
    %v295 = vunpack.c.l.s4 1983009808
    %v296 = vunpack.c.0.s8 %v295
    %v297 = vlaneseq
    %v298 = vshrl.u32 %v297, 7
    %v299 = vsub.s32 %v296, %v298
    %v300 = vrot.slane %v292, %v299
    %v302 = vunpack.c.l.s4 1983009808
    %v303 = vunpack.c.0.s8 %v302
    %v304 = vlaneseq
    %v305 = vshrl.u32 %v304, 7
    %v306 = vsub.s32 %v303, %v305
    %v307 = vrot.slane %v293, %v306
    %v308 = vcombine.low %v300, %v307
    %v309 = vcombine.low %v232, %v246
    %v310 = vcombine.low %v260, %v274
    %v312 = vunpack.c.l.s4 1983009808
    %v313 = vunpack.c.0.s8 %v312
    %v314 = vlaneseq
    %v315 = vshrl.u32 %v314, 7
    %v316 = vsub.s32 %v313, %v315
    %v317 = vrot.slane %v309, %v316
    %v319 = vunpack.c.l.s4 1983009808
    %v320 = vunpack.c.0.s8 %v319
    %v321 = vlaneseq
    %v322 = vshrl.u32 %v321, 7
    %v323 = vsub.s32 %v320, %v322
    %v324 = vrot.slane %v310, %v323
    %v325 = vcombine.low %v317, %v324
    %v344 = vunpack.c.l.b16 %v276
    %v345 = vunpack.c.l.b16 %v277
    %v346 = vunpack.c.l.b16 %v278
    %v347 = vunpack.c.l.b16 %v279
    %v348 = vunpack.c.l.b16 %v280
    %v349 = vunpack.c.l.b16 %v281
    %v350 = vunpack.c.l.b16 %v282
    %v351 = vunpack.c.l.b16 %v283
    %v352 = vunpack.c.l.b16 %v284
    %v353 = vunpack.c.l.b16 %v285
    %v354 = vunpack.c.l.b16 %v286
    %v355 = vunpack.c.l.b16 %v287
    %v356 = vunpack.c.l.b16 %v288
    %v357 = vunpack.c.l.b16 %v289
    %v358 = vunpack.c.l.b16 %v290
    %v359 = vunpack.c.l.b16 %v291
    %v360 = vpack.c.b16 %v345, %v344
    %v361 = vpack.c.b16 %v347, %v346
    %v362 = vpack.c.b16 %v349, %v348
    %v363 = vpack.c.b16 %v351, %v350
    %v364 = vpack.c.b16 %v353, %v352
    %v365 = vpack.c.b16 %v355, %v354
    %v366 = vpack.c.b16 %v357, %v356
    %v367 = vpack.c.b16 %v359, %v358
    %376 = vmatprep.subr.bf16.mxu0 0
    %377 = vmatpush1.bf16.msra.mxu0 %v360
    %378 = vmatprep.subr.bf16.mxu0 0
    %379 = vmatpush1.bf16.msra.mxu0 %v361
    %380 = vmatprep.subr.bf16.mxu0 0
    %381 = vmatpush1.bf16.msra.mxu0 %v362
    %382 = vmatprep.subr.bf16.mxu0 0
    %383 = vmatpush1.bf16.msra.mxu0 %v363
    %384 = vmatprep.subr.bf16.mxu0 0
    %385 = vmatpush1.bf16.msra.mxu0 %v364
    %386 = vmatprep.subr.bf16.mxu0 0
    %387 = vmatpush1.bf16.msra.mxu0 %v365
    %388 = vmatprep.subr.bf16.mxu0 0
    %389 = vmatpush1.bf16.msra.mxu0 %v366
    %390 = vmatprep.subr.bf16.mxu0 0
    %391 = vmatpush1.bf16.msra.mxu0 %v367
    %392 = vmatprep.subr.bf16.mxu0 0
    %393 = vmatpush1.bf16.msra.mxu0 0
    %394 = vmatprep.subr.bf16.mxu0 0
    %395 = vmatpush1.bf16.msra.mxu0 0
    %396 = vmatprep.subr.bf16.mxu0 0
    %397 = vmatpush1.bf16.msra.mxu0 0
    %398 = vmatprep.subr.bf16.mxu0 0
    %399 = vmatpush1.bf16.msra.mxu0 0
    %400 = vmatprep.subr.bf16.mxu0 0
    %401 = vmatpush1.bf16.msra.mxu0 0
    %402 = vmatprep.subr.bf16.mxu0 0
    %403 = vmatpush1.bf16.msra.mxu0 0
    %404 = vmatprep.subr.bf16.mxu0 0
    %405 = vmatpush1.bf16.msra.mxu0 0
    %406 = vmatprep.subr.bf16.mxu0 0
    %407 = vmatpush1.bf16.msra.mxu0 0
    %408 = vmatprep.mubr.bf16.mxu0 0
    %409 = vmatmul.mubr.bf16.gmra.mrb[0].mxu0 %v308
    %v410 = vpop.f32.mrb[0].mxu0
    %v411 = vadd.f32 0.0, %v410
    %v412 = vpop.f32.mrb[0].mxu0
    %v413 = vpop.f32.mrb[0].mxu0
    %v414 = vadd.f32 0.0, %v413
    %v415 = vpop.f32.mrb[0].mxu0
    %416 = vmatprep.mubr.bf16.mxu0 0
    %417 = vmatmul.mubr.bf16.gmra.mrb[0].mxu0 %v325
    %v418 = vpop.f32.mrb[0].mxu0
    %v419 = vadd.f32 0.0, %v418
    %v420 = vpop.f32.mrb[0].mxu0
    %v421 = vpop.f32.mrb[0].mxu0
    %v422 = vadd.f32 0.0, %v421
    %v423 = vpop.f32.mrb[0].mxu0
    %424 = vdwg.mxu0
    %v433 = vcombine.low %v52, %v53
    %v434 = vcombine.low %v54, %v55
    %v436 = vunpack.c.l.s4 1983009808
    %v437 = vunpack.c.0.s8 %v436
    %v438 = vlaneseq
    %v439 = vshrl.u32 %v438, 7
    %v440 = vsub.s32 %v437, %v439
    %v441 = vrot.slane %v433, %v440
    %v443 = vunpack.c.l.s4 1983009808
    %v444 = vunpack.c.0.s8 %v443
    %v445 = vlaneseq
    %v446 = vshrl.u32 %v445, 7
    %v447 = vsub.s32 %v444, %v446
    %v448 = vrot.slane %v434, %v447
    %v449 = vcombine.low %v441, %v448
    %v450 = vcombine.low %v56, %v57
    %v451 = vcombine.low %v58, %v59
    %v453 = vunpack.c.l.s4 1983009808
    %v454 = vunpack.c.0.s8 %v453
    %v455 = vlaneseq
    %v456 = vshrl.u32 %v455, 7
    %v457 = vsub.s32 %v454, %v456
    %v458 = vrot.slane %v450, %v457
    %v460 = vunpack.c.l.s4 1983009808
    %v461 = vunpack.c.0.s8 %v460
    %v462 = vlaneseq
    %v463 = vshrl.u32 %v462, 7
    %v464 = vsub.s32 %v461, %v463
    %v465 = vrot.slane %v451, %v464
    %v466 = vcombine.low %v458, %v465
    %v485 = vunpack.c.l.b16 %v60
    %v486 = vunpack.c.l.b16 %v61
    %v487 = vunpack.c.l.b16 %v62
    %v488 = vunpack.c.l.b16 %v63
    %v489 = vunpack.c.l.b16 %v64
    %v490 = vunpack.c.l.b16 %v65
    %v491 = vunpack.c.l.b16 %v66
    %v492 = vunpack.c.l.b16 %v67
    %v493 = vunpack.c.l.b16 %v68
    %v494 = vunpack.c.l.b16 %v69
    %v495 = vunpack.c.l.b16 %v70
    %v496 = vunpack.c.l.b16 %v71
    %v497 = vunpack.c.l.b16 %v72
    %v498 = vunpack.c.l.b16 %v73
    %v499 = vunpack.c.l.b16 %v74
    %v500 = vunpack.c.l.b16 %v75
    %v501 = vpack.c.b16 %v486, %v485
    %v502 = vpack.c.b16 %v488, %v487
    %v503 = vpack.c.b16 %v490, %v489
    %v504 = vpack.c.b16 %v492, %v491
    %v505 = vpack.c.b16 %v494, %v493
    %v506 = vpack.c.b16 %v496, %v495
    %v507 = vpack.c.b16 %v498, %v497
    %v508 = vpack.c.b16 %v500, %v499
    %517 = vmatprep.subr.bf16.mxu0 0
    %518 = vmatpush1.bf16.msra.mxu0 %v501
    %519 = vmatprep.subr.bf16.mxu0 0
    %520 = vmatpush1.bf16.msra.mxu0 %v502
    %521 = vmatprep.subr.bf16.mxu0 0
    %522 = vmatpush1.bf16.msra.mxu0 %v503
    %523 = vmatprep.subr.bf16.mxu0 0
    %524 = vmatpush1.bf16.msra.mxu0 %v504
    %525 = vmatprep.subr.bf16.mxu0 0
    %526 = vmatpush1.bf16.msra.mxu0 %v505
    %527 = vmatprep.subr.bf16.mxu0 0
    %528 = vmatpush1.bf16.msra.mxu0 %v506
    %529 = vmatprep.subr.bf16.mxu0 0
    %530 = vmatpush1.bf16.msra.mxu0 %v507
    %531 = vmatprep.subr.bf16.mxu0 0
    %532 = vmatpush1.bf16.msra.mxu0 %v508
    %533 = vmatprep.subr.bf16.mxu0 0
    %534 = vmatpush1.bf16.msra.mxu0 0
    %535 = vmatprep.subr.bf16.mxu0 0
    %536 = vmatpush1.bf16.msra.mxu0 0
    %537 = vmatprep.subr.bf16.mxu0 0
    %538 = vmatpush1.bf16.msra.mxu0 0
    %539 = vmatprep.subr.bf16.mxu0 0
    %540 = vmatpush1.bf16.msra.mxu0 0
    %541 = vmatprep.subr.bf16.mxu0 0
    %542 = vmatpush1.bf16.msra.mxu0 0
    %543 = vmatprep.subr.bf16.mxu0 0
    %544 = vmatpush1.bf16.msra.mxu0 0
    %545 = vmatprep.subr.bf16.mxu0 0
    %546 = vmatpush1.bf16.msra.mxu0 0
    %547 = vmatprep.subr.bf16.mxu0 0
    %548 = vmatpush1.bf16.msra.mxu0 0
    %549 = vmatprep.mubr.bf16.mxu0 0
    %550 = vmatmul.mubr.bf16.gmra.mrb[0].mxu0 %v449
    %v551 = vpop.f32.mrb[0].mxu0
    %v552 = vadd.f32 %v411, %v551
    %v553 = vpop.f32.mrb[0].mxu0
    %v554 = vpop.f32.mrb[0].mxu0
    %v555 = vadd.f32 %v414, %v554
    %v556 = vpop.f32.mrb[0].mxu0
    %557 = vmatprep.mubr.bf16.mxu0 0
    %558 = vmatmul.mubr.bf16.gmra.mrb[0].mxu0 %v466
    %v559 = vpop.f32.mrb[0].mxu0
    %v560 = vadd.f32 %v419, %v559
    %v561 = vpop.f32.mrb[0].mxu0
    %v562 = vpop.f32.mrb[0].mxu0
    %v563 = vadd.f32 %v422, %v562
    %v564 = vpop.f32.mrb[0].mxu0
    %565 = vdwg.mxu0
    %s566 = scalar_lea.vmem [#allocation2], 4
    %v567 = vld [vmem:[%s566] sm:$0x3]
    %v568 = vld [vmem:[%s566 + $0x4] sm:$0x3]
    %v569 = vld [vmem:[%s566 + $0x8] sm:$0x3]
    %v570 = vld [vmem:[%s566 + $0xc] sm:$0x3]
    %v571 = vld [vmem:[%s566 + $0x14] sm:$0x3]
    %v572 = vld [vmem:[%s566 + $0x18] sm:$0x3]
    %v573 = vld [vmem:[%s566 + $0x1c] sm:$0x3]
    %v574 = vld [vmem:[%s566 + $0x20] sm:$0x3]
    %s575 = scalar_lea.vmem [#allocation5], 128
    %v576 = vld [vmem:[%s575] sm:$0xf]
    %v577 = vld [vmem:[%s575 + $0x4] sm:$0xf]
    %v578 = vld [vmem:[%s575 + $0x8] sm:$0xf]
    %v579 = vld [vmem:[%s575 + $0xc] sm:$0xf]
    %v580 = vld [vmem:[%s575 + $0x10] sm:$0xf]
    %v581 = vld [vmem:[%s575 + $0x14] sm:$0xf]
    %v582 = vld [vmem:[%s575 + $0x18] sm:$0xf]
    %v583 = vld [vmem:[%s575 + $0x1c] sm:$0xf]
    %v584 = vld [vmem:[%s575 + $0x20] sm:$0xf]
    %v585 = vld [vmem:[%s575 + $0x24] sm:$0xf]
    %v586 = vld [vmem:[%s575 + $0x28] sm:$0xf]
    %v587 = vld [vmem:[%s575 + $0x2c] sm:$0xf]
    %v588 = vld [vmem:[%s575 + $0x30] sm:$0xf]
    %v589 = vld [vmem:[%s575 + $0x34] sm:$0xf]
    %v590 = vld [vmem:[%s575 + $0x38] sm:$0xf]
    %v591 = vld [vmem:[%s575 + $0x3c] sm:$0xf]
    %v600 = vcombine.low %v567, %v568
    %v601 = vcombine.low %v569, %v570
    %v603 = vunpack.c.l.s4 1983009808
    %v604 = vunpack.c.0.s8 %v603
    %v605 = vlaneseq
    %v606 = vshrl.u32 %v605, 7
    %v607 = vsub.s32 %v604, %v606
    %v608 = vrot.slane %v600, %v607
    %v610 = vunpack.c.l.s4 1983009808
    %v611 = vunpack.c.0.s8 %v610
    %v612 = vlaneseq
    %v613 = vshrl.u32 %v612, 7
    %v614 = vsub.s32 %v611, %v613
    %v615 = vrot.slane %v601, %v614
    %v616 = vcombine.low %v608, %v615
    %v617 = vcombine.low %v571, %v572
    %v618 = vcombine.low %v573, %v574
    %v620 = vunpack.c.l.s4 1983009808
    %v621 = vunpack.c.0.s8 %v620
    %v622 = vlaneseq
    %v623 = vshrl.u32 %v622, 7
    %v624 = vsub.s32 %v621, %v623
    %v625 = vrot.slane %v617, %v624
    %v627 = vunpack.c.l.s4 1983009808
    %v628 = vunpack.c.0.s8 %v627
    %v629 = vlaneseq
    %v630 = vshrl.u32 %v629, 7
    %v631 = vsub.s32 %v628, %v630
    %v632 = vrot.slane %v618, %v631
    %v633 = vcombine.low %v625, %v632
    %v652 = vunpack.c.l.b16 %v576
    %v653 = vunpack.c.l.b16 %v577
    %v654 = vunpack.c.l.b16 %v578
    %v655 = vunpack.c.l.b16 %v579
    %v656 = vunpack.c.l.b16 %v580
    %v657 = vunpack.c.l.b16 %v581
    %v658 = vunpack.c.l.b16 %v582
    %v659 = vunpack.c.l.b16 %v583
    %v660 = vunpack.c.l.b16 %v584
    %v661 = vunpack.c.l.b16 %v585
    %v662 = vunpack.c.l.b16 %v586
    %v663 = vunpack.c.l.b16 %v587
    %v664 = vunpack.c.l.b16 %v588
    %v665 = vunpack.c.l.b16 %v589
    %v666 = vunpack.c.l.b16 %v590
    %v667 = vunpack.c.l.b16 %v591
    %v668 = vpack.c.b16 %v653, %v652
    %v669 = vpack.c.b16 %v655, %v654
    %v670 = vpack.c.b16 %v657, %v656
    %v671 = vpack.c.b16 %v659, %v658
    %v672 = vpack.c.b16 %v661, %v660
    %v673 = vpack.c.b16 %v663, %v662
    %v674 = vpack.c.b16 %v665, %v664
    %v675 = vpack.c.b16 %v667, %v666
    %684 = vmatprep.subr.bf16.mxu0 0
    %685 = vmatpush1.bf16.msra.mxu0 %v668
    %686 = vmatprep.subr.bf16.mxu0 0
    %687 = vmatpush1.bf16.msra.mxu0 %v669
    %688 = vmatprep.subr.bf16.mxu0 0
    %689 = vmatpush1.bf16.msra.mxu0 %v670
    %690 = vmatprep.subr.bf16.mxu0 0
    %691 = vmatpush1.bf16.msra.mxu0 %v671
    %692 = vmatprep.subr.bf16.mxu0 0
    %693 = vmatpush1.bf16.msra.mxu0 %v672
    %694 = vmatprep.subr.bf16.mxu0 0
    %695 = vmatpush1.bf16.msra.mxu0 %v673
    %696 = vmatprep.subr.bf16.mxu0 0
    %697 = vmatpush1.bf16.msra.mxu0 %v674
    %698 = vmatprep.subr.bf16.mxu0 0
    %699 = vmatpush1.bf16.msra.mxu0 %v675
    %700 = vmatprep.subr.bf16.mxu0 0
    %701 = vmatpush1.bf16.msra.mxu0 0
    %702 = vmatprep.subr.bf16.mxu0 0
    %703 = vmatpush1.bf16.msra.mxu0 0
    %704 = vmatprep.subr.bf16.mxu0 0
    %705 = vmatpush1.bf16.msra.mxu0 0
    %706 = vmatprep.subr.bf16.mxu0 0
    %707 = vmatpush1.bf16.msra.mxu0 0
    %708 = vmatprep.subr.bf16.mxu0 0
    %709 = vmatpush1.bf16.msra.mxu0 0
    %710 = vmatprep.subr.bf16.mxu0 0
    %711 = vmatpush1.bf16.msra.mxu0 0
    %712 = vmatprep.subr.bf16.mxu0 0
    %713 = vmatpush1.bf16.msra.mxu0 0
    %714 = vmatprep.subr.bf16.mxu0 0
    %715 = vmatpush1.bf16.msra.mxu0 0
    %716 = vmatprep.mubr.bf16.mxu0 0
    %717 = vmatmul.mubr.bf16.gmra.mrb[0].mxu0 %v616
    %v718 = vpop.f32.mrb[0].mxu0
    %v719 = vadd.f32 0.0, %v718
    %v720 = vpop.f32.mrb[0].mxu0
    %v721 = vpop.f32.mrb[0].mxu0
    %v722 = vadd.f32 0.0, %v721
    %v723 = vpop.f32.mrb[0].mxu0
    %724 = vmatprep.mubr.bf16.mxu0 0
    %725 = vmatmul.mubr.bf16.gmra.mrb[0].mxu0 %v633
    %v726 = vpop.f32.mrb[0].mxu0
    %v727 = vadd.f32 0.0, %v726
    %v728 = vpop.f32.mrb[0].mxu0
    %v729 = vpop.f32.mrb[0].mxu0
    %v730 = vadd.f32 0.0, %v729
    %v731 = vpop.f32.mrb[0].mxu0
    %732 = vdwg.mxu0
    %v733 = vadd.f32 %v552, %v719
    %v734 = vadd.f32 %v555, %v722
    %v735 = vadd.f32 %v560, %v727
    %v736 = vadd.f32 %v563, %v730
    %v737 = vld [vmem:[%s566] sm:$0x7]
    %v738 = vld [vmem:[%s566 + $0x4] sm:$0x7]
    %v739 = vld [vmem:[%s566 + $0x8] sm:$0x7]
    %v740 = vld [vmem:[%s566 + $0xc] sm:$0x7]
    %v741 = vld [vmem:[%s566 + $0x14] sm:$0x7]
    %v742 = vld [vmem:[%s566 + $0x18] sm:$0x7]
    %v743 = vld [vmem:[%s566 + $0x1c] sm:$0x7]
    %v744 = vld [vmem:[%s566 + $0x20] sm:$0x7]
    %v754 = vunpack.c.l.s4 1983009808
    %v755 = vunpack.c.0.s8 %v754
    %v756 = vlaneseq
    %v757 = vshrl.u32 %v756, 7
    %v758 = vsub.s32 %v755, %v757
    %v759 = vrot.slane %v737, %v758
    %v760 = vcombine.high %v759, %v759
    %v762 = vunpack.c.l.s4 1983009808
    %v763 = vunpack.c.0.s8 %v762
    %v764 = vlaneseq
    %v765 = vshrl.u32 %v764, 7
    %v766 = vsub.s32 %v763, %v765
    %v767 = vrot.slane %v738, %v766
    %v768 = vcombine.high %v767, %v767
    %v770 = vunpack.c.l.s4 1983009808
    %v771 = vunpack.c.0.s8 %v770
    %v772 = vlaneseq
    %v773 = vshrl.u32 %v772, 7
    %v774 = vsub.s32 %v771, %v773
    %v775 = vrot.slane %v739, %v774
    %v776 = vcombine.high %v775, %v775
    %v778 = vunpack.c.l.s4 1983009808
    %v779 = vunpack.c.0.s8 %v778
    %v780 = vlaneseq
    %v781 = vshrl.u32 %v780, 7
    %v782 = vsub.s32 %v779, %v781
    %v783 = vrot.slane %v740, %v782
    %v784 = vcombine.high %v783, %v783
    %v786 = vunpack.c.l.s4 1983009808
    %v787 = vunpack.c.0.s8 %v786
    %v788 = vlaneseq
    %v789 = vshrl.u32 %v788, 7
    %v790 = vsub.s32 %v787, %v789
    %v791 = vrot.slane %v741, %v790
    %v792 = vcombine.high %v791, %v791
    %v794 = vunpack.c.l.s4 1983009808
    %v795 = vunpack.c.0.s8 %v794
    %v796 = vlaneseq
    %v797 = vshrl.u32 %v796, 7
    %v798 = vsub.s32 %v795, %v797
    %v799 = vrot.slane %v742, %v798
    %v800 = vcombine.high %v799, %v799
    %v802 = vunpack.c.l.s4 1983009808
    %v803 = vunpack.c.0.s8 %v802
    %v804 = vlaneseq
    %v805 = vshrl.u32 %v804, 7
    %v806 = vsub.s32 %v803, %v805
    %v807 = vrot.slane %v743, %v806
    %v808 = vcombine.high %v807, %v807
    %v810 = vunpack.c.l.s4 1983009808
    %v811 = vunpack.c.0.s8 %v810
    %v812 = vlaneseq
    %v813 = vshrl.u32 %v812, 7
    %v814 = vsub.s32 %v811, %v813
    %v815 = vrot.slane %v744, %v814
    %v816 = vcombine.high %v815, %v815
    %v818 = vshrl.u32 %v759, 16
    %v820 = vrot.slane %v818, 6
    %v821 = vshll.u32 %v759, 16
    %v823 = vrot.slane %v821, 7
    %v824 = vor.u32 %v820, %v823
    %v825 = vrot.slane %v824, 2
    %v827 = vshll.u32 %v760, 16
    %v829 = vrot.slane %v827, 7
    %v830 = vsel %vm162, %v825, %v829
    %v832 = vshrl.u32 %v767, 16
    %v834 = vrot.slane %v832, 6
    %v835 = vshll.u32 %v767, 16
    %v837 = vrot.slane %v835, 7
    %v838 = vor.u32 %v834, %v837
    %v839 = vrot.slane %v838, 2
    %v841 = vshll.u32 %v768, 16
    %v843 = vrot.slane %v841, 7
    %v844 = vsel %vm162, %v839, %v843
    %v846 = vshrl.u32 %v775, 16
    %v848 = vrot.slane %v846, 6
    %v849 = vshll.u32 %v775, 16
    %v851 = vrot.slane %v849, 7
    %v852 = vor.u32 %v848, %v851
    %v853 = vrot.slane %v852, 2
    %v855 = vshll.u32 %v776, 16
    %v857 = vrot.slane %v855, 7
    %v858 = vsel %vm162, %v853, %v857
    %v860 = vshrl.u32 %v783, 16
    %v862 = vrot.slane %v860, 6
    %v863 = vshll.u32 %v783, 16
    %v865 = vrot.slane %v863, 7
    %v866 = vor.u32 %v862, %v865
    %v867 = vrot.slane %v866, 2
    %v869 = vshll.u32 %v784, 16
    %v871 = vrot.slane %v869, 7
    %v872 = vsel %vm162, %v867, %v871
    %v874 = vshrl.u32 %v791, 16
    %v876 = vrot.slane %v874, 6
    %v877 = vshll.u32 %v791, 16
    %v879 = vrot.slane %v877, 7
    %v880 = vor.u32 %v876, %v879
    %v881 = vrot.slane %v880, 2
    %v883 = vshll.u32 %v792, 16
    %v885 = vrot.slane %v883, 7
    %v886 = vsel %vm162, %v881, %v885
    %v888 = vshrl.u32 %v799, 16
    %v890 = vrot.slane %v888, 6
    %v891 = vshll.u32 %v799, 16
    %v893 = vrot.slane %v891, 7
    %v894 = vor.u32 %v890, %v893
    %v895 = vrot.slane %v894, 2
    %v897 = vshll.u32 %v800, 16
    %v899 = vrot.slane %v897, 7
    %v900 = vsel %vm162, %v895, %v899
    %v902 = vshrl.u32 %v807, 16
    %v904 = vrot.slane %v902, 6
    %v905 = vshll.u32 %v807, 16
    %v907 = vrot.slane %v905, 7
    %v908 = vor.u32 %v904, %v907
    %v909 = vrot.slane %v908, 2
    %v911 = vshll.u32 %v808, 16
    %v913 = vrot.slane %v911, 7
    %v914 = vsel %vm162, %v909, %v913
    %v916 = vshrl.u32 %v815, 16
    %v918 = vrot.slane %v916, 6
    %v919 = vshll.u32 %v815, 16
    %v921 = vrot.slane %v919, 7
    %v922 = vor.u32 %v918, %v921
    %v923 = vrot.slane %v922, 2
    %v925 = vshll.u32 %v816, 16
    %v927 = vrot.slane %v925, 7
    %v928 = vsel %vm162, %v923, %v927
    %s929 = scalar_lea.vmem [#allocation5], 192
    %v930 = vld [vmem:[%s929] sm:$0xf]
    %v931 = vld [vmem:[%s929 + $0x4] sm:$0xf]
    %v932 = vld [vmem:[%s929 + $0x8] sm:$0xf]
    %v933 = vld [vmem:[%s929 + $0xc] sm:$0xf]
    %v934 = vld [vmem:[%s929 + $0x10] sm:$0xf]
    %v935 = vld [vmem:[%s929 + $0x14] sm:$0xf]
    %v936 = vld [vmem:[%s929 + $0x18] sm:$0xf]
    %v937 = vld [vmem:[%s929 + $0x1c] sm:$0xf]
    %v938 = vld [vmem:[%s929 + $0x20] sm:$0xf]
    %v939 = vld [vmem:[%s929 + $0x24] sm:$0xf]
    %v940 = vld [vmem:[%s929 + $0x28] sm:$0xf]
    %v941 = vld [vmem:[%s929 + $0x2c] sm:$0xf]
    %v942 = vld [vmem:[%s929 + $0x30] sm:$0xf]
    %v943 = vld [vmem:[%s929 + $0x34] sm:$0xf]
    %v944 = vld [vmem:[%s929 + $0x38] sm:$0xf]
    %v945 = vld [vmem:[%s929 + $0x3c] sm:$0xf]
    %v946 = vcombine.low %v830, %v844
    %v947 = vcombine.low %v858, %v872
    %v949 = vunpack.c.l.s4 1983009808
    %v950 = vunpack.c.0.s8 %v949
    %v951 = vlaneseq
    %v952 = vshrl.u32 %v951, 7
    %v953 = vsub.s32 %v950, %v952
    %v954 = vrot.slane %v946, %v953
    %v956 = vunpack.c.l.s4 1983009808
    %v957 = vunpack.c.0.s8 %v956
    %v958 = vlaneseq
    %v959 = vshrl.u32 %v958, 7
    %v960 = vsub.s32 %v957, %v959
    %v961 = vrot.slane %v947, %v960
    %v962 = vcombine.low %v954, %v961
    %v963 = vcombine.low %v886, %v900
    %v964 = vcombine.low %v914, %v928
    %v966 = vunpack.c.l.s4 1983009808
    %v967 = vunpack.c.0.s8 %v966
    %v968 = vlaneseq
    %v969 = vshrl.u32 %v968, 7
    %v970 = vsub.s32 %v967, %v969
    %v971 = vrot.slane %v963, %v970
    %v973 = vunpack.c.l.s4 1983009808
    %v974 = vunpack.c.0.s8 %v973
    %v975 = vlaneseq
    %v976 = vshrl.u32 %v975, 7
    %v977 = vsub.s32 %v974, %v976
    %v978 = vrot.slane %v964, %v977
    %v979 = vcombine.low %v971, %v978
    %v998 = vunpack.c.l.b16 %v930
    %v999 = vunpack.c.l.b16 %v931
    %v1000 = vunpack.c.l.b16 %v932
    %v1001 = vunpack.c.l.b16 %v933
    %v1002 = vunpack.c.l.b16 %v934
    %v1003 = vunpack.c.l.b16 %v935
    %v1004 = vunpack.c.l.b16 %v936
    %v1005 = vunpack.c.l.b16 %v937
    %v1006 = vunpack.c.l.b16 %v938
    %v1007 = vunpack.c.l.b16 %v939
    %v1008 = vunpack.c.l.b16 %v940
    %v1009 = vunpack.c.l.b16 %v941
    %v1010 = vunpack.c.l.b16 %v942
    %v1011 = vunpack.c.l.b16 %v943
    %v1012 = vunpack.c.l.b16 %v944
    %v1013 = vunpack.c.l.b16 %v945
    %v1014 = vpack.c.b16 %v999, %v998
    %v1015 = vpack.c.b16 %v1001, %v1000
    %v1016 = vpack.c.b16 %v1003, %v1002
    %v1017 = vpack.c.b16 %v1005, %v1004
    %v1018 = vpack.c.b16 %v1007, %v1006
    %v1019 = vpack.c.b16 %v1009, %v1008
    %v1020 = vpack.c.b16 %v1011, %v1010
    %v1021 = vpack.c.b16 %v1013, %v1012
    %1030 = vmatprep.subr.bf16.mxu0 0
    %1031 = vmatpush1.bf16.msra.mxu0 %v1014
    %1032 = vmatprep.subr.bf16.mxu0 0
    %1033 = vmatpush1.bf16.msra.mxu0 %v1015
    %1034 = vmatprep.subr.bf16.mxu0 0
    %1035 = vmatpush1.bf16.msra.mxu0 %v1016
    %1036 = vmatprep.subr.bf16.mxu0 0
    %1037 = vmatpush1.bf16.msra.mxu0 %v1017
    %1038 = vmatprep.subr.bf16.mxu0 0
    %1039 = vmatpush1.bf16.msra.mxu0 %v1018
    %1040 = vmatprep.subr.bf16.mxu0 0
    %1041 = vmatpush1.bf16.msra.mxu0 %v1019
    %1042 = vmatprep.subr.bf16.mxu0 0
    %1043 = vmatpush1.bf16.msra.mxu0 %v1020
    %1044 = vmatprep.subr.bf16.mxu0 0
    %1045 = vmatpush1.bf16.msra.mxu0 %v1021
    %1046 = vmatprep.subr.bf16.mxu0 0
    %1047 = vmatpush1.bf16.msra.mxu0 0
    %1048 = vmatprep.subr.bf16.mxu0 0
    %1049 = vmatpush1.bf16.msra.mxu0 0
    %1050 = vmatprep.subr.bf16.mxu0 0
    %1051 = vmatpush1.bf16.msra.mxu0 0
    %1052 = vmatprep.subr.bf16.mxu0 0
    %1053 = vmatpush1.bf16.msra.mxu0 0
    %1054 = vmatprep.subr.bf16.mxu0 0
    %1055 = vmatpush1.bf16.msra.mxu0 0
    %1056 = vmatprep.subr.bf16.mxu0 0
    %1057 = vmatpush1.bf16.msra.mxu0 0
    %1058 = vmatprep.subr.bf16.mxu0 0
    %1059 = vmatpush1.bf16.msra.mxu0 0
    %1060 = vmatprep.subr.bf16.mxu0 0
    %1061 = vmatpush1.bf16.msra.mxu0 0
    %1062 = vmatprep.mubr.bf16.mxu0 0
    %1063 = vmatmul.mubr.bf16.gmra.mrb[0].mxu0 %v962
    %v1064 = vpop.f32.mrb[0].mxu0
    %v1065 = vadd.f32 0.0, %v1064
    %v1066 = vpop.f32.mrb[0].mxu0
    %v1067 = vpop.f32.mrb[0].mxu0
    %v1068 = vadd.f32 0.0, %v1067
    %v1069 = vpop.f32.mrb[0].mxu0
    %1070 = vmatprep.mubr.bf16.mxu0 0
    %1071 = vmatmul.mubr.bf16.gmra.mrb[0].mxu0 %v979
    %v1072 = vpop.f32.mrb[0].mxu0
    %v1073 = vadd.f32 0.0, %v1072
    %v1074 = vpop.f32.mrb[0].mxu0
    %v1075 = vpop.f32.mrb[0].mxu0
    %v1076 = vadd.f32 0.0, %v1075
    %v1077 = vpop.f32.mrb[0].mxu0
    %1078 = vdwg.mxu0
    %v1079 = vadd.f32 %v733, %v1065
    %v1080 = vadd.f32 %v734, %v1068
    %v1081 = vadd.f32 %v735, %v1073
    %v1082 = vadd.f32 %v736, %v1076
    %v1083 = vld [vmem:[#allocation8] sm:$0x1]
    %vm1084 = vcmask 523264
    %v1085 = vsel %vm1084, %v1079, 0.0
    %v1086 = vsel %vm1084, %v1080, 0.0
    %v1087 = vadd.f32 %v1085, %v1086
    %v1088 = vsel %vm1084, %v1081, 0.0
    %v1089 = vadd.f32 %v1087, %v1088
    %v1090 = vsel %vm1084, %v1082, 0.0
    %v1091 = vadd.f32 %v1089, %v1090
    %v1092 = vrot.slane %v1091, 4
    %v1093 = vadd.f32 %v1091, %v1092
    %v1094 = vrot.slane %v1093, 2
    %v1095 = vadd.f32 %v1093, %v1094
    %v1096 = vrot.slane %v1095, 1
    %v1097 = vadd.f32 %v1095, %v1096
    %v1098 = vadd.f32 %v1083, %v1097
    %vm1099 = vcmask 516096
    %1100 = vst.msk [vmem:[#allocation8] sm:$0x1] %vm1099, %v1098
    %v1101 = vld [vmem:[#allocation10] sm:$0x1]
    %v1102 = vmul.f32 %v1079, %v1079
    %v1103 = vmul.f32 %v1080, %v1080
    %v1104 = vmul.f32 %v1081, %v1081
    %v1105 = vmul.f32 %v1082, %v1082
    %v1106 = vsel %vm1084, %v1102, 0.0
    %v1107 = vsel %vm1084, %v1103, 0.0
    %v1108 = vadd.f32 %v1106, %v1107
    %v1109 = vsel %vm1084, %v1104, 0.0
    %v1110 = vadd.f32 %v1108, %v1109
    %v1111 = vsel %vm1084, %v1105, 0.0
    %v1112 = vadd.f32 %v1110, %v1111
    %v1113 = vrot.slane %v1112, 4
    %v1114 = vadd.f32 %v1112, %v1113
    %v1115 = vrot.slane %v1114, 2
    %v1116 = vadd.f32 %v1114, %v1115
    %v1117 = vrot.slane %v1116, 1
    %v1118 = vadd.f32 %v1116, %v1117
    %v1119 = vadd.f32 %v1101, %v1118
    %1120 = vst.msk [vmem:[#allocation10] sm:$0x1] %vm1099, %v1119
    %v1121 = vpack.c.bf16 %v1080, %v1079
    %v1122 = vpack.c.bf16 %v1082, %v1081
    %v1125 = vunpack.c.l.b16 %v1121
    %v1126 = vunpack.c.h.b16 %v1121
    %v1127 = vunpack.c.l.b16 %v1122
    %v1128 = vunpack.c.h.b16 %v1122
    %v1129 = vpack.c.b16 %v1125, %v1125
    %v1130 = vpack.c.b16 %v1126, %v1126
    %v1131 = vpack.c.b16 %v1127, %v1127
    %v1132 = vpack.c.b16 %v1128, %v1128
    %vm1137 = vcmask 519168
    %1138 = vst.msk [vmem:[#allocation7] sm:$0xf] %vm1137, %v1129
    %1139 = vst.msk [vmem:[#allocation7 + $0x4] sm:$0xf] %vm1137, %v1130
    %1140 = vst.msk [vmem:[#allocation7 + $0x8] sm:$0xf] %vm1137, %v1131
    %1141 = vst.msk [vmem:[#allocation7 + $0xc] sm:$0xf] %vm1137, %v1132
    // Predicated region
    $region22: #{dcgan_discriminator_forward.5} parent=1 // pred_check
      _
    $region23: #{dcgan_discriminator_forward.5} parent=1 // pred_check_branch
      %1143 = sbr.rel (0) target = $region25
    $region24: #{dcgan_discriminator_forward.5} parent=1 // pred_region
      %s1145 = ssub.s32 256, 256
      %1146 = vsyncadd [#allocation4], %s1145
      %s1147 = sshll.u32 [#allocation7], 4
      %s1148 = int_to_ptr.vmem [resolvable:$true] %s1147
      %1153 = dma.vmem_to_hbm [thread:$0]  %s1148, 256, %s2, [#allocation4], 64, 64, 4
    $region25: #{dcgan_discriminator_forward.5} parent=1 // pred_fallthru
      _
    // Predicated region
    $region26: #{dcgan_discriminator_forward.5} parent=1 // pred_check
      _
    $region27: #{dcgan_discriminator_forward.5} parent=1 // pred_check_branch
      %1155 = sbr.rel (0) target = $region29
    $region28: #{dcgan_discriminator_forward.5} parent=1 // pred_region
      %s1157 = ssub.s32 16, 16
      %1158 = vsyncadd [#allocation9], %s1157
      %s1160 = sshll.u32 [#allocation8], 4
      %s1161 = int_to_ptr.vmem [resolvable:$true] %s1160
      %1163 = dma.vmem_to_hbm [thread:$0]  %s1161, 16, %s3, [#allocation9]
    $region29: #{dcgan_discriminator_forward.5} parent=1 // pred_fallthru
      _
    // Predicated region
    $region30: #{dcgan_discriminator_forward.5} parent=1 // pred_check
      _
    $region31: #{dcgan_discriminator_forward.5} parent=1 // pred_check_branch
      %1165 = sbr.rel (0) target = $region33
    $region32: #{dcgan_discriminator_forward.5} parent=1 // pred_region
      %s1167 = ssub.s32 16, 16
      %1168 = vsyncadd [#allocation9], %s1167
      %s1170 = sshll.u32 [#allocation10], 4
      %s1171 = int_to_ptr.vmem [resolvable:$true] %s1170
      %1173 = dma.vmem_to_hbm [thread:$0]  %s1171, 16, %s4, [#allocation9]
    $region33: #{dcgan_discriminator_forward.5} parent=1 // pred_fallthru
      _
    // Predicated region
    $region34: #{dcgan_discriminator_forward.5} parent=1 // pred_check
      _
    $region35: #{dcgan_discriminator_forward.5} parent=1 // pred_check_branch
      %1175 = sbr.rel (0) target = $region37
    $region36: #{dcgan_discriminator_forward.5} parent=1 // pred_region
      %1176 = dma.done [#allocation4], 256
    $region37: #{dcgan_discriminator_forward.5} parent=1 // pred_fallthru
      _
    // Predicated region
    $region38: #{dcgan_discriminator_forward.5} parent=1 // pred_check
      _
    $region39: #{dcgan_discriminator_forward.5} parent=1 // pred_check_branch
      %1178 = sbr.rel (0) target = $region41
    $region40: #{dcgan_discriminator_forward.5} parent=1 // pred_region
      %1179 = dma.done [#allocation9], 16
    $region41: #{dcgan_discriminator_forward.5} parent=1 // pred_fallthru
      _
    // Predicated region
    $region42: #{dcgan_discriminator_forward.5} parent=1 // pred_check
      _
    $region43: #{dcgan_discriminator_forward.5} parent=1 // pred_check_branch
      %1181 = sbr.rel (0) target = $region45
    $region44: #{dcgan_discriminator_forward.5} parent=1 // pred_region
      %1182 = dma.done [#allocation9], 16
    $region45: #{dcgan_discriminator_forward.5} parent=1 // pred_fallthru
      _
    %1183 = vsyncpa [#allocation3], 1
    %1184 = vsyncpa [#allocation6], 1
    %1185 = vsyncpa [#allocation4], 1
    %1186 = vsyncpa [#allocation9], 1

</llo_original>
